<compile_context>
chip_gen: v6e
topology: v6e:2x2x1
jax: 0.10.0
libtpu: 0.0.40
codegen_flags: <defaults>
</compile_context>

<pallas_src>
import functools

import jax
import jax.numpy as jnp
from jax.experimental import pallas as pl
from jax.experimental.pallas import tpu as pltpu


# ---------------------------------------------------------------------------
# Kernel body (shared by the expert-bank path and the single-expert path).
# Grid axes 0..2 are independent tiles; axis 3 is the d_ff reduction (innermost).
# ---------------------------------------------------------------------------
def _ffn_tile_body(x_ref, w1_ref, b1_ref, w2_ref, b2_ref, o_ref, acc_ref, *,
                   approximate_gelu, precision):
    f = pl.program_id(3)
    nf = pl.num_programs(3)

    @pl.when(f == 0)
    def _init():
        acc_ref[...] = jnp.zeros_like(acc_ref)

    x = x_ref[...]                       # (TC, D)
    w1 = w1_ref[...]                     # (D, TF)
    w2 = w2_ref[...]                     # (TF, D)

    # First matmul on the MXU, f32 accumulation.
    h = jnp.dot(x, w1, preferred_element_type=jnp.float32, precision=precision)
    h = h + b1_ref[...].astype(jnp.float32)            # (1, TF) broadcast
    # approximate=True (tanh) routes the transcendental to the EUP slot; use
    # approximate_gelu=False only if bit parity with torch's erf GELU is needed.
    h = jax.nn.gelu(h, approximate=approximate_gelu)
    # Second matmul: feed the MXU in the weight dtype, accumulate in f32 scratch.
    acc_ref[...] += jnp.dot(h.astype(w2.dtype), w2,
                            preferred_element_type=jnp.float32,
                            precision=precision)

    @pl.when(f == nf - 1)
    def _finalize():
        out = acc_ref[...] + b2_ref[...].astype(jnp.float32)
        o_ref[...] = out.astype(o_ref.dtype)


def _bank_kernel(x_ref, w1_ref, b1_ref, w2_ref, b2_ref, o_ref, acc_ref, *,
                 approximate_gelu, precision):
    _ffn_tile_body(x_ref, w1_ref, b1_ref, w2_ref, b2_ref, o_ref, acc_ref,
                   approximate_gelu=approximate_gelu, precision=precision)


def _single_kernel(idx_ref, x_ref, w1_ref, b1_ref, w2_ref, b2_ref, o_ref,
                   acc_ref, *, approximate_gelu, precision):
    del idx_ref  # consumed only by the index_maps (scalar prefetch)
    _ffn_tile_body(x_ref, w1_ref, b1_ref, w2_ref, b2_ref, o_ref, acc_ref,
                   approximate_gelu=approximate_gelu, precision=precision)


# ---------------------------------------------------------------------------
# VMEM-budget-aware tile selection
# ---------------------------------------------------------------------------
def _sublane_multiple(dtype):
    # f32 -> 8 rows, bf16 -> 16, int8/fp8 -> 32 (sub-32-bit packs along sublanes).
    return max(8, 32 // jnp.dtype(dtype).itemsize)


def _vmem_budget_bytes():
    """Generation-aware scoped-VMEM budget (3/4 of physical per-core VMEM)."""
    phys = 64 * 1024 * 1024            # conservative default: v7x per-TC VMEM
    try:
        info = pltpu.get_tpu_info()
        phys = int(getattr(info, "vmem_capacity_bytes", phys)) or phys
    except Exception:
        pass
    return (phys * 3) // 4             # ~48 MiB on v7x, ~96 MiB on v5e/v6e


def _working_set_bytes(tc, tf, D, a_isz, w_isz):
    """Live VMEM for one generation of the pipeline (double-buffered windows)."""
    act_win = tc * D * a_isz                       # x tile
    out_win = tc * D * a_isz                       # output tile
    w_win = (D * tf + tf * D + tf + D) * w_isz     # W1/W2/b1/b2 tiles
    dbuf = 2 * (act_win + out_win + w_win)         # double buffering
    acc = tc * D * 4                               # f32 accumulator scratch
    h = tc * tf * 4                                # f32 hidden tile (temporary)
    return dbuf + acc + h


def _divisor_tile(n, target, mult):
    """Largest t <= target with n % t == 0 and t % mult == 0; n itself if none."""
    if n <= target:
        return n
    t = (min(target, n) // mult) * mult
    while t >= mult:
        if n % t == 0:
            return t
        t -= mult
    return n


def _tc_candidates(C, sublane):
    """Descending token-tile candidates (>= 128-row MXU-friendly, or full C)."""
    cands = []
    for tgt in (1024, 512, 256, 128):
        t = _divisor_tile(C, tgt, max(128, sublane))
        if t not in cands:
            cands.append(t)
    return sorted(set(cands), reverse=True) or [C]


def _select_tiles(C, F, D, a_isz, w_isz, budget, sublane):
    tcs = _tc_candidates(C, sublane)
    # (a) Weight-resident (tf = F): expert weights stay in VMEM across every
    #     token tile -> weight HBM traffic is one pass per expert.
    for tc in tcs:
        if _working_set_bytes(tc, F, D, a_isz, w_isz) <= budget:
            return tc, F
    # (b) Weights don't fit: stream 256-aligned d_ff tiles.  Weight HBM traffic
    #     scales with C // tc, so prefer the LARGEST token tile that still fits.
    step = 256 if F % 256 == 0 else 128
    for tc in tcs:
        tf = (F // step) * step
        while tf >= step:
            if F % tf == 0 and _working_set_bytes(tc, tf, D, a_isz, w_isz) <= budget:
                return tc, tf
            tf -= step
    # (c) Last resort: smallest candidates (compile will report if still too big).
    return tcs[-1], _divisor_tile(F, 512, 128)


def _check_tiles(C, F, tc, tf, sublane):
    assert C % tc == 0, (C, tc)
    assert tc == C or tc % sublane == 0, (tc, sublane)
    assert F % tf == 0, (F, tf)
    assert tf == F or tf % 128 == 0, (F, tf)


def _vmem_limit_bytes(tc, tf, D, a_isz, w_isz, budget):
    live = _working_set_bytes(tc, tf, D, a_isz, w_isz)
    want = live + max(live // 4, 2 * 1024 * 1024)    # headroom for internal scratch
    return int(min(max(want, 16 * 1024 * 1024), budget))


def _cost_estimate(tokens, D, F, a_isz, weight_traffic_bytes):
    return pl.CostEstimate(
        flops=int(4 * tokens * D * F),              # two matmuls, 2 flops/MAC
        transcendentals=int(tokens * F),            # GELU per hidden activation
        bytes_accessed=int(2 * tokens * D * a_isz + weight_traffic_bytes),
    )


# ---------------------------------------------------------------------------
# forward(inputs): chunk(dim=1) -> per-expert FFN -> cat(dim=1)
# ---------------------------------------------------------------------------
def experts_forward(inputs, w1, b1, w2, b2, *, tc=None, tf=None,
                    approximate_gelu=True, precision=None):
    """inputs: (ep, E, C, D); weights (Ew, ...) with Ew == E or Ew == 1 (shared)."""
    ep, E, C, D = inputs.shape
    Ew, _, F = w1.shape
    assert Ew in (1, E)
    assert w1.shape == (Ew, D, F) and b1.shape == (Ew, 1, F)
    assert w2.shape == (Ew, F, D) and b2.shape == (Ew, 1, D)

    a_isz = jnp.dtype(inputs.dtype).itemsize
    w_isz = jnp.dtype(w1.dtype).itemsize
    sublane = _sublane_multiple(inputs.dtype)
    budget = _vmem_budget_bytes()

    if tc is None or tf is None:
        atc, atf = _select_tiles(C, F, D, a_isz, w_isz, budget, sublane)
        tc = atc if tc is None else tc
        tf = atf if tf is None else tf
    _check_tiles(C, F, tc, tf, sublane)

    # Shared (deepcopy) weights: always fetch block 0; no HBM replication.
    eidx = (lambda e: 0) if Ew == 1 else (lambda e: e)
    sq = pl.Squeezed

    x_spec = pl.BlockSpec((sq(), sq(), tc, D), lambda e, p, c, f: (p, e, c, 0))
    o_spec = pl.BlockSpec((sq(), sq(), tc, D), lambda e, p, c, f: (p, e, c, 0))
    w1_spec = pl.BlockSpec((sq(), D, tf), lambda e, p, c, f: (eidx(e), 0, f))
    b1_spec = pl.BlockSpec((sq(), 1, tf), lambda e, p, c, f: (eidx(e), 0, f))
    w2_spec = pl.BlockSpec((sq(), tf, D), lambda e, p, c, f: (eidx(e), f, 0))
    b2_spec = pl.BlockSpec((sq(), 1, D), lambda e, p, c, f: (eidx(e), 0, 0))

    # True weight HBM traffic: one pass per expert copy when resident (tf == F),
    # re-streamed once per token tile otherwise.
    per_expert_wbytes = (D * F + F + F * D + D) * w_isz
    if tf == F:
        weight_traffic = Ew * per_expert_wbytes
    else:
        weight_traffic = E * ep * (C // tc) * per_expert_wbytes

    kernel = functools.partial(_bank_kernel,
                               approximate_gelu=approximate_gelu,
                               precision=precision)

    return pl.pallas_call(
        kernel,
        out_shape=jax.ShapeDtypeStruct((ep, E, C, D), inputs.dtype),
        grid_spec=pltpu.PrefetchScalarGridSpec(
            num_scalar_prefetch=0,
            grid=(E, ep, C // tc, F // tf),
            in_specs=[x_spec, w1_spec, b1_spec, w2_spec, b2_spec],
            out_specs=o_spec,
            scratch_shapes=[pltpu.VMEM((tc, D), jnp.float32)],
        ),
        compiler_params=pltpu.CompilerParams(
            dimension_semantics=("parallel", "parallel", "parallel",
                                 "arbitrary"),
            vmem_limit_bytes=_vmem_limit_bytes(tc, tf, D, a_isz, w_isz, budget),
        ),
        cost_estimate=_cost_estimate(ep * E * C, D, F, a_isz, weight_traffic),
    )(inputs, w1, b1, w2, b2)


# ---------------------------------------------------------------------------
# forward(inputs, expert_calc_idx): run ONE (dynamically chosen) expert on the
# whole input.  Expert selection is done with scalar prefetch inside index_maps.
# ---------------------------------------------------------------------------
def expert_forward_single(inputs, expert_calc_idx, w1, b1, w2, b2, *,
                          tc=None, tf=None, approximate_gelu=True,
                          precision=None):
    ep, E, C, D = inputs.shape
    Ew, _, F = w1.shape
    assert w1.shape == (Ew, D, F) and b1.shape == (Ew, 1, F)
    assert w2.shape == (Ew, F, D) and b2.shape == (Ew, 1, D)

    a_isz = jnp.dtype(inputs.dtype).itemsize
    w_isz = jnp.dtype(w1.dtype).itemsize
    sublane = _sublane_multiple(inputs.dtype)
    budget = _vmem_budget_bytes()

    if tc is None or tf is None:
        atc, atf = _select_tiles(C, F, D, a_isz, w_isz, budget, sublane)
        tc = atc if tc is None else tc
        tf = atf if tf is None else tf
    _check_tiles(C, F, tc, tf, sublane)

    widx = (lambda i: 0) if Ew == 1 else (lambda i: i[0])
    sq = pl.Squeezed

    x_spec = pl.BlockSpec((sq(), sq(), tc, D),
                          lambda p, n, c, f, i: (p, n, c, 0))
    o_spec = pl.BlockSpec((sq(), sq(), tc, D),
                          lambda p, n, c, f, i: (p, n, c, 0))
    w1_spec = pl.BlockSpec((sq(), D, tf), lambda p, n, c, f, i: (widx(i), 0, f))
    b1_spec = pl.BlockSpec((sq(), 1, tf), lambda p, n, c, f, i: (widx(i), 0, f))
    w2_spec = pl.BlockSpec((sq(), tf, D), lambda p, n, c, f, i: (widx(i), f, 0))
    b2_spec = pl.BlockSpec((sq(), 1, D), lambda p, n, c, f, i: (widx(i), 0, 0))

    per_expert_wbytes = (D * F + F + F * D + D) * w_isz     # one expert's weights
    if tf == F:
        weight_traffic = per_expert_wbytes                   # fetched once, resident
    else:
        weight_traffic = ep * E * (C // tc) * per_expert_wbytes

    idx = jnp.asarray(expert_calc_idx, dtype=jnp.int32).reshape((1,))

    kernel = functools.partial(_single_kernel,
                               approximate_gelu=approximate_gelu,
                               precision=precision)

    return pl.pallas_call(
        kernel,
        out_shape=jax.ShapeDtypeStruct((ep, E, C, D), inputs.dtype),
        grid_spec=pltpu.PrefetchScalarGridSpec(
            num_scalar_prefetch=1,
            grid=(ep, E, C // tc, F // tf),
            in_specs=[x_spec, w1_spec, b1_spec, w2_spec, b2_spec],
            out_specs=o_spec,
            scratch_shapes=[pltpu.VMEM((tc, D), jnp.float32)],
        ),
        compiler_params=pltpu.CompilerParams(
            dimension_semantics=("parallel", "parallel", "parallel",
                                 "arbitrary"),
            vmem_limit_bytes=_vmem_limit_bytes(tc, tf, D, a_isz, w_isz, budget),
        ),
        cost_estimate=_cost_estimate(ep * E * C, D, F, a_isz, weight_traffic),
    )(idx, inputs, w1, b1, w2, b2)


if __name__ == "__main__":
    # Small but MXU/lane-aligned shapes:
    #   ep=2 groups, E=2 local experts, capacity C=64, d_model D=128, d_ff F=256
    ep, E, C, D, F = 2, 2, 64, 128, 256

    key = jax.random.PRNGKey(0)
    k_x, k_w1, k_b1, k_w2, k_b2 = jax.random.split(key, 5)

    dtype = jnp.float32               # f32 demo for exact parity; bf16 in prod
    inputs = jax.random.normal(k_x, (ep, E, C, D), dtype=dtype)

    # Per-expert weights (the general, post-training case).
    w1 = (jax.random.normal(k_w1, (E, D, F), jnp.float32) * 0.05).astype(dtype)
    b1 = (jax.random.normal(k_b1, (E, 1, F), jnp.float32) * 0.05).astype(dtype)
    w2 = (jax.random.normal(k_w2, (E, F, D), jnp.float32) * 0.05).astype(dtype)
    b2 = (jax.random.normal(k_b2, (E, 1, D), jnp.float32) * 0.05).astype(dtype)

    hp = jax.lax.Precision.HIGHEST

    def ref_expert(x, e):
        h = jax.nn.gelu(
            jnp.einsum("...cd,df->...cf", x, w1[e], precision=hp) + b1[e],
            approximate=True)
        return jnp.einsum("...cf,fd->...cd", h, w2[e], precision=hp) + b2[e]

    # --- 1) expert-bank forward, auto tiles (weight-resident: tf == F) -------
    out = jax.block_until_ready(
        experts_forward(inputs, w1, b1, w2, b2, precision=hp))
    exp = jnp.concatenate(
        [ref_expert(inputs[:, e:e + 1], e) for e in range(E)], axis=1)
    assert out.shape == inputs.shape
    assert jnp.allclose(out, exp, atol=2e-4, rtol=2e-4), \
        float(jnp.max(jnp.abs(out - exp)))

    # --- 2) forced small tiles: exercises the d_ff accumulation path ---------
    out_t = jax.block_until_ready(
        experts_forward(inputs, w1, b1, w2, b2, tc=32, tf=128, precision=hp))
    assert jnp.allclose(out_t, exp, atol=2e-4, rtol=2e-4), \
        float(jnp.max(jnp.abs(out_t - exp)))

    # --- 3) deepcopy-init semantics: single shared weight copy (no HBM dup) --
    out_s = jax.block_until_ready(
        experts_forward(inputs, w1[:1], b1[:1], w2[:1], b2[:1], precision=hp))
    exp_s = jnp.concatenate(
        [ref_expert(inputs[:, e:e + 1], 0) for e in range(E)], axis=1)
    assert jnp.allclose(out_s, exp_s, atol=2e-4, rtol=2e-4), \
        float(jnp.max(jnp.abs(out_s - exp_s)))

    # --- 4) forward(inputs, expert_calc_idx): one expert on the whole input --
    out_1 = jax.block_until_ready(
        expert_forward_single(inputs, 1, w1, b1, w2, b2, precision=hp))
    exp_1 = ref_expert(inputs, 1)
    assert out_1.shape == inputs.shape
    assert jnp.allclose(out_1, exp_1, atol=2e-4, rtol=2e-4), \
        float(jnp.max(jnp.abs(out_1 - exp_1)))

    print("KERNEL_OK")
</pallas_src>

<mosaic_0001>
module attributes {stable_mosaic.version = 11 : i64} {
  func.func @_bank_kernel(%arg0: i32, %arg1: i32, %arg2: i32, %arg3: i32, %arg4: memref<1x1x64x128xf32, #tpu.memory_space<vmem>>, %arg5: memref<1x128x256xf32, #tpu.memory_space<vmem>>, %arg6: memref<1x1x256xf32, #tpu.memory_space<vmem>>, %arg7: memref<1x256x128xf32, #tpu.memory_space<vmem>>, %arg8: memref<1x1x128xf32, #tpu.memory_space<vmem>>, %arg9: memref<1x1x64x128xf32, #tpu.memory_space<vmem>>, %arg10: memref<64x128xf32, #tpu.memory_space<vmem>>) attributes {dimension_semantics = [#tpu.dimension_semantics<parallel>, #tpu.dimension_semantics<parallel>, #tpu.dimension_semantics<parallel>, #tpu.dimension_semantics<arbitrary>], iteration_bounds = array<i64: 2, 2, 1, 1>, scalar_prefetch = 0 : i64, scratch_operands = 1 : i64, tpu.core_type = #tpu.core_type<tc>, window_params = [{transform_indices = @transform_0, window_bounds = array<i64: 1, 1, 64, 128>}, {transform_indices = @transform_1, window_bounds = array<i64: 1, 128, 256>}, {transform_indices = @transform_2, window_bounds = array<i64: 1, 1, 256>}, {transform_indices = @transform_3, window_bounds = array<i64: 1, 256, 128>}, {transform_indices = @transform_4, window_bounds = array<i64: 1, 1, 128>}, {transform_indices = @transform_5, window_bounds = array<i64: 1, 1, 64, 128>}]} {
    %c0_i32 = arith.constant 0 : i32
    %0 = arith.cmpi eq, %arg3, %c0_i32 : i32
    %1 = arith.extui %0 : i1 to i32
    %c0_i32_0 = arith.constant 0 : i32
    %2 = arith.cmpi ne, %1, %c0_i32_0 : i32
    scf.if %2 {
      %cst_24 = arith.constant 0.000000e+00 : f32
      %34 = vector.broadcast %cst_24 : f32 to vector<64x128xf32>
      %c0_25 = arith.constant 0 : index
      %c0_26 = arith.constant 0 : index
      %35 = vector.load %arg10[%c0_25, %c0_26] : memref<64x128xf32, #tpu.memory_space<vmem>>, vector<64x128xf32>
      tpu.vector_store %arg10[%c0_25, %c0_26], %34 {strides = array<i32>} : memref<64x128xf32, #tpu.memory_space<vmem>>, vector<64x128xf32>,
    } else {
    }
    %c0 = arith.constant 0 : index
    %c0_1 = arith.constant 0 : index
    %c0_2 = arith.constant 0 : index
    %c0_3 = arith.constant 0 : index
    %3 = vector.load %arg4[%c0, %c0_1, %c0_2, %c0_3] : memref<1x1x64x128xf32, #tpu.memory_space<vmem>>, vector<1x1x64x128xf32>
    %4 = vector.shape_cast %3 : vector<1x1x64x128xf32> to vector<64x128xf32>
    %c0_4 = arith.constant 0 : index
    %c0_5 = arith.constant 0 : index
    %c0_6 = arith.constant 0 : index
    %5 = vector.load %arg5[%c0_4, %c0_5, %c0_6] : memref<1x128x256xf32, #tpu.memory_space<vmem>>, vector<1x128x256xf32>
    %6 = vector.shape_cast %5 : vector<1x128x256xf32> to vector<128x256xf32>
    %c0_7 = arith.constant 0 : index
    %c0_8 = arith.constant 0 : index
    %c0_9 = arith.constant 0 : index
    %7 = vector.load %arg7[%c0_7, %c0_8, %c0_9] : memref<1x256x128xf32, #tpu.memory_space<vmem>>, vector<1x256x128xf32>
    %8 = vector.shape_cast %7 : vector<1x256x128xf32> to vector<256x128xf32>
    %cst = arith.constant dense<0.000000e+00> : vector<64x256xf32>
    %9 = tpu.matmul %4, %6, %cst {dimension_numbers = #tpu.dot_dimension_numbers<[1], [0], [0], [1], [0, 0, 1, 1], [], []>, precision = #tpu.contract_precision<fp32>} : vector<64x128xf32>, vector<128x256xf32>, vector<64x256xf32> -> vector<64x256xf32>
    %c0_10 = arith.constant 0 : index
    %c0_11 = arith.constant 0 : index
    %c0_12 = arith.constant 0 : index
    %10 = vector.load %arg6[%c0_10, %c0_11, %c0_12] : memref<1x1x256xf32, #tpu.memory_space<vmem>>, vector<1x1x256xf32>
    %11 = vector.shape_cast %10 : vector<1x1x256xf32> to vector<1x256xf32>
    %12 = vector.broadcast %11 : vector<1x256xf32> to vector<64x256xf32>
    %13 = arith.addf %9, %12 : vector<64x256xf32>
    %14 = arith.mulf %13, %13 : vector<64x256xf32>
    %15 = arith.mulf %13, %14 : vector<64x256xf32>
    %cst_13 = arith.constant 4.471500e-02 : f32
    %16 = vector.broadcast %cst_13 : f32 to vector<64x256xf32>
    %17 = arith.mulf %16, %15 : vector<64x256xf32>
    %18 = arith.addf %13, %17 : vector<64x256xf32>
    %cst_14 = arith.constant 0.797884583 : f32
    %19 = vector.broadcast %cst_14 : f32 to vector<64x256xf32>
    %20 = arith.mulf %19, %18 : vector<64x256xf32>
    %21 = math.tanh %20 : vector<64x256xf32>
    %cst_15 = arith.constant 1.000000e+00 : f32
    %22 = vector.broadcast %cst_15 : f32 to vector<64x256xf32>
    %23 = arith.addf %22, %21 : vector<64x256xf32>
    %cst_16 = arith.constant 5.000000e-01 : f32
    %24 = vector.broadcast %cst_16 : f32 to vector<64x256xf32>
    %25 = arith.mulf %24, %23 : vector<64x256xf32>
    %26 = arith.mulf %13, %25 : vector<64x256xf32>
    %c0_17 = arith.constant 0 : index
    %c0_18 = arith.constant 0 : index
    %27 = vector.load %arg10[%c0_17, %c0_18] : memref<64x128xf32, #tpu.memory_space<vmem>>, vector<64x128xf32>
    %cst_19 = arith.constant dense<0.000000e+00> : vector<64x128xf32>
    %28 = tpu.matmul %26, %8, %cst_19 {dimension_numbers = #tpu.dot_dimension_numbers<[1], [0], [0], [1], [0, 0, 1, 1], [], []>, precision = #tpu.contract_precision<fp32>} : vector<64x256xf32>, vector<256x128xf32>, vector<64x128xf32> -> vector<64x128xf32>
    %29 = arith.addf %27, %28 : vector<64x128xf32>
    %c0_20 = arith.constant 0 : index
    %c0_21 = arith.constant 0 : index
    %30 = vector.load %arg10[%c0_20, %c0_21] : memref<64x128xf32, #tpu.memory_space<vmem>>, vector<64x128xf32>
    tpu.vector_store %arg10[%c0_20, %c0_21], %29 {strides = array<i32>} : memref<64x128xf32, #tpu.memory_space<vmem>>, vector<64x128xf32>,
    %c0_i32_22 = arith.constant 0 : i32
    %31 = arith.cmpi eq, %arg3, %c0_i32_22 : i32
    %32 = arith.extui %31 : i1 to i32
    %c0_i32_23 = arith.constant 0 : i32
    %33 = arith.cmpi ne, %32, %c0_i32_23 : i32
    scf.if %33 {
      %c0_24 = arith.constant 0 : index
      %c0_25 = arith.constant 0 : index
      %34 = vector.load %arg10[%c0_24, %c0_25] : memref<64x128xf32, #tpu.memory_space<vmem>>, vector<64x128xf32>
      %c0_26 = arith.constant 0 : index
      %c0_27 = arith.constant 0 : index
      %c0_28 = arith.constant 0 : index
      %35 = vector.load %arg8[%c0_26, %c0_27, %c0_28] : memref<1x1x128xf32, #tpu.memory_space<vmem>>, vector<1x1x128xf32>
      %36 = vector.shape_cast %35 : vector<1x1x128xf32> to vector<1x128xf32>
      %37 = vector.broadcast %36 : vector<1x128xf32> to vector<64x128xf32>
      %38 = arith.addf %34, %37 : vector<64x128xf32>
      %c0_29 = arith.constant 0 : index
      %c0_30 = arith.constant 0 : index
      %c0_31 = arith.constant 0 : index
      %c0_32 = arith.constant 0 : index
      %39 = vector.load %arg9[%c0_29, %c0_30, %c0_31, %c0_32] : memref<1x1x64x128xf32, #tpu.memory_space<vmem>>, vector<1x1x64x128xf32>
      %40 = vector.shape_cast %39 : vector<1x1x64x128xf32> to vector<64x128xf32>
      %41 = vector.shape_cast %38 : vector<64x128xf32> to vector<1x1x64x128xf32>
      tpu.vector_store %arg9[%c0_29, %c0_30, %c0_31, %c0_32], %41 {strides = array<i32>} : memref<1x1x64x128xf32, #tpu.memory_space<vmem>>, vector<1x1x64x128xf32>,
    } else {
    }
    return
  }
  func.func @transform_0(%arg0: i32, %arg1: i32, %arg2: i32, %arg3: i32) -> (i32, i32, i32, i32) {
    %c0_i32 = arith.constant 0 : i32
    %c0_i32_0 = arith.constant 0 : i32
    return %arg1, %arg0, %arg2, %c0_i32 : i32, i32, i32, i32
  }
  func.func @transform_1(%arg0: i32, %arg1: i32, %arg2: i32, %arg3: i32) -> (i32, i32, i32) {
    %c0_i32 = arith.constant 0 : i32
    %c0_i32_0 = arith.constant 0 : i32
    return %arg0, %c0_i32, %arg3 : i32, i32, i32
  }
  func.func @transform_2(%arg0: i32, %arg1: i32, %arg2: i32, %arg3: i32) -> (i32, i32, i32) {
    %c0_i32 = arith.constant 0 : i32
    %c0_i32_0 = arith.constant 0 : i32
    return %arg0, %c0_i32, %arg3 : i32, i32, i32
  }
  func.func @transform_3(%arg0: i32, %arg1: i32, %arg2: i32, %arg3: i32) -> (i32, i32, i32) {
    %c0_i32 = arith.constant 0 : i32
    %c0_i32_0 = arith.constant 0 : i32
    return %arg0, %arg3, %c0_i32 : i32, i32, i32
  }
  func.func @transform_4(%arg0: i32, %arg1: i32, %arg2: i32, %arg3: i32) -> (i32, i32, i32) {
    %c0_i32 = arith.constant 0 : i32
    %c0_i32_0 = arith.constant 0 : i32
    %c0_i32_1 = arith.constant 0 : i32
    return %arg0, %c0_i32, %c0_i32_0 : i32, i32, i32
  }
  func.func @transform_5(%arg0: i32, %arg1: i32, %arg2: i32, %arg3: i32) -> (i32, i32, i32, i32) {
    %c0_i32 = arith.constant 0 : i32
    %c0_i32_0 = arith.constant 0 : i32
    return %arg1, %arg0, %arg2, %c0_i32 : i32, i32, i32, i32
  }
}

</mosaic_0001>

<llo_original>
// kernel: tpu_custom_call.1
$region0: #{tpu_custom_call.1}
  #allocation0 [shape = 'u32[]', space=smem, size = 0x4, offset = 0x4, fixed_abs, tag = 'smem constant byte address 0x4 - core index']
  #allocation1 [shape = 'u32[144,128]{1,0:T(1,128)}', space=vmem, size = 0x12000, scoped, tag = 'internal scratch']
  #allocation2 [shape = 'f32[64,128]{1,0:T(8,128)}', space=vmem, size = 0x8000, scoped, tag = 'scratch operand']
  %s0 = inlined_call_operand.hbm [shape: f32[2,2,64,128], index: 0, kind: input, shape index: {}]
  %s1 = inlined_call_operand.hbm [shape: f32[2,128,256], index: 1, kind: input, shape index: {}]
  %s2 = inlined_call_operand.hbm [shape: f32[2,1,256], index: 2, kind: input, shape index: {}]
  %s3 = inlined_call_operand.hbm [shape: f32[2,256,128], index: 3, kind: input, shape index: {}]
  %s4 = inlined_call_operand.vmem [shape: f32[2,1,128], index: 4, kind: input, shape index: {}]
  %s5 = inlined_call_operand.hbm [shape: f32[2,2,64,128], index: 5, kind: output, shape index: {}]
  %s6 = sld [smem:[#allocation0]]
  $region77: #{tpu_custom_call.1} parent=0
    _
  %s8 = ssub.s32 1, %s6
  %s9 = scalar_select 0, %s8, %s6
  $region1: #{tpu_custom_call.1} parent=0
    #allocation3 [shape = 'u8[65536]{0}', space=vmem, size = 0x10000, scoped, tag = 'input window, operand 0']
    #allocation4 [shape = 's32[2]{0}', space=sflag, size = 0x8, scoped, tag = 'scoped memory for tpu_custom_call.1']
    #allocation5 [shape = 's32[2]{0}', space=sflag, size = 0x8, scoped, tag = 'scoped memory for tpu_custom_call.1']
    #allocation6 [shape = 'u8[262144]{0}', space=vmem, size = 0x40000, scoped, tag = 'input window, operand 1']
    #allocation7 [shape = 's32[2]{0}', space=sflag, size = 0x8, scoped, tag = 'scoped memory for tpu_custom_call.1']
    #allocation8 [shape = 'u8[2048]{0}', space=vmem, size = 0x800, scoped, tag = 'input window, operand 2']
    #allocation9 [shape = 'u8[262144]{0}', space=vmem, size = 0x40000, scoped, tag = 'input window, operand 3']
    #allocation10 [shape = 's32[2]{0}', space=sflag, size = 0x8, scoped, tag = 'scoped memory for tpu_custom_call.1']
    #allocation11 [shape = 'u8[65536]{0}', space=vmem, size = 0x10000, scoped, tag = 'output window, operand 0']
    %10 = vsyncpa [#allocation4], 0
    %s11 = scalar_lea.sflag [#allocation4], 1
    %12 = vsyncpa %s11, 0
    %13 = vsyncpa [#allocation7], 0
    %s14 = scalar_lea.sflag [#allocation7], 1
    %15 = vsyncpa %s14, 0
    %16 = vsyncpa [#allocation10], 0
    %s17 = scalar_lea.sflag [#allocation10], 1
    %18 = vsyncpa %s17, 0
    %19 = vsyncpa [#allocation5], 0
    %s20 = scalar_lea.sflag [#allocation5], 1
    %21 = vsyncpa %s20, 0
    loop: start=0, step=1, limit=6
    $region2: #{tpu_custom_call.1} parent=1 // loop_pre_header
      _
    $region3: #{tpu_custom_call.1} parent=1 // loop_header
      %s23 = sphi 0, %s27
      %p24 = scmp.ge.s32.totalorder %s23, 6
      %s30 = sphi 0, %s56
      %s31 = sphi 0, %s52
      %s32 = sphi 0, %s48
      %s33 = sphi 0, %s44
      %s34 = sphi 0, %s30
      %s35 = sphi 0, %s31
      %s36 = sphi 0, %s32
      %s37 = sphi 0, %s33
      %s38 = sphi 0, %s34
      %s39 = sphi 0, %s35
      %s40 = sphi 0, %s36
      %s41 = sphi 0, %s37
      %s63 = sphi 0, %s65
      %s66 = sphi 0, %s63
      %s67 = sphi 0, %s66
      %s83 = sphi 0, %s67
      %s91 = sphi 0, %s93
      %s94 = sphi 0, %s91
      %s95 = sphi 0, %s94
      %s111 = sphi 0, %s95
      %s119 = sphi 0, %s121
      %s122 = sphi 0, %s119
      %s123 = sphi 0, %s122
      %s139 = sphi 0, %s123
      %s147 = sphi 0, %s149
      %s150 = sphi 0, %s147
      %s151 = sphi 0, %s150
      %s167 = sphi 0, %s151
      %s173 = sphi 0, %s175
      %s176 = sphi 0, %s173
      %s177 = sphi 0, %s176
      %s193 = sphi 0, %s177
      %s203 = sphi 0, %s205
      %s206 = sphi 0, %s203
      %s207 = sphi 0, %s206
      %s223 = sphi 0, %s207
    $region4: #{tpu_custom_call.1} parent=1 // loop_header_branch
      %26 = sbr.rel (%p24) target = $region8
    $region5: #{tpu_custom_call.1} parent=1 // loop_body
      %s28 = ssub.s32 %s23, 1
      %s29 = ssub.s32 %s23, 2
      %s42 = sadd.s32 1, %s33
      %p43 = scmp.ge.s32.totalorder %s42, 1
      %s44 = scalar_select %p43, 0, %s42
      %s45 = sadd.s32 1, %s32
      %s46 = scalar_select %p43, %s45, %s32
      %p47 = scmp.ge.s32.totalorder %s46, 1
      %s48 = scalar_select %p47, 0, %s46
      %s49 = sadd.s32 1, %s31
      %s50 = scalar_select %p47, %s49, %s31
      %p51 = scmp.ge.s32.totalorder %s50, 2
      %s52 = scalar_select %p51, 0, %s50
      %s53 = sadd.s32 1, %s30
      %s54 = scalar_select %p51, %s53, %s30
      %p55 = scmp.ge.s32.totalorder %s54, 2
      %s56 = scalar_select %p55, 0, %s54
      %s57 = ssub.s32 %s31, %s52
      %s58 = ssub.s32 %s30, %s56
      %s59 = sor.u32 %s57, %s58
      %s60 = ssub.s32 %s32, %s48
      %s61 = sor.u32 %s59, %s60
      %p62 = scmp.eq.s32.totalorder %s61, 0
      %s64 = sadd.s32 %s63, 1
      %s65 = scalar_select %p62, %s63, %s64
      %p68 = pneg %p62
      %p69 = scmp.eq.s32.totalorder %s23, 3
      %p70 = por %p68, %p69
      %p71 = scmp.ne.s32.totalorder %s63, %s66
      %p72 = scmp.eq.s32.totalorder %s23, 0
      %p73 = por %p71, %p72
      %p74 = scmp.ne.s32.totalorder %s63, %s66
      %p75 = scmp.eq.s32.totalorder %s28, 3
      %p76 = por %p74, %p75
      %p77 = scmp.ne.s32.totalorder %s66, %s67
      %p78 = scmp.eq.s32.totalorder %s28, 0
      %p79 = por %p77, %p78
      %p80 = scmp.ne.s32.totalorder %s66, %s67
      %p81 = scmp.eq.s32.totalorder %s29, 3
      %p82 = por %p80, %p81
      %p84 = scmp.ne.s32.totalorder %s67, %s83
      %p85 = scmp.eq.s32.totalorder %s29, 0
      %p86 = por %p84, %p85
      %s87 = ssub.s32 %s30, %s56
      %s88 = ssub.s32 %s33, %s44
      %s89 = sor.u32 %s87, %s88
      %p90 = scmp.eq.s32.totalorder %s89, 0
      %s92 = sadd.s32 %s91, 1
      %s93 = scalar_select %p90, %s91, %s92
      %p96 = pneg %p90
      %p97 = scmp.eq.s32.totalorder %s23, 3
      %p98 = por %p96, %p97
      %p99 = scmp.ne.s32.totalorder %s91, %s94
      %p100 = scmp.eq.s32.totalorder %s23, 0
      %p101 = por %p99, %p100
      %p102 = scmp.ne.s32.totalorder %s91, %s94
      %p103 = scmp.eq.s32.totalorder %s28, 3
      %p104 = por %p102, %p103
      %p105 = scmp.ne.s32.totalorder %s94, %s95
      %p106 = scmp.eq.s32.totalorder %s28, 0
      %p107 = por %p105, %p106
      %p108 = scmp.ne.s32.totalorder %s94, %s95
      %p109 = scmp.eq.s32.totalorder %s29, 3
      %p110 = por %p108, %p109
      %p112 = scmp.ne.s32.totalorder %s95, %s111
      %p113 = scmp.eq.s32.totalorder %s29, 0
      %p114 = por %p112, %p113
      %s115 = ssub.s32 %s30, %s56
      %s116 = ssub.s32 %s33, %s44
      %s117 = sor.u32 %s115, %s116
      %p118 = scmp.eq.s32.totalorder %s117, 0
      %s120 = sadd.s32 %s119, 1
      %s121 = scalar_select %p118, %s119, %s120
      %p124 = pneg %p118
      %p125 = scmp.eq.s32.totalorder %s23, 3
      %p126 = por %p124, %p125
      %p127 = scmp.ne.s32.totalorder %s119, %s122
      %p128 = scmp.eq.s32.totalorder %s23, 0
      %p129 = por %p127, %p128
      %p130 = scmp.ne.s32.totalorder %s119, %s122
      %p131 = scmp.eq.s32.totalorder %s28, 3
      %p132 = por %p130, %p131
      %p133 = scmp.ne.s32.totalorder %s122, %s123
      %p134 = scmp.eq.s32.totalorder %s28, 0
      %p135 = por %p133, %p134
      %p136 = scmp.ne.s32.totalorder %s122, %s123
      %p137 = scmp.eq.s32.totalorder %s29, 3
      %p138 = por %p136, %p137
      %p140 = scmp.ne.s32.totalorder %s123, %s139
      %p141 = scmp.eq.s32.totalorder %s29, 0
      %p142 = por %p140, %p141
      %s143 = ssub.s32 %s30, %s56
      %s144 = ssub.s32 %s33, %s44
      %s145 = sor.u32 %s143, %s144
      %p146 = scmp.eq.s32.totalorder %s145, 0
      %s148 = sadd.s32 %s147, 1
      %s149 = scalar_select %p146, %s147, %s148
      %p152 = pneg %p146
      %p153 = scmp.eq.s32.totalorder %s23, 3
      %p154 = por %p152, %p153
      %p155 = scmp.ne.s32.totalorder %s147, %s150
      %p156 = scmp.eq.s32.totalorder %s23, 0
      %p157 = por %p155, %p156
      %p158 = scmp.ne.s32.totalorder %s147, %s150
      %p159 = scmp.eq.s32.totalorder %s28, 3
      %p160 = por %p158, %p159
      %p161 = scmp.ne.s32.totalorder %s150, %s151
      %p162 = scmp.eq.s32.totalorder %s28, 0
      %p163 = por %p161, %p162
      %p164 = scmp.ne.s32.totalorder %s150, %s151
      %p165 = scmp.eq.s32.totalorder %s29, 3
      %p166 = por %p164, %p165
      %p168 = scmp.ne.s32.totalorder %s151, %s167
      %p169 = scmp.eq.s32.totalorder %s29, 0
      %p170 = por %p168, %p169
      %s171 = ssub.s32 %s30, %s56
      %p172 = scmp.eq.s32.totalorder %s171, 0
      %s174 = sadd.s32 %s173, 1
      %s175 = scalar_select %p172, %s173, %s174
      %p178 = pneg %p172
      %p179 = scmp.eq.s32.totalorder %s23, 3
      %p180 = por %p178, %p179
      %p181 = scmp.ne.s32.totalorder %s173, %s176
      %p182 = scmp.eq.s32.totalorder %s23, 0
      %p183 = por %p181, %p182
      %p184 = scmp.ne.s32.totalorder %s173, %s176
      %p185 = scmp.eq.s32.totalorder %s28, 3
      %p186 = por %p184, %p185
      %p187 = scmp.ne.s32.totalorder %s176, %s177
      %p188 = scmp.eq.s32.totalorder %s28, 0
      %p189 = por %p187, %p188
      %p190 = scmp.ne.s32.totalorder %s176, %s177
      %p191 = scmp.eq.s32.totalorder %s29, 3
      %p192 = por %p190, %p191
      %p194 = scmp.ne.s32.totalorder %s177, %s193
      %p195 = scmp.eq.s32.totalorder %s29, 0
      %p196 = por %p194, %p195
      %s197 = ssub.s32 %s31, %s52
      %s198 = ssub.s32 %s30, %s56
      %s199 = sor.u32 %s197, %s198
      %s200 = ssub.s32 %s32, %s48
      %s201 = sor.u32 %s199, %s200
      %p202 = scmp.eq.s32.totalorder %s201, 0
      %s204 = sadd.s32 %s203, 1
      %s205 = scalar_select %p202, %s203, %s204
      %p208 = pneg %p202
      %p209 = scmp.eq.s32.totalorder %s23, 3
      %p210 = por %p208, %p209
      %p211 = scmp.ne.s32.totalorder %s203, %s206
      %p212 = scmp.eq.s32.totalorder %s23, 0
      %p213 = por %p211, %p212
      %p214 = scmp.ne.s32.totalorder %s203, %s206
      %p215 = scmp.eq.s32.totalorder %s28, 3
      %p216 = por %p214, %p215
      %p217 = scmp.ne.s32.totalorder %s206, %s207
      %p218 = scmp.eq.s32.totalorder %s28, 0
      %p219 = por %p217, %p218
      %p220 = scmp.ne.s32.totalorder %s206, %s207
      %p221 = scmp.eq.s32.totalorder %s29, 3
      %p222 = por %p220, %p221
      %p224 = scmp.ne.s32.totalorder %s207, %s223
      %p225 = scmp.eq.s32.totalorder %s29, 0
      %p226 = por %p224, %p225
      %p227 = scmp.le.s32.totalorder 1, %s23
      %p228 = scmp.lt.s32.totalorder %s23, 5
      %p229 = pnand %p227, %p228
      %p230 = pneg %p229
      // Predicated region
      $region9: #{tpu_custom_call.1} parent=5 // pred_check
        _
      $region10: #{tpu_custom_call.1} parent=5 // pred_check_branch
        %232 = sbr.rel (%p229) target = $region12
      $region11: #{tpu_custom_call.1} parent=5 // pred_region
        %s233 = ssub.s32 %s23, 1
      $region12: #{tpu_custom_call.1} parent=5 // pred_fallthru
        _
      %p234 = scmp.lt.s32.totalorder %s23, 4
      // Predicated region
      $region13: #{tpu_custom_call.1} parent=5 // pred_check
        %p235 = pneg %p234
      $region14: #{tpu_custom_call.1} parent=5 // pred_check_branch
        %237 = sbr.rel (%p235) target = $region16
      $region15: #{tpu_custom_call.1} parent=5 // pred_region
        // Predicated region
        $region17: #{tpu_custom_call.1} parent=15 // pred_check
          %p238 = pneg %p73
        $region18: #{tpu_custom_call.1} parent=15 // pred_check_branch
          %240 = sbr.rel (%p238) target = $region20
        $region19: #{tpu_custom_call.1} parent=15 // pred_region
          %s241 = sand.u32 %s63, 1
          %s242 = scalar_lea.sflag [#allocation4], %s241
          %s243 = sand.u32 %s63, 1
          %s244 = smul.addr %s243, 64
          %s245 = scalar_lea.vmem [#allocation3], %s244
          %s246 = smul.u32 8, %s32
          %s248 = ssub.s32 1024, 1024
          %249 = vsyncadd %s242, %s248
          %s250 = smul.addr %s30, 8
          %s251 = sadd.s32 %s246, %s250
          %s252 = smul.addr %s31, 16
          %s253 = sadd.s32 %s251, %s252
          %s254 = smul.addr %s253, 128
          %s255 = scalar_lea.hbm %s0, %s254
          %s256 = sshll.u32 %s245, 4
          %s257 = int_to_ptr.vmem [resolvable:$true] %s256
          %262 = dma.hbm_to_vmem [thread:$0]  %s255, 1024, %s257, %s242, 128, 128, 8
        $region20: #{tpu_custom_call.1} parent=15 // pred_fallthru
          _
        // Predicated region
        $region21: #{tpu_custom_call.1} parent=15 // pred_check
          %p263 = pneg %p101
        $region22: #{tpu_custom_call.1} parent=15 // pred_check_branch
          %265 = sbr.rel (%p263) target = $region24
        $region23: #{tpu_custom_call.1} parent=15 // pred_region
          %s266 = sand.u32 %s23, 1
          %s267 = scalar_lea.sflag [#allocation7], %s266
          %s268 = sand.u32 %s91, 1
          %s269 = smul.addr %s268, 256
          %s270 = scalar_lea.vmem [#allocation6], %s269
          %s271 = smul.u32 2, %s33
          %s273 = ssub.s32 4096, 4096
          %274 = vsyncadd %s267, %s273
          %s275 = smul.addr %s30, 32
          %s276 = sadd.s32 %s271, %s275
          %s277 = smul.addr %s276, 128
          %s278 = scalar_lea.hbm %s1, %s277
          %s279 = sshll.u32 %s270, 4
          %s280 = int_to_ptr.vmem [resolvable:$true] %s279
          %285 = dma.hbm_to_vmem [thread:$0]  %s278, 4096, %s280, %s267, 256, 256, 16
        $region24: #{tpu_custom_call.1} parent=15 // pred_fallthru
          _
        // Predicated region
        $region25: #{tpu_custom_call.1} parent=15 // pred_check
          %p286 = pneg %p129
        $region26: #{tpu_custom_call.1} parent=15 // pred_check_branch
          %288 = sbr.rel (%p286) target = $region28
        $region27: #{tpu_custom_call.1} parent=15 // pred_region
          %s289 = sand.u32 %s23, 1
          %s290 = scalar_lea.sflag [#allocation7], %s289
          %s291 = sand.u32 %s119, 1
          %s292 = smul.addr %s291, 2
          %s293 = scalar_lea.vmem [#allocation8], %s292
          %s294 = smul.u32 2, %s33
          %s296 = ssub.s32 32, 32
          %297 = vsyncadd %s290, %s296
          %s298 = smul.addr %s30, 2
          %s299 = sadd.s32 %s294, %s298
          %s300 = smul.addr %s299, 16
          %s301 = scalar_lea.hbm %s2, %s300
          %s303 = sshll.u32 %s293, 4
          %s304 = int_to_ptr.vmem [resolvable:$true] %s303
          %306 = dma.hbm_to_vmem [thread:$0]  %s301, 32, %s304, %s290
        $region28: #{tpu_custom_call.1} parent=15 // pred_fallthru
          _
        // Predicated region
        $region29: #{tpu_custom_call.1} parent=15 // pred_check
          %p307 = pneg %p157
        $region30: #{tpu_custom_call.1} parent=15 // pred_check_branch
          %309 = sbr.rel (%p307) target = $region32
        $region31: #{tpu_custom_call.1} parent=15 // pred_region
          %s310 = sand.u32 %s147, 1
          %s311 = scalar_lea.sflag [#allocation10], %s310
          %s312 = sand.u32 %s147, 1
          %s313 = smul.addr %s312, 256
          %s314 = scalar_lea.vmem [#allocation9], %s313
          %s315 = smul.u32 32, %s33
          %s317 = ssub.s32 4096, 4096
          %318 = vsyncadd %s311, %s317
          %s319 = smul.addr %s30, 32
          %s320 = sadd.s32 %s315, %s319
          %s321 = smul.addr %s320, 128
          %s322 = scalar_lea.hbm %s3, %s321
          %s323 = sshll.u32 %s314, 4
          %s324 = int_to_ptr.vmem [resolvable:$true] %s323
          %329 = dma.hbm_to_vmem [thread:$0]  %s322, 4096, %s324, %s311, 128, 128, 8
        $region32: #{tpu_custom_call.1} parent=15 // pred_fallthru
          _
        // Predicated region
        $region33: #{tpu_custom_call.1} parent=15 // pred_check
          %p330 = pneg %p183
        $region34: #{tpu_custom_call.1} parent=15 // pred_check_branch
          %332 = sbr.rel (%p330) target = $region36
        $region35: #{tpu_custom_call.1} parent=15 // pred_region
          %p333 = scmp.lt.s32.totalorder %s30, 1
          %s334 = scalar_select %p333, %s30, 1
          %s335 = scalar_lea.vmem %s4, %s334
        $region36: #{tpu_custom_call.1} parent=15 // pred_fallthru
          _
      $region16: #{tpu_custom_call.1} parent=5 // pred_fallthru
        _
      %p336 = scmp.le.s32.totalorder 1, %s23
      %p337 = scmp.lt.s32.totalorder %s23, 5
      %p338 = pnand %p336, %p337
      %p339 = pneg %p338
      // Predicated region
      $region37: #{tpu_custom_call.1} parent=5 // pred_check
        _
      $region38: #{tpu_custom_call.1} parent=5 // pred_check_branch
        %341 = sbr.rel (%p338) target = $region40
      $region39: #{tpu_custom_call.1} parent=5 // pred_region
        %s342 = ssub.s32 %s23, 1
        %s343 = sand.u32 %s66, 1
        %s344 = scalar_lea.sflag [#allocation4], %s343
        %s345 = sand.u32 %s66, 1
        %s346 = smul.addr %s345, 64
        %s347 = scalar_lea.vmem [#allocation3], %s346
        // Predicated region
        $region41: #{tpu_custom_call.1} parent=39 // pred_check
          %p348 = pneg %p79
        $region42: #{tpu_custom_call.1} parent=39 // pred_check_branch
          %350 = sbr.rel (%p348) target = $region44
        $region43: #{tpu_custom_call.1} parent=39 // pred_region
          %351 = dma.done %s344, 1024
        $region44: #{tpu_custom_call.1} parent=39 // pred_fallthru
          _
        %s352 = sand.u32 %s28, 1
        %s353 = scalar_lea.sflag [#allocation7], %s352
        %s354 = sand.u32 %s94, 1
        %s355 = smul.addr %s354, 256
        %s356 = scalar_lea.vmem [#allocation6], %s355
        // Predicated region
        $region45: #{tpu_custom_call.1} parent=39 // pred_check
          %p357 = pneg %p107
        $region46: #{tpu_custom_call.1} parent=39 // pred_check_branch
          %359 = sbr.rel (%p357) target = $region48
        $region47: #{tpu_custom_call.1} parent=39 // pred_region
          %360 = dma.done %s353, 4096
        $region48: #{tpu_custom_call.1} parent=39 // pred_fallthru
          _
        %s361 = sand.u32 %s28, 1
        %s362 = scalar_lea.sflag [#allocation7], %s361
        %s363 = sand.u32 %s122, 1
        %s364 = smul.addr %s363, 2
        %s365 = scalar_lea.vmem [#allocation8], %s364
        // Predicated region
        $region49: #{tpu_custom_call.1} parent=39 // pred_check
          %p366 = pneg %p135
        $region50: #{tpu_custom_call.1} parent=39 // pred_check_branch
          %368 = sbr.rel (%p366) target = $region52
        $region51: #{tpu_custom_call.1} parent=39 // pred_region
          %369 = dma.done %s362, 32
        $region52: #{tpu_custom_call.1} parent=39 // pred_fallthru
          _
        %s370 = sand.u32 %s150, 1
        %s371 = scalar_lea.sflag [#allocation10], %s370
        %s372 = sand.u32 %s150, 1
        %s373 = smul.addr %s372, 256
        %s374 = scalar_lea.vmem [#allocation9], %s373
        // Predicated region
        $region53: #{tpu_custom_call.1} parent=39 // pred_check
          %p375 = pneg %p163
        $region54: #{tpu_custom_call.1} parent=39 // pred_check_branch
          %377 = sbr.rel (%p375) target = $region56
        $region55: #{tpu_custom_call.1} parent=39 // pred_region
          %378 = dma.done %s371, 4096
        $region56: #{tpu_custom_call.1} parent=39 // pred_fallthru
          _
        %s379 = sand.u32 %s66, 1
        %s380 = scalar_lea.sflag [#allocation4], %s379
        %s381 = sand.u32 %s66, 1
        %s382 = smul.addr %s381, 64
        %s383 = scalar_lea.vmem [#allocation3], %s382
        %p384 = pneg %p79
        %p385 = pneg %p76
        %s386 = sand.u32 %s28, 1
        %s387 = scalar_lea.sflag [#allocation7], %s386
        %s388 = sand.u32 %s94, 1
        %s389 = smul.addr %s388, 256
        %s390 = scalar_lea.vmem [#allocation6], %s389
        %p391 = pneg %p107
        %p392 = pneg %p104
        %s393 = sand.u32 %s28, 1
        %s394 = scalar_lea.sflag [#allocation7], %s393
        %s395 = sand.u32 %s122, 1
        %s396 = smul.addr %s395, 2
        %s397 = scalar_lea.vmem [#allocation8], %s396
        %p398 = pneg %p135
        %p399 = pneg %p132
        %s400 = sand.u32 %s150, 1
        %s401 = scalar_lea.sflag [#allocation10], %s400
        %s402 = sand.u32 %s150, 1
        %s403 = smul.addr %s402, 256
        %s404 = scalar_lea.vmem [#allocation9], %s403
        %p405 = pneg %p163
        %p406 = pneg %p160
        %p407 = scmp.lt.s32.totalorder %s34, 1
        %s408 = scalar_select %p407, %s34, 1
        %s409 = scalar_lea.vmem %s4, %s408
        %p410 = pneg %p189
        %p411 = pneg %p186
        %p412 = pneg %p219
        %p413 = pneg %p216
        %s414 = sand.u32 %s206, 1
        %s415 = scalar_lea.sflag [#allocation5], %s414
        %s416 = sand.u32 %s206, 1
        %s417 = smul.addr %s416, 64
        %s418 = scalar_lea.vmem [#allocation11], %s417
        %s419 = smul.u32 8, %s36
        %s420 = smul.u32 2, %s37
        %s421 = smul.u32 2, %s37
        %s422 = smul.u32 32, %s37
        %p423 = scmp.lt.s32.totalorder %s34, 1
        %s424 = scalar_select %p423, %s34, 1
        %s425 = scalar_lea.vmem %s4, %s424
        %s426 = smul.u32 8, %s36
        %p427 = scmp.eq.s32.totalorder %s37, 0
        // Predicated region
        $region57: #{tpu_custom_call.1} parent=39 // pred_check
          %p428 = pneg %p427
        $region58: #{tpu_custom_call.1} parent=39 // pred_check_branch
          %430 = sbr.rel (%p428) target = $region60
        $region59: #{tpu_custom_call.1} parent=39 // pred_region
          %431 = vst [vmem:[#allocation2] sm:$0xff] 0.0
          %432 = vst [vmem:[#allocation2 + $0x8] sm:$0xff] 0.0
          %433 = vst [vmem:[#allocation2 + $0x10] sm:$0xff] 0.0
          %434 = vst [vmem:[#allocation2 + $0x18] sm:$0xff] 0.0
          %435 = vst [vmem:[#allocation2 + $0x20] sm:$0xff] 0.0
          %436 = vst [vmem:[#allocation2 + $0x28] sm:$0xff] 0.0
          %437 = vst [vmem:[#allocation2 + $0x30] sm:$0xff] 0.0
          %438 = vst [vmem:[#allocation2 + $0x38] sm:$0xff] 0.0
        $region60: #{tpu_custom_call.1} parent=39 // pred_fallthru
          _
        %v439 = vld [vmem:[%s347] sm:$0xff]
        %v440 = vld [vmem:[%s347 + $0x8] sm:$0xff]
        %v441 = vld [vmem:[%s347 + $0x10] sm:$0xff]
        %v442 = vld [vmem:[%s347 + $0x18] sm:$0xff]
        %v443 = vld [vmem:[%s347 + $0x20] sm:$0xff]
        %v444 = vld [vmem:[%s347 + $0x28] sm:$0xff]
        %v445 = vld [vmem:[%s347 + $0x30] sm:$0xff]
        %v446 = vld [vmem:[%s347 + $0x38] sm:$0xff]
        %v447 = vld [vmem:[%s356] sm:$0xff]
        %v448 = vld [vmem:[%s356 + $0x8] sm:$0xff]
        %v449 = vld [vmem:[%s356 + $0x10] sm:$0xff]
        %v450 = vld [vmem:[%s356 + $0x18] sm:$0xff]
        %v451 = vld [vmem:[%s356 + $0x20] sm:$0xff]
        %v452 = vld [vmem:[%s356 + $0x28] sm:$0xff]
        %v453 = vld [vmem:[%s356 + $0x30] sm:$0xff]
        %v454 = vld [vmem:[%s356 + $0x38] sm:$0xff]
        %v455 = vld [vmem:[%s356 + $0x40] sm:$0xff]
        %v456 = vld [vmem:[%s356 + $0x48] sm:$0xff]
        %v457 = vld [vmem:[%s356 + $0x50] sm:$0xff]
        %v458 = vld [vmem:[%s356 + $0x58] sm:$0xff]
        %v459 = vld [vmem:[%s356 + $0x60] sm:$0xff]
        %v460 = vld [vmem:[%s356 + $0x68] sm:$0xff]
        %v461 = vld [vmem:[%s356 + $0x70] sm:$0xff]
        %v462 = vld [vmem:[%s356 + $0x78] sm:$0xff]
        %v463 = vld [vmem:[%s356 + $0x80] sm:$0xff]
        %v464 = vld [vmem:[%s356 + $0x88] sm:$0xff]
        %v465 = vld [vmem:[%s356 + $0x90] sm:$0xff]
        %v466 = vld [vmem:[%s356 + $0x98] sm:$0xff]
        %v467 = vld [vmem:[%s356 + $0xa0] sm:$0xff]
        %v468 = vld [vmem:[%s356 + $0xa8] sm:$0xff]
        %v469 = vld [vmem:[%s356 + $0xb0] sm:$0xff]
        %v470 = vld [vmem:[%s356 + $0xb8] sm:$0xff]
        %v471 = vld [vmem:[%s356 + $0xc0] sm:$0xff]
        %v472 = vld [vmem:[%s356 + $0xc8] sm:$0xff]
        %v473 = vld [vmem:[%s356 + $0xd0] sm:$0xff]
        %v474 = vld [vmem:[%s356 + $0xd8] sm:$0xff]
        %v475 = vld [vmem:[%s356 + $0xe0] sm:$0xff]
        %v476 = vld [vmem:[%s356 + $0xe8] sm:$0xff]
        %v477 = vld [vmem:[%s356 + $0xf0] sm:$0xff]
        %v478 = vld [vmem:[%s356 + $0xf8] sm:$0xff]
        %v479 = vld [vmem:[%s374] sm:$0xff]
        %v480 = vld [vmem:[%s374 + $0x8] sm:$0xff]
        %v481 = vld [vmem:[%s374 + $0x10] sm:$0xff]
        %v482 = vld [vmem:[%s374 + $0x18] sm:$0xff]
        %v483 = vld [vmem:[%s374 + $0x20] sm:$0xff]
        %v484 = vld [vmem:[%s374 + $0x28] sm:$0xff]
        %v485 = vld [vmem:[%s374 + $0x30] sm:$0xff]
        %v486 = vld [vmem:[%s374 + $0x38] sm:$0xff]
        %v487 = vld [vmem:[%s374 + $0x40] sm:$0xff]
        %v488 = vld [vmem:[%s374 + $0x48] sm:$0xff]
        %v489 = vld [vmem:[%s374 + $0x50] sm:$0xff]
        %v490 = vld [vmem:[%s374 + $0x58] sm:$0xff]
        %v491 = vld [vmem:[%s374 + $0x60] sm:$0xff]
        %v492 = vld [vmem:[%s374 + $0x68] sm:$0xff]
        %v493 = vld [vmem:[%s374 + $0x70] sm:$0xff]
        %v494 = vld [vmem:[%s374 + $0x78] sm:$0xff]
        %v495 = vld [vmem:[%s374 + $0x80] sm:$0xff]
        %v496 = vld [vmem:[%s374 + $0x88] sm:$0xff]
        %v497 = vld [vmem:[%s374 + $0x90] sm:$0xff]
        %v498 = vld [vmem:[%s374 + $0x98] sm:$0xff]
        %v499 = vld [vmem:[%s374 + $0xa0] sm:$0xff]
        %v500 = vld [vmem:[%s374 + $0xa8] sm:$0xff]
        %v501 = vld [vmem:[%s374 + $0xb0] sm:$0xff]
        %v502 = vld [vmem:[%s374 + $0xb8] sm:$0xff]
        %v503 = vld [vmem:[%s374 + $0xc0] sm:$0xff]
        %v504 = vld [vmem:[%s374 + $0xc8] sm:$0xff]
        %v505 = vld [vmem:[%s374 + $0xd0] sm:$0xff]
        %v506 = vld [vmem:[%s374 + $0xd8] sm:$0xff]
        %v507 = vld [vmem:[%s374 + $0xe0] sm:$0xff]
        %v508 = vld [vmem:[%s374 + $0xe8] sm:$0xff]
        %v509 = vld [vmem:[%s374 + $0xf0] sm:$0xff]
        %v510 = vld [vmem:[%s374 + $0xf8] sm:$0xff]
        %v511 = vld [vmem:[%s365] sm:$0x3]
        %v513 = vlaneseq
        %v514 = vshrl.u32 %v513, 7
        %v515 = vsub.s32 0, %v514
        %v516 = vrot.slane %v511, %v515
        %v517 = vlaneseq
        %v518 = vshrl.u32 %v517, 7
        %v519 = vsub.s32 1, %v518
        %v520 = vrot.slane %v511, %v519
        %v523 = vand.u32 %v478, 4294901760
        %524 = vmatprep.subr.mxu0 %v523
        %v525 = vand.u32 %v477, 4294901760
        %526 = vmatpush1.msra.mxu0 %v525
        %v527 = vand.u32 %v476, 4294901760
        %528 = vmatprep.subr.mxu0 %v527
        %v529 = vand.u32 %v475, 4294901760
        %530 = vmatpush1.msra.mxu0 %v529
        %v531 = vand.u32 %v474, 4294901760
        %532 = vmatprep.subr.mxu0 %v531
        %v533 = vand.u32 %v473, 4294901760
        %534 = vmatpush1.msra.mxu0 %v533
        %v535 = vand.u32 %v472, 4294901760
        %536 = vmatprep.subr.mxu0 %v535
        %v537 = vand.u32 %v471, 4294901760
        %538 = vmatpush1.msra.mxu0 %v537
        %v539 = vand.u32 %v470, 4294901760
        %540 = vmatprep.subr.mxu0 %v539
        %v541 = vand.u32 %v469, 4294901760
        %542 = vmatpush1.msra.mxu0 %v541
        %v543 = vand.u32 %v468, 4294901760
        %544 = vmatprep.subr.mxu0 %v543
        %v545 = vand.u32 %v467, 4294901760
        %546 = vmatpush1.msra.mxu0 %v545
        %v547 = vand.u32 %v466, 4294901760
        %548 = vmatprep.subr.mxu0 %v547
        %v549 = vand.u32 %v465, 4294901760
        %550 = vmatpush1.msra.mxu0 %v549
        %v551 = vand.u32 %v464, 4294901760
        %552 = vmatprep.subr.mxu0 %v551
        %v553 = vand.u32 %v463, 4294901760
        %554 = vmatpush1.msra.mxu0 %v553
        %v555 = vand.u32 %v462, 4294901760
        %556 = vmatprep.subr.mxu0 %v555
        %v557 = vand.u32 %v461, 4294901760
        %558 = vmatpush1.msra.mxu0 %v557
        %v559 = vand.u32 %v460, 4294901760
        %560 = vmatprep.subr.mxu0 %v559
        %v561 = vand.u32 %v459, 4294901760
        %562 = vmatpush1.msra.mxu0 %v561
        %v563 = vand.u32 %v458, 4294901760
        %564 = vmatprep.subr.mxu0 %v563
        %v565 = vand.u32 %v457, 4294901760
        %566 = vmatpush1.msra.mxu0 %v565
        %v567 = vand.u32 %v456, 4294901760
        %568 = vmatprep.subr.mxu0 %v567
        %v569 = vand.u32 %v455, 4294901760
        %570 = vmatpush1.msra.mxu0 %v569
        %v571 = vand.u32 %v454, 4294901760
        %572 = vmatprep.subr.mxu0 %v571
        %v573 = vand.u32 %v453, 4294901760
        %574 = vmatpush1.msra.mxu0 %v573
        %v575 = vand.u32 %v452, 4294901760
        %576 = vmatprep.subr.mxu0 %v575
        %v577 = vand.u32 %v451, 4294901760
        %578 = vmatpush1.msra.mxu0 %v577
        %v579 = vand.u32 %v450, 4294901760
        %580 = vmatprep.subr.mxu0 %v579
        %v581 = vand.u32 %v449, 4294901760
        %582 = vmatpush1.msra.mxu0 %v581
        %v583 = vand.u32 %v448, 4294901760
        %584 = vmatprep.subr.mxu0 %v583
        %v585 = vand.u32 %v447, 4294901760
        %586 = vmatpush1.msra.mxu0 %v585
        %587 = vmatprep.subr.mxu0 0.0
        %588 = vmatpush2.msra.mxu0 0.0
        %589 = vmatprep.subr.mxu0 0.0
        %590 = vmatpush2.msra.mxu0 0.0
        %591 = vmatprep.subr.mxu0 0.0
        %592 = vmatpush2.msra.mxu0 0.0
        %593 = vmatprep.subr.mxu0 0.0
        %594 = vmatpush2.msra.mxu0 0.0
        %595 = vmatprep.subr.mxu0 0.0
        %596 = vmatpush2.msra.mxu0 0.0
        %597 = vmatprep.subr.mxu0 0.0
        %598 = vmatpush2.msra.mxu0 0.0
        %599 = vmatprep.subr.mxu0 0.0
        %600 = vmatpush2.msra.mxu0 0.0
        %601 = vmatprep.subr.mxu0 0.0
        %602 = vmatpush2.msra.mxu0 0.0
        %603 = vmatprep.subr.mxu0 0.0
        %604 = vmatpush2.msra.mxu0 0.0
        %605 = vmatprep.subr.mxu0 0.0
        %606 = vmatpush2.msra.mxu0 0.0
        %607 = vmatprep.subr.mxu0 0.0
        %608 = vmatpush2.msra.mxu0 0.0
        %609 = vmatprep.subr.mxu0 0.0
        %610 = vmatpush2.msra.mxu0 0.0
        %611 = vmatprep.subr.mxu0 0.0
        %612 = vmatpush2.msra.mxu0 0.0
        %613 = vmatprep.subr.mxu0 0.0
        %614 = vmatpush2.msra.mxu0 0.0
        %615 = vmatprep.subr.mxu0 0.0
        %616 = vmatpush2.msra.mxu0 0.0
        %617 = vmatprep.subr.mxu0 0.0
        %618 = vmatpush2.msra.mxu0 0.0
        %619 = vmatprep.mubr.f32.mxu0 0.0
        %v620 = vand.u32 %v439, 4294901760
        %v621 = vsub.f32 %v439, %v620
        %v622 = vand.u32 %v621, 4294901760
        %v623 = vsub.f32 %v621, %v622
        %v624 = vand.u32 %v623, 4294901760
        %625 = vmatmul.mubr.f32.gmra.mxu0 %v624
        %v626 = vpop.f32.mrf.mxu0
        %v627 = vadd.f32 %v516, %v626
        %v628 = vpop.f32.mrf.mxu0
        %v629 = vadd.f32 %v520, %v628
        %630 = vmatprep.mubr.f32.mxu0 0.0
        %v631 = vand.u32 %v440, 4294901760
        %v632 = vsub.f32 %v440, %v631
        %v633 = vand.u32 %v632, 4294901760
        %v634 = vsub.f32 %v632, %v633
        %v635 = vand.u32 %v634, 4294901760
        %636 = vmatmul.mubr.f32.gmra.mxu0 %v635
        %v637 = vpop.f32.mrf.mxu0
        %v638 = vadd.f32 %v516, %v637
        %v639 = vpop.f32.mrf.mxu0
        %v640 = vadd.f32 %v520, %v639
        %641 = vmatprep.mubr.f32.mxu0 0.0
        %v642 = vand.u32 %v441, 4294901760
        %v643 = vsub.f32 %v441, %v642
        %v644 = vand.u32 %v643, 4294901760
        %v645 = vsub.f32 %v643, %v644
        %v646 = vand.u32 %v645, 4294901760
        %647 = vmatmul.mubr.f32.gmra.mxu0 %v646
        %v648 = vpop.f32.mrf.mxu0
        %v649 = vadd.f32 %v516, %v648
        %v650 = vpop.f32.mrf.mxu0
        %v651 = vadd.f32 %v520, %v650
        %652 = vmatprep.mubr.f32.mxu0 0.0
        %v653 = vand.u32 %v442, 4294901760
        %v654 = vsub.f32 %v442, %v653
        %v655 = vand.u32 %v654, 4294901760
        %v656 = vsub.f32 %v654, %v655
        %v657 = vand.u32 %v656, 4294901760
        %658 = vmatmul.mubr.f32.gmra.mxu0 %v657
        %v659 = vpop.f32.mrf.mxu0
        %v660 = vadd.f32 %v516, %v659
        %v661 = vpop.f32.mrf.mxu0
        %v662 = vadd.f32 %v520, %v661
        %663 = vmatprep.mubr.f32.mxu0 0.0
        %v664 = vand.u32 %v443, 4294901760
        %v665 = vsub.f32 %v443, %v664
        %v666 = vand.u32 %v665, 4294901760
        %v667 = vsub.f32 %v665, %v666
        %v668 = vand.u32 %v667, 4294901760
        %669 = vmatmul.mubr.f32.gmra.mxu0 %v668
        %v670 = vpop.f32.mrf.mxu0
        %v671 = vadd.f32 %v516, %v670
        %v672 = vpop.f32.mrf.mxu0
        %v673 = vadd.f32 %v520, %v672
        %674 = vmatprep.mubr.f32.mxu0 0.0
        %v675 = vand.u32 %v444, 4294901760
        %v676 = vsub.f32 %v444, %v675
        %v677 = vand.u32 %v676, 4294901760
        %v678 = vsub.f32 %v676, %v677
        %v679 = vand.u32 %v678, 4294901760
        %680 = vmatmul.mubr.f32.gmra.mxu0 %v679
        %v681 = vpop.f32.mrf.mxu0
        %v682 = vadd.f32 %v516, %v681
        %v683 = vpop.f32.mrf.mxu0
        %v684 = vadd.f32 %v520, %v683
        %685 = vmatprep.mubr.f32.mxu0 0.0
        %v686 = vand.u32 %v445, 4294901760
        %v687 = vsub.f32 %v445, %v686
        %v688 = vand.u32 %v687, 4294901760
        %v689 = vsub.f32 %v687, %v688
        %v690 = vand.u32 %v689, 4294901760
        %691 = vmatmul.mubr.f32.gmra.mxu0 %v690
        %v692 = vpop.f32.mrf.mxu0
        %v693 = vadd.f32 %v516, %v692
        %v694 = vpop.f32.mrf.mxu0
        %v695 = vadd.f32 %v520, %v694
        %696 = vmatprep.mubr.f32.mxu0 0.0
        %v697 = vand.u32 %v446, 4294901760
        %v698 = vsub.f32 %v446, %v697
        %v699 = vand.u32 %v698, 4294901760
        %v700 = vsub.f32 %v698, %v699
        %v701 = vand.u32 %v700, 4294901760
        %702 = vmatmul.mubr.f32.gmra.mxu0 %v701
        %v703 = vpop.f32.mrf.mxu0
        %v704 = vadd.f32 %v516, %v703
        %v705 = vpop.f32.mrf.mxu0
        %v706 = vadd.f32 %v520, %v705
        %707 = vdwg.mxu0
        %v708 = vand.u32 %v478, 4294901760
        %v709 = vsub.f32 %v478, %v708
        %v710 = vand.u32 %v709, 4294901760
        %v711 = vsub.f32 %v709, %v710
        %v712 = vand.u32 %v711, 4294901760
        %713 = vmatprep.subr.mxu0 %v712
        %v714 = vand.u32 %v477, 4294901760
        %v715 = vsub.f32 %v477, %v714
        %v716 = vand.u32 %v715, 4294901760
        %v717 = vsub.f32 %v715, %v716
        %v718 = vand.u32 %v717, 4294901760
        %719 = vmatpush1.msra.mxu0 %v718
        %v720 = vand.u32 %v476, 4294901760
        %v721 = vsub.f32 %v476, %v720
        %v722 = vand.u32 %v721, 4294901760
        %v723 = vsub.f32 %v721, %v722
        %v724 = vand.u32 %v723, 4294901760
        %725 = vmatprep.subr.mxu0 %v724
        %v726 = vand.u32 %v475, 4294901760
        %v727 = vsub.f32 %v475, %v726
        %v728 = vand.u32 %v727, 4294901760
        %v729 = vsub.f32 %v727, %v728
        %v730 = vand.u32 %v729, 4294901760
        %731 = vmatpush1.msra.mxu0 %v730
        %v732 = vand.u32 %v474, 4294901760
        %v733 = vsub.f32 %v474, %v732
        %v734 = vand.u32 %v733, 4294901760
        %v735 = vsub.f32 %v733, %v734
        %v736 = vand.u32 %v735, 4294901760
        %737 = vmatprep.subr.mxu0 %v736
        %v738 = vand.u32 %v473, 4294901760
        %v739 = vsub.f32 %v473, %v738
        %v740 = vand.u32 %v739, 4294901760
        %v741 = vsub.f32 %v739, %v740
        %v742 = vand.u32 %v741, 4294901760
        %743 = vmatpush1.msra.mxu0 %v742
        %v744 = vand.u32 %v472, 4294901760
        %v745 = vsub.f32 %v472, %v744
        %v746 = vand.u32 %v745, 4294901760
        %v747 = vsub.f32 %v745, %v746
        %v748 = vand.u32 %v747, 4294901760
        %749 = vmatprep.subr.mxu0 %v748
        %v750 = vand.u32 %v471, 4294901760
        %v751 = vsub.f32 %v471, %v750
        %v752 = vand.u32 %v751, 4294901760
        %v753 = vsub.f32 %v751, %v752
        %v754 = vand.u32 %v753, 4294901760
        %755 = vmatpush1.msra.mxu0 %v754
        %v756 = vand.u32 %v470, 4294901760
        %v757 = vsub.f32 %v470, %v756
        %v758 = vand.u32 %v757, 4294901760
        %v759 = vsub.f32 %v757, %v758
        %v760 = vand.u32 %v759, 4294901760
        %761 = vmatprep.subr.mxu0 %v760
        %v762 = vand.u32 %v469, 4294901760
        %v763 = vsub.f32 %v469, %v762
        %v764 = vand.u32 %v763, 4294901760
        %v765 = vsub.f32 %v763, %v764
        %v766 = vand.u32 %v765, 4294901760
        %767 = vmatpush1.msra.mxu0 %v766
        %v768 = vand.u32 %v468, 4294901760
        %v769 = vsub.f32 %v468, %v768
        %v770 = vand.u32 %v769, 4294901760
        %v771 = vsub.f32 %v769, %v770
        %v772 = vand.u32 %v771, 4294901760
        %773 = vmatprep.subr.mxu0 %v772
        %v774 = vand.u32 %v467, 4294901760
        %v775 = vsub.f32 %v467, %v774
        %v776 = vand.u32 %v775, 4294901760
        %v777 = vsub.f32 %v775, %v776
        %v778 = vand.u32 %v777, 4294901760
        %779 = vmatpush1.msra.mxu0 %v778
        %v780 = vand.u32 %v466, 4294901760
        %v781 = vsub.f32 %v466, %v780
        %v782 = vand.u32 %v781, 4294901760
        %v783 = vsub.f32 %v781, %v782
        %v784 = vand.u32 %v783, 4294901760
        %785 = vmatprep.subr.mxu0 %v784
        %v786 = vand.u32 %v465, 4294901760
        %v787 = vsub.f32 %v465, %v786
        %v788 = vand.u32 %v787, 4294901760
        %v789 = vsub.f32 %v787, %v788
        %v790 = vand.u32 %v789, 4294901760
        %791 = vmatpush1.msra.mxu0 %v790
        %v792 = vand.u32 %v464, 4294901760
        %v793 = vsub.f32 %v464, %v792
        %v794 = vand.u32 %v793, 4294901760
        %v795 = vsub.f32 %v793, %v794
        %v796 = vand.u32 %v795, 4294901760
        %797 = vmatprep.subr.mxu0 %v796
        %v798 = vand.u32 %v463, 4294901760
        %v799 = vsub.f32 %v463, %v798
        %v800 = vand.u32 %v799, 4294901760
        %v801 = vsub.f32 %v799, %v800
        %v802 = vand.u32 %v801, 4294901760
        %803 = vmatpush1.msra.mxu0 %v802
        %v804 = vand.u32 %v462, 4294901760
        %v805 = vsub.f32 %v462, %v804
        %v806 = vand.u32 %v805, 4294901760
        %v807 = vsub.f32 %v805, %v806
        %v808 = vand.u32 %v807, 4294901760
        %809 = vmatprep.subr.mxu0 %v808
        %v810 = vand.u32 %v461, 4294901760
        %v811 = vsub.f32 %v461, %v810
        %v812 = vand.u32 %v811, 4294901760
        %v813 = vsub.f32 %v811, %v812
        %v814 = vand.u32 %v813, 4294901760
        %815 = vmatpush1.msra.mxu0 %v814
        %v816 = vand.u32 %v460, 4294901760
        %v817 = vsub.f32 %v460, %v816
        %v818 = vand.u32 %v817, 4294901760
        %v819 = vsub.f32 %v817, %v818
        %v820 = vand.u32 %v819, 4294901760
        %821 = vmatprep.subr.mxu0 %v820
        %v822 = vand.u32 %v459, 4294901760
        %v823 = vsub.f32 %v459, %v822
        %v824 = vand.u32 %v823, 4294901760
        %v825 = vsub.f32 %v823, %v824
        %v826 = vand.u32 %v825, 4294901760
        %827 = vmatpush1.msra.mxu0 %v826
        %v828 = vand.u32 %v458, 4294901760
        %v829 = vsub.f32 %v458, %v828
        %v830 = vand.u32 %v829, 4294901760
        %v831 = vsub.f32 %v829, %v830
        %v832 = vand.u32 %v831, 4294901760
        %833 = vmatprep.subr.mxu0 %v832
        %v834 = vand.u32 %v457, 4294901760
        %v835 = vsub.f32 %v457, %v834
        %v836 = vand.u32 %v835, 4294901760
        %v837 = vsub.f32 %v835, %v836
        %v838 = vand.u32 %v837, 4294901760
        %839 = vmatpush1.msra.mxu0 %v838
        %v840 = vand.u32 %v456, 4294901760
        %v841 = vsub.f32 %v456, %v840
        %v842 = vand.u32 %v841, 4294901760
        %v843 = vsub.f32 %v841, %v842
        %v844 = vand.u32 %v843, 4294901760
        %845 = vmatprep.subr.mxu0 %v844
        %v846 = vand.u32 %v455, 4294901760
        %v847 = vsub.f32 %v455, %v846
        %v848 = vand.u32 %v847, 4294901760
        %v849 = vsub.f32 %v847, %v848
        %v850 = vand.u32 %v849, 4294901760
        %851 = vmatpush1.msra.mxu0 %v850
        %v852 = vand.u32 %v454, 4294901760
        %v853 = vsub.f32 %v454, %v852
        %v854 = vand.u32 %v853, 4294901760
        %v855 = vsub.f32 %v853, %v854
        %v856 = vand.u32 %v855, 4294901760
        %857 = vmatprep.subr.mxu0 %v856
        %v858 = vand.u32 %v453, 4294901760
        %v859 = vsub.f32 %v453, %v858
        %v860 = vand.u32 %v859, 4294901760
        %v861 = vsub.f32 %v859, %v860
        %v862 = vand.u32 %v861, 4294901760
        %863 = vmatpush1.msra.mxu0 %v862
        %v864 = vand.u32 %v452, 4294901760
        %v865 = vsub.f32 %v452, %v864
        %v866 = vand.u32 %v865, 4294901760
        %v867 = vsub.f32 %v865, %v866
        %v868 = vand.u32 %v867, 4294901760
        %869 = vmatprep.subr.mxu0 %v868
        %v870 = vand.u32 %v451, 4294901760
        %v871 = vsub.f32 %v451, %v870
        %v872 = vand.u32 %v871, 4294901760
        %v873 = vsub.f32 %v871, %v872
        %v874 = vand.u32 %v873, 4294901760
        %875 = vmatpush1.msra.mxu0 %v874
        %v876 = vand.u32 %v450, 4294901760
        %v877 = vsub.f32 %v450, %v876
        %v878 = vand.u32 %v877, 4294901760
        %v879 = vsub.f32 %v877, %v878
        %v880 = vand.u32 %v879, 4294901760
        %881 = vmatprep.subr.mxu0 %v880
        %v882 = vand.u32 %v449, 4294901760
        %v883 = vsub.f32 %v449, %v882
        %v884 = vand.u32 %v883, 4294901760
        %v885 = vsub.f32 %v883, %v884
        %v886 = vand.u32 %v885, 4294901760
        %887 = vmatpush1.msra.mxu0 %v886
        %v888 = vand.u32 %v448, 4294901760
        %v889 = vsub.f32 %v448, %v888
        %v890 = vand.u32 %v889, 4294901760
        %v891 = vsub.f32 %v889, %v890
        %v892 = vand.u32 %v891, 4294901760
        %893 = vmatprep.subr.mxu0 %v892
        %v894 = vand.u32 %v447, 4294901760
        %v895 = vsub.f32 %v447, %v894
        %v896 = vand.u32 %v895, 4294901760
        %v897 = vsub.f32 %v895, %v896
        %v898 = vand.u32 %v897, 4294901760
        %899 = vmatpush1.msra.mxu0 %v898
        %900 = vmatprep.subr.mxu0 0.0
        %901 = vmatpush2.msra.mxu0 0.0
        %902 = vmatprep.subr.mxu0 0.0
        %903 = vmatpush2.msra.mxu0 0.0
        %904 = vmatprep.subr.mxu0 0.0
        %905 = vmatpush2.msra.mxu0 0.0
        %906 = vmatprep.subr.mxu0 0.0
        %907 = vmatpush2.msra.mxu0 0.0
        %908 = vmatprep.subr.mxu0 0.0
        %909 = vmatpush2.msra.mxu0 0.0
        %910 = vmatprep.subr.mxu0 0.0
        %911 = vmatpush2.msra.mxu0 0.0
        %912 = vmatprep.subr.mxu0 0.0
        %913 = vmatpush2.msra.mxu0 0.0
        %914 = vmatprep.subr.mxu0 0.0
        %915 = vmatpush2.msra.mxu0 0.0
        %916 = vmatprep.subr.mxu0 0.0
        %917 = vmatpush2.msra.mxu0 0.0
        %918 = vmatprep.subr.mxu0 0.0
        %919 = vmatpush2.msra.mxu0 0.0
        %920 = vmatprep.subr.mxu0 0.0
        %921 = vmatpush2.msra.mxu0 0.0
        %922 = vmatprep.subr.mxu0 0.0
        %923 = vmatpush2.msra.mxu0 0.0
        %924 = vmatprep.subr.mxu0 0.0
        %925 = vmatpush2.msra.mxu0 0.0
        %926 = vmatprep.subr.mxu0 0.0
        %927 = vmatpush2.msra.mxu0 0.0
        %928 = vmatprep.subr.mxu0 0.0
        %929 = vmatpush2.msra.mxu0 0.0
        %930 = vmatprep.subr.mxu0 0.0
        %931 = vmatpush2.msra.mxu0 0.0
        %932 = vmatprep.mubr.f32.mxu0 0.0
        %v933 = vand.u32 %v439, 4294901760
        %934 = vmatmul.mubr.f32.gmra.mxu0 %v933
        %v935 = vpop.f32.mrf.mxu0
        %v936 = vadd.f32 %v627, %v935
        %v937 = vpop.f32.mrf.mxu0
        %v938 = vadd.f32 %v629, %v937
        %939 = vmatprep.mubr.f32.mxu0 0.0
        %v940 = vand.u32 %v440, 4294901760
        %941 = vmatmul.mubr.f32.gmra.mxu0 %v940
        %v942 = vpop.f32.mrf.mxu0
        %v943 = vadd.f32 %v638, %v942
        %v944 = vpop.f32.mrf.mxu0
        %v945 = vadd.f32 %v640, %v944
        %946 = vmatprep.mubr.f32.mxu0 0.0
        %v947 = vand.u32 %v441, 4294901760
        %948 = vmatmul.mubr.f32.gmra.mxu0 %v947
        %v949 = vpop.f32.mrf.mxu0
        %v950 = vadd.f32 %v649, %v949
        %v951 = vpop.f32.mrf.mxu0
        %v952 = vadd.f32 %v651, %v951
        %953 = vmatprep.mubr.f32.mxu0 0.0
        %v954 = vand.u32 %v442, 4294901760
        %955 = vmatmul.mubr.f32.gmra.mxu0 %v954
        %v956 = vpop.f32.mrf.mxu0
        %v957 = vadd.f32 %v660, %v956
        %v958 = vpop.f32.mrf.mxu0
        %v959 = vadd.f32 %v662, %v958
        %960 = vmatprep.mubr.f32.mxu0 0.0
        %v961 = vand.u32 %v443, 4294901760
        %962 = vmatmul.mubr.f32.gmra.mxu0 %v961
        %v963 = vpop.f32.mrf.mxu0
        %v964 = vadd.f32 %v671, %v963
        %v965 = vpop.f32.mrf.mxu0
        %v966 = vadd.f32 %v673, %v965
        %967 = vmatprep.mubr.f32.mxu0 0.0
        %v968 = vand.u32 %v444, 4294901760
        %969 = vmatmul.mubr.f32.gmra.mxu0 %v968
        %v970 = vpop.f32.mrf.mxu0
        %v971 = vadd.f32 %v682, %v970
        %v972 = vpop.f32.mrf.mxu0
        %v973 = vadd.f32 %v684, %v972
        %974 = vmatprep.mubr.f32.mxu0 0.0
        %v975 = vand.u32 %v445, 4294901760
        %976 = vmatmul.mubr.f32.gmra.mxu0 %v975
        %v977 = vpop.f32.mrf.mxu0
        %v978 = vadd.f32 %v693, %v977
        %v979 = vpop.f32.mrf.mxu0
        %v980 = vadd.f32 %v695, %v979
        %981 = vmatprep.mubr.f32.mxu0 0.0
        %v982 = vand.u32 %v446, 4294901760
        %983 = vmatmul.mubr.f32.gmra.mxu0 %v982
        %v984 = vpop.f32.mrf.mxu0
        %v985 = vadd.f32 %v704, %v984
        %v986 = vpop.f32.mrf.mxu0
        %v987 = vadd.f32 %v706, %v986
        %988 = vdwg.mxu0
        %v989 = vand.u32 %v478, 4294901760
        %v990 = vsub.f32 %v478, %v989
        %991 = vmatprep.subr.mxu0 %v990
        %v992 = vand.u32 %v477, 4294901760
        %v993 = vsub.f32 %v477, %v992
        %994 = vmatpush1.msra.mxu0 %v993
        %v995 = vand.u32 %v476, 4294901760
        %v996 = vsub.f32 %v476, %v995
        %997 = vmatprep.subr.mxu0 %v996
        %v998 = vand.u32 %v475, 4294901760
        %v999 = vsub.f32 %v475, %v998
        %1000 = vmatpush1.msra.mxu0 %v999
        %v1001 = vand.u32 %v474, 4294901760
        %v1002 = vsub.f32 %v474, %v1001
        %1003 = vmatprep.subr.mxu0 %v1002
        %v1004 = vand.u32 %v473, 4294901760
        %v1005 = vsub.f32 %v473, %v1004
        %1006 = vmatpush1.msra.mxu0 %v1005
        %v1007 = vand.u32 %v472, 4294901760
        %v1008 = vsub.f32 %v472, %v1007
        %1009 = vmatprep.subr.mxu0 %v1008
        %v1010 = vand.u32 %v471, 4294901760
        %v1011 = vsub.f32 %v471, %v1010
        %1012 = vmatpush1.msra.mxu0 %v1011
        %v1013 = vand.u32 %v470, 4294901760
        %v1014 = vsub.f32 %v470, %v1013
        %1015 = vmatprep.subr.mxu0 %v1014
        %v1016 = vand.u32 %v469, 4294901760
        %v1017 = vsub.f32 %v469, %v1016
        %1018 = vmatpush1.msra.mxu0 %v1017
        %v1019 = vand.u32 %v468, 4294901760
        %v1020 = vsub.f32 %v468, %v1019
        %1021 = vmatprep.subr.mxu0 %v1020
        %v1022 = vand.u32 %v467, 4294901760
        %v1023 = vsub.f32 %v467, %v1022
        %1024 = vmatpush1.msra.mxu0 %v1023
        %v1025 = vand.u32 %v466, 4294901760
        %v1026 = vsub.f32 %v466, %v1025
        %1027 = vmatprep.subr.mxu0 %v1026
        %v1028 = vand.u32 %v465, 4294901760
        %v1029 = vsub.f32 %v465, %v1028
        %1030 = vmatpush1.msra.mxu0 %v1029
        %v1031 = vand.u32 %v464, 4294901760
        %v1032 = vsub.f32 %v464, %v1031
        %1033 = vmatprep.subr.mxu0 %v1032
        %v1034 = vand.u32 %v463, 4294901760
        %v1035 = vsub.f32 %v463, %v1034
        %1036 = vmatpush1.msra.mxu0 %v1035
        %v1037 = vand.u32 %v462, 4294901760
        %v1038 = vsub.f32 %v462, %v1037
        %1039 = vmatprep.subr.mxu0 %v1038
        %v1040 = vand.u32 %v461, 4294901760
        %v1041 = vsub.f32 %v461, %v1040
        %1042 = vmatpush1.msra.mxu0 %v1041
        %v1043 = vand.u32 %v460, 4294901760
        %v1044 = vsub.f32 %v460, %v1043
        %1045 = vmatprep.subr.mxu0 %v1044
        %v1046 = vand.u32 %v459, 4294901760
        %v1047 = vsub.f32 %v459, %v1046
        %1048 = vmatpush1.msra.mxu0 %v1047
        %v1049 = vand.u32 %v458, 4294901760
        %v1050 = vsub.f32 %v458, %v1049
        %1051 = vmatprep.subr.mxu0 %v1050
        %v1052 = vand.u32 %v457, 4294901760
        %v1053 = vsub.f32 %v457, %v1052
        %1054 = vmatpush1.msra.mxu0 %v1053
        %v1055 = vand.u32 %v456, 4294901760
        %v1056 = vsub.f32 %v456, %v1055
        %1057 = vmatprep.subr.mxu0 %v1056
        %v1058 = vand.u32 %v455, 4294901760
        %v1059 = vsub.f32 %v455, %v1058
        %1060 = vmatpush1.msra.mxu0 %v1059
        %v1061 = vand.u32 %v454, 4294901760
        %v1062 = vsub.f32 %v454, %v1061
        %1063 = vmatprep.subr.mxu0 %v1062
        %v1064 = vand.u32 %v453, 4294901760
        %v1065 = vsub.f32 %v453, %v1064
        %1066 = vmatpush1.msra.mxu0 %v1065
        %v1067 = vand.u32 %v452, 4294901760
        %v1068 = vsub.f32 %v452, %v1067
        %1069 = vmatprep.subr.mxu0 %v1068
        %v1070 = vand.u32 %v451, 4294901760
        %v1071 = vsub.f32 %v451, %v1070
        %1072 = vmatpush1.msra.mxu0 %v1071
        %v1073 = vand.u32 %v450, 4294901760
        %v1074 = vsub.f32 %v450, %v1073
        %1075 = vmatprep.subr.mxu0 %v1074
        %v1076 = vand.u32 %v449, 4294901760
        %v1077 = vsub.f32 %v449, %v1076
        %1078 = vmatpush1.msra.mxu0 %v1077
        %v1079 = vand.u32 %v448, 4294901760
        %v1080 = vsub.f32 %v448, %v1079
        %1081 = vmatprep.subr.mxu0 %v1080
        %v1082 = vand.u32 %v447, 4294901760
        %v1083 = vsub.f32 %v447, %v1082
        %1084 = vmatpush1.msra.mxu0 %v1083
        %1085 = vmatprep.subr.mxu0 0.0
        %1086 = vmatpush2.msra.mxu0 0.0
        %1087 = vmatprep.subr.mxu0 0.0
        %1088 = vmatpush2.msra.mxu0 0.0
        %1089 = vmatprep.subr.mxu0 0.0
        %1090 = vmatpush2.msra.mxu0 0.0
        %1091 = vmatprep.subr.mxu0 0.0
        %1092 = vmatpush2.msra.mxu0 0.0
        %1093 = vmatprep.subr.mxu0 0.0
        %1094 = vmatpush2.msra.mxu0 0.0
        %1095 = vmatprep.subr.mxu0 0.0
        %1096 = vmatpush2.msra.mxu0 0.0
        %1097 = vmatprep.subr.mxu0 0.0
        %1098 = vmatpush2.msra.mxu0 0.0
        %1099 = vmatprep.subr.mxu0 0.0
        %1100 = vmatpush2.msra.mxu0 0.0
        %1101 = vmatprep.subr.mxu0 0.0
        %1102 = vmatpush2.msra.mxu0 0.0
        %1103 = vmatprep.subr.mxu0 0.0
        %1104 = vmatpush2.msra.mxu0 0.0
        %1105 = vmatprep.subr.mxu0 0.0
        %1106 = vmatpush2.msra.mxu0 0.0
        %1107 = vmatprep.subr.mxu0 0.0
        %1108 = vmatpush2.msra.mxu0 0.0
        %1109 = vmatprep.subr.mxu0 0.0
        %1110 = vmatpush2.msra.mxu0 0.0
        %1111 = vmatprep.subr.mxu0 0.0
        %1112 = vmatpush2.msra.mxu0 0.0
        %1113 = vmatprep.subr.mxu0 0.0
        %1114 = vmatpush2.msra.mxu0 0.0
        %1115 = vmatprep.subr.mxu0 0.0
        %1116 = vmatpush2.msra.mxu0 0.0
        %1117 = vmatprep.mubr.f32.mxu0 0.0
        %v1118 = vand.u32 %v439, 4294901760
        %v1119 = vsub.f32 %v439, %v1118
        %1120 = vmatmul.mubr.f32.gmra.mxu0 %v1119
        %v1121 = vpop.f32.mrf.mxu0
        %v1122 = vadd.f32 %v936, %v1121
        %v1123 = vpop.f32.mrf.mxu0
        %v1124 = vadd.f32 %v938, %v1123
        %1125 = vmatprep.mubr.f32.mxu0 0.0
        %v1126 = vand.u32 %v440, 4294901760
        %v1127 = vsub.f32 %v440, %v1126
        %1128 = vmatmul.mubr.f32.gmra.mxu0 %v1127
        %v1129 = vpop.f32.mrf.mxu0
        %v1130 = vadd.f32 %v943, %v1129
        %v1131 = vpop.f32.mrf.mxu0
        %v1132 = vadd.f32 %v945, %v1131
        %1133 = vmatprep.mubr.f32.mxu0 0.0
        %v1134 = vand.u32 %v441, 4294901760
        %v1135 = vsub.f32 %v441, %v1134
        %1136 = vmatmul.mubr.f32.gmra.mxu0 %v1135
        %v1137 = vpop.f32.mrf.mxu0
        %v1138 = vadd.f32 %v950, %v1137
        %v1139 = vpop.f32.mrf.mxu0
        %v1140 = vadd.f32 %v952, %v1139
        %1141 = vmatprep.mubr.f32.mxu0 0.0
        %v1142 = vand.u32 %v442, 4294901760
        %v1143 = vsub.f32 %v442, %v1142
        %1144 = vmatmul.mubr.f32.gmra.mxu0 %v1143
        %v1145 = vpop.f32.mrf.mxu0
        %v1146 = vadd.f32 %v957, %v1145
        %v1147 = vpop.f32.mrf.mxu0
        %v1148 = vadd.f32 %v959, %v1147
        %1149 = vmatprep.mubr.f32.mxu0 0.0
        %v1150 = vand.u32 %v443, 4294901760
        %v1151 = vsub.f32 %v443, %v1150
        %1152 = vmatmul.mubr.f32.gmra.mxu0 %v1151
        %v1153 = vpop.f32.mrf.mxu0
        %v1154 = vadd.f32 %v964, %v1153
        %v1155 = vpop.f32.mrf.mxu0
        %v1156 = vadd.f32 %v966, %v1155
        %1157 = vmatprep.mubr.f32.mxu0 0.0
        %v1158 = vand.u32 %v444, 4294901760
        %v1159 = vsub.f32 %v444, %v1158
        %1160 = vmatmul.mubr.f32.gmra.mxu0 %v1159
        %v1161 = vpop.f32.mrf.mxu0
        %v1162 = vadd.f32 %v971, %v1161
        %v1163 = vpop.f32.mrf.mxu0
        %v1164 = vadd.f32 %v973, %v1163
        %1165 = vmatprep.mubr.f32.mxu0 0.0
        %v1166 = vand.u32 %v445, 4294901760
        %v1167 = vsub.f32 %v445, %v1166
        %1168 = vmatmul.mubr.f32.gmra.mxu0 %v1167
        %v1169 = vpop.f32.mrf.mxu0
        %v1170 = vadd.f32 %v978, %v1169
        %v1171 = vpop.f32.mrf.mxu0
        %v1172 = vadd.f32 %v980, %v1171
        %1173 = vmatprep.mubr.f32.mxu0 0.0
        %v1174 = vand.u32 %v446, 4294901760
        %v1175 = vsub.f32 %v446, %v1174
        %1176 = vmatmul.mubr.f32.gmra.mxu0 %v1175
        %v1177 = vpop.f32.mrf.mxu0
        %v1178 = vadd.f32 %v985, %v1177
        %v1179 = vpop.f32.mrf.mxu0
        %v1180 = vadd.f32 %v987, %v1179
        %1181 = vdwg.mxu0
        %v1182 = vand.u32 %v478, 4294901760
        %1183 = vmatprep.subr.mxu0 %v1182
        %v1184 = vand.u32 %v477, 4294901760
        %1185 = vmatpush1.msra.mxu0 %v1184
        %v1186 = vand.u32 %v476, 4294901760
        %1187 = vmatprep.subr.mxu0 %v1186
        %v1188 = vand.u32 %v475, 4294901760
        %1189 = vmatpush1.msra.mxu0 %v1188
        %v1190 = vand.u32 %v474, 4294901760
        %1191 = vmatprep.subr.mxu0 %v1190
        %v1192 = vand.u32 %v473, 4294901760
        %1193 = vmatpush1.msra.mxu0 %v1192
        %v1194 = vand.u32 %v472, 4294901760
        %1195 = vmatprep.subr.mxu0 %v1194
        %v1196 = vand.u32 %v471, 4294901760
        %1197 = vmatpush1.msra.mxu0 %v1196
        %v1198 = vand.u32 %v470, 4294901760
        %1199 = vmatprep.subr.mxu0 %v1198
        %v1200 = vand.u32 %v469, 4294901760
        %1201 = vmatpush1.msra.mxu0 %v1200
        %v1202 = vand.u32 %v468, 4294901760
        %1203 = vmatprep.subr.mxu0 %v1202
        %v1204 = vand.u32 %v467, 4294901760
        %1205 = vmatpush1.msra.mxu0 %v1204
        %v1206 = vand.u32 %v466, 4294901760
        %1207 = vmatprep.subr.mxu0 %v1206
        %v1208 = vand.u32 %v465, 4294901760
        %1209 = vmatpush1.msra.mxu0 %v1208
        %v1210 = vand.u32 %v464, 4294901760
        %1211 = vmatprep.subr.mxu0 %v1210
        %v1212 = vand.u32 %v463, 4294901760
        %1213 = vmatpush1.msra.mxu0 %v1212
        %v1214 = vand.u32 %v462, 4294901760
        %1215 = vmatprep.subr.mxu0 %v1214
        %v1216 = vand.u32 %v461, 4294901760
        %1217 = vmatpush1.msra.mxu0 %v1216
        %v1218 = vand.u32 %v460, 4294901760
        %1219 = vmatprep.subr.mxu0 %v1218
        %v1220 = vand.u32 %v459, 4294901760
        %1221 = vmatpush1.msra.mxu0 %v1220
        %v1222 = vand.u32 %v458, 4294901760
        %1223 = vmatprep.subr.mxu0 %v1222
        %v1224 = vand.u32 %v457, 4294901760
        %1225 = vmatpush1.msra.mxu0 %v1224
        %v1226 = vand.u32 %v456, 4294901760
        %1227 = vmatprep.subr.mxu0 %v1226
        %v1228 = vand.u32 %v455, 4294901760
        %1229 = vmatpush1.msra.mxu0 %v1228
        %v1230 = vand.u32 %v454, 4294901760
        %1231 = vmatprep.subr.mxu0 %v1230
        %v1232 = vand.u32 %v453, 4294901760
        %1233 = vmatpush1.msra.mxu0 %v1232
        %v1234 = vand.u32 %v452, 4294901760
        %1235 = vmatprep.subr.mxu0 %v1234
        %v1236 = vand.u32 %v451, 4294901760
        %1237 = vmatpush1.msra.mxu0 %v1236
        %v1238 = vand.u32 %v450, 4294901760
        %1239 = vmatprep.subr.mxu0 %v1238
        %v1240 = vand.u32 %v449, 4294901760
        %1241 = vmatpush1.msra.mxu0 %v1240
        %v1242 = vand.u32 %v448, 4294901760
        %1243 = vmatprep.subr.mxu0 %v1242
        %v1244 = vand.u32 %v447, 4294901760
        %1245 = vmatpush1.msra.mxu0 %v1244
        %1246 = vmatprep.subr.mxu0 0.0
        %1247 = vmatpush2.msra.mxu0 0.0
        %1248 = vmatprep.subr.mxu0 0.0
        %1249 = vmatpush2.msra.mxu0 0.0
        %1250 = vmatprep.subr.mxu0 0.0
        %1251 = vmatpush2.msra.mxu0 0.0
        %1252 = vmatprep.subr.mxu0 0.0
        %1253 = vmatpush2.msra.mxu0 0.0
        %1254 = vmatprep.subr.mxu0 0.0
        %1255 = vmatpush2.msra.mxu0 0.0
        %1256 = vmatprep.subr.mxu0 0.0
        %1257 = vmatpush2.msra.mxu0 0.0
        %1258 = vmatprep.subr.mxu0 0.0
        %1259 = vmatpush2.msra.mxu0 0.0
        %1260 = vmatprep.subr.mxu0 0.0
        %1261 = vmatpush2.msra.mxu0 0.0
        %1262 = vmatprep.subr.mxu0 0.0
        %1263 = vmatpush2.msra.mxu0 0.0
        %1264 = vmatprep.subr.mxu0 0.0
        %1265 = vmatpush2.msra.mxu0 0.0
        %1266 = vmatprep.subr.mxu0 0.0
        %1267 = vmatpush2.msra.mxu0 0.0
        %1268 = vmatprep.subr.mxu0 0.0
        %1269 = vmatpush2.msra.mxu0 0.0
        %1270 = vmatprep.subr.mxu0 0.0
        %1271 = vmatpush2.msra.mxu0 0.0
        %1272 = vmatprep.subr.mxu0 0.0
        %1273 = vmatpush2.msra.mxu0 0.0
        %1274 = vmatprep.subr.mxu0 0.0
        %1275 = vmatpush2.msra.mxu0 0.0
        %1276 = vmatprep.subr.mxu0 0.0
        %1277 = vmatpush2.msra.mxu0 0.0
        %1278 = vmatprep.mubr.f32.mxu0 0.0
        %v1279 = vand.u32 %v439, 4294901760
        %v1280 = vsub.f32 %v439, %v1279
        %v1281 = vand.u32 %v1280, 4294901760
        %1282 = vmatmul.mubr.f32.gmra.mxu0 %v1281
        %v1283 = vpop.f32.mrf.mxu0
        %v1284 = vadd.f32 %v1122, %v1283
        %v1285 = vpop.f32.mrf.mxu0
        %v1286 = vadd.f32 %v1124, %v1285
        %1287 = vmatprep.mubr.f32.mxu0 0.0
        %v1288 = vand.u32 %v440, 4294901760
        %v1289 = vsub.f32 %v440, %v1288
        %v1290 = vand.u32 %v1289, 4294901760
        %1291 = vmatmul.mubr.f32.gmra.mxu0 %v1290
        %v1292 = vpop.f32.mrf.mxu0
        %v1293 = vadd.f32 %v1130, %v1292
        %v1294 = vpop.f32.mrf.mxu0
        %v1295 = vadd.f32 %v1132, %v1294
        %1296 = vmatprep.mubr.f32.mxu0 0.0
        %v1297 = vand.u32 %v441, 4294901760
        %v1298 = vsub.f32 %v441, %v1297
        %v1299 = vand.u32 %v1298, 4294901760
        %1300 = vmatmul.mubr.f32.gmra.mxu0 %v1299
        %v1301 = vpop.f32.mrf.mxu0
        %v1302 = vadd.f32 %v1138, %v1301
        %v1303 = vpop.f32.mrf.mxu0
        %v1304 = vadd.f32 %v1140, %v1303
        %1305 = vmatprep.mubr.f32.mxu0 0.0
        %v1306 = vand.u32 %v442, 4294901760
        %v1307 = vsub.f32 %v442, %v1306
        %v1308 = vand.u32 %v1307, 4294901760
        %1309 = vmatmul.mubr.f32.gmra.mxu0 %v1308
        %v1310 = vpop.f32.mrf.mxu0
        %v1311 = vadd.f32 %v1146, %v1310
        %v1312 = vpop.f32.mrf.mxu0
        %v1313 = vadd.f32 %v1148, %v1312
        %1314 = vmatprep.mubr.f32.mxu0 0.0
        %v1315 = vand.u32 %v443, 4294901760
        %v1316 = vsub.f32 %v443, %v1315
        %v1317 = vand.u32 %v1316, 4294901760
        %1318 = vmatmul.mubr.f32.gmra.mxu0 %v1317
        %v1319 = vpop.f32.mrf.mxu0
        %v1320 = vadd.f32 %v1154, %v1319
        %v1321 = vpop.f32.mrf.mxu0
        %v1322 = vadd.f32 %v1156, %v1321
        %1323 = vmatprep.mubr.f32.mxu0 0.0
        %v1324 = vand.u32 %v444, 4294901760
        %v1325 = vsub.f32 %v444, %v1324
        %v1326 = vand.u32 %v1325, 4294901760
        %1327 = vmatmul.mubr.f32.gmra.mxu0 %v1326
        %v1328 = vpop.f32.mrf.mxu0
        %v1329 = vadd.f32 %v1162, %v1328
        %v1330 = vpop.f32.mrf.mxu0
        %v1331 = vadd.f32 %v1164, %v1330
        %1332 = vmatprep.mubr.f32.mxu0 0.0
        %v1333 = vand.u32 %v445, 4294901760
        %v1334 = vsub.f32 %v445, %v1333
        %v1335 = vand.u32 %v1334, 4294901760
        %1336 = vmatmul.mubr.f32.gmra.mxu0 %v1335
        %v1337 = vpop.f32.mrf.mxu0
        %v1338 = vadd.f32 %v1170, %v1337
        %v1339 = vpop.f32.mrf.mxu0
        %v1340 = vadd.f32 %v1172, %v1339
        %1341 = vmatprep.mubr.f32.mxu0 0.0
        %v1342 = vand.u32 %v446, 4294901760
        %v1343 = vsub.f32 %v446, %v1342
        %v1344 = vand.u32 %v1343, 4294901760
        %1345 = vmatmul.mubr.f32.gmra.mxu0 %v1344
        %v1346 = vpop.f32.mrf.mxu0
        %v1347 = vadd.f32 %v1178, %v1346
        %v1348 = vpop.f32.mrf.mxu0
        %v1349 = vadd.f32 %v1180, %v1348
        %1350 = vdwg.mxu0
        %v1351 = vand.u32 %v478, 4294901760
        %v1352 = vsub.f32 %v478, %v1351
        %v1353 = vand.u32 %v1352, 4294901760
        %1354 = vmatprep.subr.mxu0 %v1353
        %v1355 = vand.u32 %v477, 4294901760
        %v1356 = vsub.f32 %v477, %v1355
        %v1357 = vand.u32 %v1356, 4294901760
        %1358 = vmatpush1.msra.mxu0 %v1357
        %v1359 = vand.u32 %v476, 4294901760
        %v1360 = vsub.f32 %v476, %v1359
        %v1361 = vand.u32 %v1360, 4294901760
        %1362 = vmatprep.subr.mxu0 %v1361
        %v1363 = vand.u32 %v475, 4294901760
        %v1364 = vsub.f32 %v475, %v1363
        %v1365 = vand.u32 %v1364, 4294901760
        %1366 = vmatpush1.msra.mxu0 %v1365
        %v1367 = vand.u32 %v474, 4294901760
        %v1368 = vsub.f32 %v474, %v1367
        %v1369 = vand.u32 %v1368, 4294901760
        %1370 = vmatprep.subr.mxu0 %v1369
        %v1371 = vand.u32 %v473, 4294901760
        %v1372 = vsub.f32 %v473, %v1371
        %v1373 = vand.u32 %v1372, 4294901760
        %1374 = vmatpush1.msra.mxu0 %v1373
        %v1375 = vand.u32 %v472, 4294901760
        %v1376 = vsub.f32 %v472, %v1375
        %v1377 = vand.u32 %v1376, 4294901760
        %1378 = vmatprep.subr.mxu0 %v1377
        %v1379 = vand.u32 %v471, 4294901760
        %v1380 = vsub.f32 %v471, %v1379
        %v1381 = vand.u32 %v1380, 4294901760
        %1382 = vmatpush1.msra.mxu0 %v1381
        %v1383 = vand.u32 %v470, 4294901760
        %v1384 = vsub.f32 %v470, %v1383
        %v1385 = vand.u32 %v1384, 4294901760
        %1386 = vmatprep.subr.mxu0 %v1385
        %v1387 = vand.u32 %v469, 4294901760
        %v1388 = vsub.f32 %v469, %v1387
        %v1389 = vand.u32 %v1388, 4294901760
        %1390 = vmatpush1.msra.mxu0 %v1389
        %v1391 = vand.u32 %v468, 4294901760
        %v1392 = vsub.f32 %v468, %v1391
        %v1393 = vand.u32 %v1392, 4294901760
        %1394 = vmatprep.subr.mxu0 %v1393
        %v1395 = vand.u32 %v467, 4294901760
        %v1396 = vsub.f32 %v467, %v1395
        %v1397 = vand.u32 %v1396, 4294901760
        %1398 = vmatpush1.msra.mxu0 %v1397
        %v1399 = vand.u32 %v466, 4294901760
        %v1400 = vsub.f32 %v466, %v1399
        %v1401 = vand.u32 %v1400, 4294901760
        %1402 = vmatprep.subr.mxu0 %v1401
        %v1403 = vand.u32 %v465, 4294901760
        %v1404 = vsub.f32 %v465, %v1403
        %v1405 = vand.u32 %v1404, 4294901760
        %1406 = vmatpush1.msra.mxu0 %v1405
        %v1407 = vand.u32 %v464, 4294901760
        %v1408 = vsub.f32 %v464, %v1407
        %v1409 = vand.u32 %v1408, 4294901760
        %1410 = vmatprep.subr.mxu0 %v1409
        %v1411 = vand.u32 %v463, 4294901760
        %v1412 = vsub.f32 %v463, %v1411
        %v1413 = vand.u32 %v1412, 4294901760
        %1414 = vmatpush1.msra.mxu0 %v1413
        %v1415 = vand.u32 %v462, 4294901760
        %v1416 = vsub.f32 %v462, %v1415
        %v1417 = vand.u32 %v1416, 4294901760
        %1418 = vmatprep.subr.mxu0 %v1417
        %v1419 = vand.u32 %v461, 4294901760
        %v1420 = vsub.f32 %v461, %v1419
        %v1421 = vand.u32 %v1420, 4294901760
        %1422 = vmatpush1.msra.mxu0 %v1421
        %v1423 = vand.u32 %v460, 4294901760
        %v1424 = vsub.f32 %v460, %v1423
        %v1425 = vand.u32 %v1424, 4294901760
        %1426 = vmatprep.subr.mxu0 %v1425
        %v1427 = vand.u32 %v459, 4294901760
        %v1428 = vsub.f32 %v459, %v1427
        %v1429 = vand.u32 %v1428, 4294901760
        %1430 = vmatpush1.msra.mxu0 %v1429
        %v1431 = vand.u32 %v458, 4294901760
        %v1432 = vsub.f32 %v458, %v1431
        %v1433 = vand.u32 %v1432, 4294901760
        %1434 = vmatprep.subr.mxu0 %v1433
        %v1435 = vand.u32 %v457, 4294901760
        %v1436 = vsub.f32 %v457, %v1435
        %v1437 = vand.u32 %v1436, 4294901760
        %1438 = vmatpush1.msra.mxu0 %v1437
        %v1439 = vand.u32 %v456, 4294901760
        %v1440 = vsub.f32 %v456, %v1439
        %v1441 = vand.u32 %v1440, 4294901760
        %1442 = vmatprep.subr.mxu0 %v1441
        %v1443 = vand.u32 %v455, 4294901760
        %v1444 = vsub.f32 %v455, %v1443
        %v1445 = vand.u32 %v1444, 4294901760
        %1446 = vmatpush1.msra.mxu0 %v1445
        %v1447 = vand.u32 %v454, 4294901760
        %v1448 = vsub.f32 %v454, %v1447
        %v1449 = vand.u32 %v1448, 4294901760
        %1450 = vmatprep.subr.mxu0 %v1449
        %v1451 = vand.u32 %v453, 4294901760
        %v1452 = vsub.f32 %v453, %v1451
        %v1453 = vand.u32 %v1452, 4294901760
        %1454 = vmatpush1.msra.mxu0 %v1453
        %v1455 = vand.u32 %v452, 4294901760
        %v1456 = vsub.f32 %v452, %v1455
        %v1457 = vand.u32 %v1456, 4294901760
        %1458 = vmatprep.subr.mxu0 %v1457
        %v1459 = vand.u32 %v451, 4294901760
        %v1460 = vsub.f32 %v451, %v1459
        %v1461 = vand.u32 %v1460, 4294901760
        %1462 = vmatpush1.msra.mxu0 %v1461
        %v1463 = vand.u32 %v450, 4294901760
        %v1464 = vsub.f32 %v450, %v1463
        %v1465 = vand.u32 %v1464, 4294901760
        %1466 = vmatprep.subr.mxu0 %v1465
        %v1467 = vand.u32 %v449, 4294901760
        %v1468 = vsub.f32 %v449, %v1467
        %v1469 = vand.u32 %v1468, 4294901760
        %1470 = vmatpush1.msra.mxu0 %v1469
        %v1471 = vand.u32 %v448, 4294901760
        %v1472 = vsub.f32 %v448, %v1471
        %v1473 = vand.u32 %v1472, 4294901760
        %1474 = vmatprep.subr.mxu0 %v1473
        %v1475 = vand.u32 %v447, 4294901760
        %v1476 = vsub.f32 %v447, %v1475
        %v1477 = vand.u32 %v1476, 4294901760
        %1478 = vmatpush1.msra.mxu0 %v1477
        %1479 = vmatprep.subr.mxu0 0.0
        %1480 = vmatpush2.msra.mxu0 0.0
        %1481 = vmatprep.subr.mxu0 0.0
        %1482 = vmatpush2.msra.mxu0 0.0
        %1483 = vmatprep.subr.mxu0 0.0
        %1484 = vmatpush2.msra.mxu0 0.0
        %1485 = vmatprep.subr.mxu0 0.0
        %1486 = vmatpush2.msra.mxu0 0.0
        %1487 = vmatprep.subr.mxu0 0.0
        %1488 = vmatpush2.msra.mxu0 0.0
        %1489 = vmatprep.subr.mxu0 0.0
        %1490 = vmatpush2.msra.mxu0 0.0
        %1491 = vmatprep.subr.mxu0 0.0
        %1492 = vmatpush2.msra.mxu0 0.0
        %1493 = vmatprep.subr.mxu0 0.0
        %1494 = vmatpush2.msra.mxu0 0.0
        %1495 = vmatprep.subr.mxu0 0.0
        %1496 = vmatpush2.msra.mxu0 0.0
        %1497 = vmatprep.subr.mxu0 0.0
        %1498 = vmatpush2.msra.mxu0 0.0
        %1499 = vmatprep.subr.mxu0 0.0
        %1500 = vmatpush2.msra.mxu0 0.0
        %1501 = vmatprep.subr.mxu0 0.0
        %1502 = vmatpush2.msra.mxu0 0.0
        %1503 = vmatprep.subr.mxu0 0.0
        %1504 = vmatpush2.msra.mxu0 0.0
        %1505 = vmatprep.subr.mxu0 0.0
        %1506 = vmatpush2.msra.mxu0 0.0
        %1507 = vmatprep.subr.mxu0 0.0
        %1508 = vmatpush2.msra.mxu0 0.0
        %1509 = vmatprep.subr.mxu0 0.0
        %1510 = vmatpush2.msra.mxu0 0.0
        %1511 = vmatprep.mubr.f32.mxu0 0.0
        %v1512 = vand.u32 %v439, 4294901760
        %1513 = vmatmul.mubr.f32.gmra.mxu0 %v1512
        %v1514 = vpop.f32.mrf.mxu0
        %v1515 = vadd.f32 %v1284, %v1514
        %v1516 = vpop.f32.mrf.mxu0
        %v1517 = vadd.f32 %v1286, %v1516
        %1518 = vmatprep.mubr.f32.mxu0 0.0
        %v1519 = vand.u32 %v440, 4294901760
        %1520 = vmatmul.mubr.f32.gmra.mxu0 %v1519
        %v1521 = vpop.f32.mrf.mxu0
        %v1522 = vadd.f32 %v1293, %v1521
        %v1523 = vpop.f32.mrf.mxu0
        %v1524 = vadd.f32 %v1295, %v1523
        %1525 = vmatprep.mubr.f32.mxu0 0.0
        %v1526 = vand.u32 %v441, 4294901760
        %1527 = vmatmul.mubr.f32.gmra.mxu0 %v1526
        %v1528 = vpop.f32.mrf.mxu0
        %v1529 = vadd.f32 %v1302, %v1528
        %v1530 = vpop.f32.mrf.mxu0
        %v1531 = vadd.f32 %v1304, %v1530
        %1532 = vmatprep.mubr.f32.mxu0 0.0
        %v1533 = vand.u32 %v442, 4294901760
        %1534 = vmatmul.mubr.f32.gmra.mxu0 %v1533
        %v1535 = vpop.f32.mrf.mxu0
        %v1536 = vadd.f32 %v1311, %v1535
        %v1537 = vpop.f32.mrf.mxu0
        %v1538 = vadd.f32 %v1313, %v1537
        %1539 = vmatprep.mubr.f32.mxu0 0.0
        %v1540 = vand.u32 %v443, 4294901760
        %1541 = vmatmul.mubr.f32.gmra.mxu0 %v1540
        %v1542 = vpop.f32.mrf.mxu0
        %v1543 = vadd.f32 %v1320, %v1542
        %v1544 = vpop.f32.mrf.mxu0
        %v1545 = vadd.f32 %v1322, %v1544
        %1546 = vmatprep.mubr.f32.mxu0 0.0
        %v1547 = vand.u32 %v444, 4294901760
        %1548 = vmatmul.mubr.f32.gmra.mxu0 %v1547
        %v1549 = vpop.f32.mrf.mxu0
        %v1550 = vadd.f32 %v1329, %v1549
        %v1551 = vpop.f32.mrf.mxu0
        %v1552 = vadd.f32 %v1331, %v1551
        %1553 = vmatprep.mubr.f32.mxu0 0.0
        %v1554 = vand.u32 %v445, 4294901760
        %1555 = vmatmul.mubr.f32.gmra.mxu0 %v1554
        %v1556 = vpop.f32.mrf.mxu0
        %v1557 = vadd.f32 %v1338, %v1556
        %v1558 = vpop.f32.mrf.mxu0
        %v1559 = vadd.f32 %v1340, %v1558
        %1560 = vmatprep.mubr.f32.mxu0 0.0
        %v1561 = vand.u32 %v446, 4294901760
        %1562 = vmatmul.mubr.f32.gmra.mxu0 %v1561
        %v1563 = vpop.f32.mrf.mxu0
        %v1564 = vadd.f32 %v1347, %v1563
        %v1565 = vpop.f32.mrf.mxu0
        %v1566 = vadd.f32 %v1349, %v1565
        %1567 = vdwg.mxu0
        %v1568 = vand.u32 %v478, 4294901760
        %1569 = vmatprep.subr.mxu0 %v1568
        %v1570 = vand.u32 %v477, 4294901760
        %1571 = vmatpush1.msra.mxu0 %v1570
        %v1572 = vand.u32 %v476, 4294901760
        %1573 = vmatprep.subr.mxu0 %v1572
        %v1574 = vand.u32 %v475, 4294901760
        %1575 = vmatpush1.msra.mxu0 %v1574
        %v1576 = vand.u32 %v474, 4294901760
        %1577 = vmatprep.subr.mxu0 %v1576
        %v1578 = vand.u32 %v473, 4294901760
        %1579 = vmatpush1.msra.mxu0 %v1578
        %v1580 = vand.u32 %v472, 4294901760
        %1581 = vmatprep.subr.mxu0 %v1580
        %v1582 = vand.u32 %v471, 4294901760
        %1583 = vmatpush1.msra.mxu0 %v1582
        %v1584 = vand.u32 %v470, 4294901760
        %1585 = vmatprep.subr.mxu0 %v1584
        %v1586 = vand.u32 %v469, 4294901760
        %1587 = vmatpush1.msra.mxu0 %v1586
        %v1588 = vand.u32 %v468, 4294901760
        %1589 = vmatprep.subr.mxu0 %v1588
        %v1590 = vand.u32 %v467, 4294901760
        %1591 = vmatpush1.msra.mxu0 %v1590
        %v1592 = vand.u32 %v466, 4294901760
        %1593 = vmatprep.subr.mxu0 %v1592
        %v1594 = vand.u32 %v465, 4294901760
        %1595 = vmatpush1.msra.mxu0 %v1594
        %v1596 = vand.u32 %v464, 4294901760
        %1597 = vmatprep.subr.mxu0 %v1596
        %v1598 = vand.u32 %v463, 4294901760
        %1599 = vmatpush1.msra.mxu0 %v1598
        %v1600 = vand.u32 %v462, 4294901760
        %1601 = vmatprep.subr.mxu0 %v1600
        %v1602 = vand.u32 %v461, 4294901760
        %1603 = vmatpush1.msra.mxu0 %v1602
        %v1604 = vand.u32 %v460, 4294901760
        %1605 = vmatprep.subr.mxu0 %v1604
        %v1606 = vand.u32 %v459, 4294901760
        %1607 = vmatpush1.msra.mxu0 %v1606
        %v1608 = vand.u32 %v458, 4294901760
        %1609 = vmatprep.subr.mxu0 %v1608
        %v1610 = vand.u32 %v457, 4294901760
        %1611 = vmatpush1.msra.mxu0 %v1610
        %v1612 = vand.u32 %v456, 4294901760
        %1613 = vmatprep.subr.mxu0 %v1612
        %v1614 = vand.u32 %v455, 4294901760
        %1615 = vmatpush1.msra.mxu0 %v1614
        %v1616 = vand.u32 %v454, 4294901760
        %1617 = vmatprep.subr.mxu0 %v1616
        %v1618 = vand.u32 %v453, 4294901760
        %1619 = vmatpush1.msra.mxu0 %v1618
        %v1620 = vand.u32 %v452, 4294901760
        %1621 = vmatprep.subr.mxu0 %v1620
        %v1622 = vand.u32 %v451, 4294901760
        %1623 = vmatpush1.msra.mxu0 %v1622
        %v1624 = vand.u32 %v450, 4294901760
        %1625 = vmatprep.subr.mxu0 %v1624
        %v1626 = vand.u32 %v449, 4294901760
        %1627 = vmatpush1.msra.mxu0 %v1626
        %v1628 = vand.u32 %v448, 4294901760
        %1629 = vmatprep.subr.mxu0 %v1628
        %v1630 = vand.u32 %v447, 4294901760
        %1631 = vmatpush1.msra.mxu0 %v1630
        %1632 = vmatprep.subr.mxu0 0.0
        %1633 = vmatpush2.msra.mxu0 0.0
        %1634 = vmatprep.subr.mxu0 0.0
        %1635 = vmatpush2.msra.mxu0 0.0
        %1636 = vmatprep.subr.mxu0 0.0
        %1637 = vmatpush2.msra.mxu0 0.0
        %1638 = vmatprep.subr.mxu0 0.0
        %1639 = vmatpush2.msra.mxu0 0.0
        %1640 = vmatprep.subr.mxu0 0.0
        %1641 = vmatpush2.msra.mxu0 0.0
        %1642 = vmatprep.subr.mxu0 0.0
        %1643 = vmatpush2.msra.mxu0 0.0
        %1644 = vmatprep.subr.mxu0 0.0
        %1645 = vmatpush2.msra.mxu0 0.0
        %1646 = vmatprep.subr.mxu0 0.0
        %1647 = vmatpush2.msra.mxu0 0.0
        %1648 = vmatprep.subr.mxu0 0.0
        %1649 = vmatpush2.msra.mxu0 0.0
        %1650 = vmatprep.subr.mxu0 0.0
        %1651 = vmatpush2.msra.mxu0 0.0
        %1652 = vmatprep.subr.mxu0 0.0
        %1653 = vmatpush2.msra.mxu0 0.0
        %1654 = vmatprep.subr.mxu0 0.0
        %1655 = vmatpush2.msra.mxu0 0.0
        %1656 = vmatprep.subr.mxu0 0.0
        %1657 = vmatpush2.msra.mxu0 0.0
        %1658 = vmatprep.subr.mxu0 0.0
        %1659 = vmatpush2.msra.mxu0 0.0
        %1660 = vmatprep.subr.mxu0 0.0
        %1661 = vmatpush2.msra.mxu0 0.0
        %1662 = vmatprep.subr.mxu0 0.0
        %1663 = vmatpush2.msra.mxu0 0.0
        %1664 = vmatprep.mubr.f32.mxu0 0.0
        %v1665 = vand.u32 %v439, 4294901760
        %1666 = vmatmul.mubr.f32.gmra.mxu0 %v1665
        %v1667 = vpop.f32.mrf.mxu0
        %v1668 = vadd.f32 %v1515, %v1667
        %v1669 = vpop.f32.mrf.mxu0
        %v1670 = vadd.f32 %v1517, %v1669
        %1671 = vmatprep.mubr.f32.mxu0 0.0
        %v1672 = vand.u32 %v440, 4294901760
        %1673 = vmatmul.mubr.f32.gmra.mxu0 %v1672
        %v1674 = vpop.f32.mrf.mxu0
        %v1675 = vadd.f32 %v1522, %v1674
        %v1676 = vpop.f32.mrf.mxu0
        %v1677 = vadd.f32 %v1524, %v1676
        %1678 = vmatprep.mubr.f32.mxu0 0.0
        %v1679 = vand.u32 %v441, 4294901760
        %1680 = vmatmul.mubr.f32.gmra.mxu0 %v1679
        %v1681 = vpop.f32.mrf.mxu0
        %v1682 = vadd.f32 %v1529, %v1681
        %v1683 = vpop.f32.mrf.mxu0
        %v1684 = vadd.f32 %v1531, %v1683
        %1685 = vmatprep.mubr.f32.mxu0 0.0
        %v1686 = vand.u32 %v442, 4294901760
        %1687 = vmatmul.mubr.f32.gmra.mxu0 %v1686
        %v1688 = vpop.f32.mrf.mxu0
        %v1689 = vadd.f32 %v1536, %v1688
        %v1690 = vpop.f32.mrf.mxu0
        %v1691 = vadd.f32 %v1538, %v1690
        %1692 = vmatprep.mubr.f32.mxu0 0.0
        %v1693 = vand.u32 %v443, 4294901760
        %1694 = vmatmul.mubr.f32.gmra.mxu0 %v1693
        %v1695 = vpop.f32.mrf.mxu0
        %v1696 = vadd.f32 %v1543, %v1695
        %v1697 = vpop.f32.mrf.mxu0
        %v1698 = vadd.f32 %v1545, %v1697
        %1699 = vmatprep.mubr.f32.mxu0 0.0
        %v1700 = vand.u32 %v444, 4294901760
        %1701 = vmatmul.mubr.f32.gmra.mxu0 %v1700
        %v1702 = vpop.f32.mrf.mxu0
        %v1703 = vadd.f32 %v1550, %v1702
        %v1704 = vpop.f32.mrf.mxu0
        %v1705 = vadd.f32 %v1552, %v1704
        %1706 = vmatprep.mubr.f32.mxu0 0.0
        %v1707 = vand.u32 %v445, 4294901760
        %1708 = vmatmul.mubr.f32.gmra.mxu0 %v1707
        %v1709 = vpop.f32.mrf.mxu0
        %v1710 = vadd.f32 %v1557, %v1709
        %v1711 = vpop.f32.mrf.mxu0
        %v1712 = vadd.f32 %v1559, %v1711
        %1713 = vmatprep.mubr.f32.mxu0 0.0
        %v1714 = vand.u32 %v446, 4294901760
        %1715 = vmatmul.mubr.f32.gmra.mxu0 %v1714
        %v1716 = vpop.f32.mrf.mxu0
        %v1717 = vadd.f32 %v1564, %v1716
        %v1718 = vpop.f32.mrf.mxu0
        %v1719 = vadd.f32 %v1566, %v1718
        %1720 = vdwg.mxu0
        %v1721 = vmul.f32 %v1668, %v1668
        %v1722 = vmul.f32 %v1670, %v1670
        %v1723 = vmul.f32 %v1675, %v1675
        %v1724 = vmul.f32 %v1677, %v1677
        %v1725 = vmul.f32 %v1682, %v1682
        %v1726 = vmul.f32 %v1684, %v1684
        %v1727 = vmul.f32 %v1689, %v1689
        %v1728 = vmul.f32 %v1691, %v1691
        %v1729 = vmul.f32 %v1696, %v1696
        %v1730 = vmul.f32 %v1698, %v1698
        %v1731 = vmul.f32 %v1703, %v1703
        %v1732 = vmul.f32 %v1705, %v1705
        %v1733 = vmul.f32 %v1710, %v1710
        %v1734 = vmul.f32 %v1712, %v1712
        %v1735 = vmul.f32 %v1717, %v1717
        %v1736 = vmul.f32 %v1719, %v1719
        %v1737 = vmul.f32 %v1668, %v1721
        %v1738 = vmul.f32 %v1670, %v1722
        %v1739 = vmul.f32 %v1675, %v1723
        %v1740 = vmul.f32 %v1677, %v1724
        %v1741 = vmul.f32 %v1682, %v1725
        %v1742 = vmul.f32 %v1684, %v1726
        %v1743 = vmul.f32 %v1689, %v1727
        %v1744 = vmul.f32 %v1691, %v1728
        %v1745 = vmul.f32 %v1696, %v1729
        %v1746 = vmul.f32 %v1698, %v1730
        %v1747 = vmul.f32 %v1703, %v1731
        %v1748 = vmul.f32 %v1705, %v1732
        %v1749 = vmul.f32 %v1710, %v1733
        %v1750 = vmul.f32 %v1712, %v1734
        %v1751 = vmul.f32 %v1717, %v1735
        %v1752 = vmul.f32 %v1719, %v1736
        %v1753 = vmul.f32 %v1737, 0.044715
        %v1754 = vmul.f32 %v1738, 0.044715
        %v1755 = vmul.f32 %v1739, 0.044715
        %v1756 = vmul.f32 %v1740, 0.044715
        %v1757 = vmul.f32 %v1741, 0.044715
        %v1758 = vmul.f32 %v1742, 0.044715
        %v1759 = vmul.f32 %v1743, 0.044715
        %v1760 = vmul.f32 %v1744, 0.044715
        %v1761 = vmul.f32 %v1745, 0.044715
        %v1762 = vmul.f32 %v1746, 0.044715
        %v1763 = vmul.f32 %v1747, 0.044715
        %v1764 = vmul.f32 %v1748, 0.044715
        %v1765 = vmul.f32 %v1749, 0.044715
        %v1766 = vmul.f32 %v1750, 0.044715
        %v1767 = vmul.f32 %v1751, 0.044715
        %v1768 = vmul.f32 %v1752, 0.044715
        %v1769 = vadd.f32 %v1668, %v1753
        %v1770 = vadd.f32 %v1670, %v1754
        %v1771 = vadd.f32 %v1675, %v1755
        %v1772 = vadd.f32 %v1677, %v1756
        %v1773 = vadd.f32 %v1682, %v1757
        %v1774 = vadd.f32 %v1684, %v1758
        %v1775 = vadd.f32 %v1689, %v1759
        %v1776 = vadd.f32 %v1691, %v1760
        %v1777 = vadd.f32 %v1696, %v1761
        %v1778 = vadd.f32 %v1698, %v1762
        %v1779 = vadd.f32 %v1703, %v1763
        %v1780 = vadd.f32 %v1705, %v1764
        %v1781 = vadd.f32 %v1710, %v1765
        %v1782 = vadd.f32 %v1712, %v1766
        %v1783 = vadd.f32 %v1717, %v1767
        %v1784 = vadd.f32 %v1719, %v1768
        %v1785 = vmul.f32 %v1769, 0.7978846
        %v1786 = vmul.f32 %v1770, 0.7978846
        %v1787 = vmul.f32 %v1771, 0.7978846
        %v1788 = vmul.f32 %v1772, 0.7978846
        %v1789 = vmul.f32 %v1773, 0.7978846
        %v1790 = vmul.f32 %v1774, 0.7978846
        %v1791 = vmul.f32 %v1775, 0.7978846
        %v1792 = vmul.f32 %v1776, 0.7978846
        %v1793 = vmul.f32 %v1777, 0.7978846
        %v1794 = vmul.f32 %v1778, 0.7978846
        %v1795 = vmul.f32 %v1779, 0.7978846
        %v1796 = vmul.f32 %v1780, 0.7978846
        %v1797 = vmul.f32 %v1781, 0.7978846
        %v1798 = vmul.f32 %v1782, 0.7978846
        %v1799 = vmul.f32 %v1783, 0.7978846
        %v1800 = vmul.f32 %v1784, 0.7978846
        %v1801 = vtanh.pop %v1785
        %v1802 = vtanh.pop %v1786
        %v1803 = vtanh.pop %v1787
        %v1804 = vtanh.pop %v1788
        %v1805 = vtanh.pop %v1789
        %v1806 = vtanh.pop %v1790
        %v1807 = vtanh.pop %v1791
        %v1808 = vtanh.pop %v1792
        %v1809 = vtanh.pop %v1793
        %v1810 = vtanh.pop %v1794
        %v1811 = vtanh.pop %v1795
        %v1812 = vtanh.pop %v1796
        %v1813 = vtanh.pop %v1797
        %v1814 = vtanh.pop %v1798
        %v1815 = vtanh.pop %v1799
        %v1816 = vtanh.pop %v1800
        %v1817 = vadd.f32 %v1801, 1.0
        %v1818 = vadd.f32 %v1802, 1.0
        %v1819 = vadd.f32 %v1803, 1.0
        %v1820 = vadd.f32 %v1804, 1.0
        %v1821 = vadd.f32 %v1805, 1.0
        %v1822 = vadd.f32 %v1806, 1.0
        %v1823 = vadd.f32 %v1807, 1.0
        %v1824 = vadd.f32 %v1808, 1.0
        %v1825 = vadd.f32 %v1809, 1.0
        %v1826 = vadd.f32 %v1810, 1.0
        %v1827 = vadd.f32 %v1811, 1.0
        %v1828 = vadd.f32 %v1812, 1.0
        %v1829 = vadd.f32 %v1813, 1.0
        %v1830 = vadd.f32 %v1814, 1.0
        %v1831 = vadd.f32 %v1815, 1.0
        %v1832 = vadd.f32 %v1816, 1.0
        %v1833 = vmul.f32 %v1817, 0.5
        %v1834 = vmul.f32 %v1818, 0.5
        %v1835 = vmul.f32 %v1819, 0.5
        %v1836 = vmul.f32 %v1820, 0.5
        %v1837 = vmul.f32 %v1821, 0.5
        %v1838 = vmul.f32 %v1822, 0.5
        %v1839 = vmul.f32 %v1823, 0.5
        %v1840 = vmul.f32 %v1824, 0.5
        %v1841 = vmul.f32 %v1825, 0.5
        %v1842 = vmul.f32 %v1826, 0.5
        %v1843 = vmul.f32 %v1827, 0.5
        %v1844 = vmul.f32 %v1828, 0.5
        %v1845 = vmul.f32 %v1829, 0.5
        %v1846 = vmul.f32 %v1830, 0.5
        %v1847 = vmul.f32 %v1831, 0.5
        %v1848 = vmul.f32 %v1832, 0.5
        %v1849 = vmul.f32 %v1668, %v1833
        %v1850 = vmul.f32 %v1670, %v1834
        %v1851 = vmul.f32 %v1675, %v1835
        %v1852 = vmul.f32 %v1677, %v1836
        %v1853 = vmul.f32 %v1682, %v1837
        %v1854 = vmul.f32 %v1684, %v1838
        %v1855 = vmul.f32 %v1689, %v1839
        %v1856 = vmul.f32 %v1691, %v1840
        %v1857 = vmul.f32 %v1696, %v1841
        %v1858 = vmul.f32 %v1698, %v1842
        %v1859 = vmul.f32 %v1703, %v1843
        %v1860 = vmul.f32 %v1705, %v1844
        %v1861 = vmul.f32 %v1710, %v1845
        %v1862 = vmul.f32 %v1712, %v1846
        %v1863 = vmul.f32 %v1717, %v1847
        %v1864 = vmul.f32 %v1719, %v1848
        %v1865 = vld [vmem:[#allocation2] sm:$0xff]
        %v1866 = vld [vmem:[#allocation2 + $0x8] sm:$0xff]
        %v1867 = vld [vmem:[#allocation2 + $0x10] sm:$0xff]
        %v1868 = vld [vmem:[#allocation2 + $0x18] sm:$0xff]
        %v1869 = vld [vmem:[#allocation2 + $0x20] sm:$0xff]
        %v1870 = vld [vmem:[#allocation2 + $0x28] sm:$0xff]
        %v1871 = vld [vmem:[#allocation2 + $0x30] sm:$0xff]
        %v1872 = vld [vmem:[#allocation2 + $0x38] sm:$0xff]
        %1873 = vmatprep.subr.mxu0 0.0
        %v1874 = vand.u32 %v494, 4294901760
        %1875 = vmatpush1.msra.mxu0 %v1874
        %1876 = vmatprep.subr.mxu0 0.0
        %v1877 = vand.u32 %v493, 4294901760
        %1878 = vmatpush1.msra.mxu0 %v1877
        %1879 = vmatprep.subr.mxu0 0.0
        %v1880 = vand.u32 %v492, 4294901760
        %1881 = vmatpush1.msra.mxu0 %v1880
        %1882 = vmatprep.subr.mxu0 0.0
        %v1883 = vand.u32 %v491, 4294901760
        %1884 = vmatpush1.msra.mxu0 %v1883
        %1885 = vmatprep.subr.mxu0 0.0
        %v1886 = vand.u32 %v490, 4294901760
        %1887 = vmatpush1.msra.mxu0 %v1886
        %1888 = vmatprep.subr.mxu0 0.0
        %v1889 = vand.u32 %v489, 4294901760
        %1890 = vmatpush1.msra.mxu0 %v1889
        %1891 = vmatprep.subr.mxu0 0.0
        %v1892 = vand.u32 %v488, 4294901760
        %1893 = vmatpush1.msra.mxu0 %v1892
        %1894 = vmatprep.subr.mxu0 0.0
        %v1895 = vand.u32 %v487, 4294901760
        %1896 = vmatpush1.msra.mxu0 %v1895
        %1897 = vmatprep.subr.mxu0 0.0
        %v1898 = vand.u32 %v486, 4294901760
        %1899 = vmatpush1.msra.mxu0 %v1898
        %1900 = vmatprep.subr.mxu0 0.0
        %v1901 = vand.u32 %v485, 4294901760
        %1902 = vmatpush1.msra.mxu0 %v1901
        %1903 = vmatprep.subr.mxu0 0.0
        %v1904 = vand.u32 %v484, 4294901760
        %1905 = vmatpush1.msra.mxu0 %v1904
        %1906 = vmatprep.subr.mxu0 0.0
        %v1907 = vand.u32 %v483, 4294901760
        %1908 = vmatpush1.msra.mxu0 %v1907
        %1909 = vmatprep.subr.mxu0 0.0
        %v1910 = vand.u32 %v482, 4294901760
        %1911 = vmatpush1.msra.mxu0 %v1910
        %1912 = vmatprep.subr.mxu0 0.0
        %v1913 = vand.u32 %v481, 4294901760
        %1914 = vmatpush1.msra.mxu0 %v1913
        %1915 = vmatprep.subr.mxu0 0.0
        %v1916 = vand.u32 %v480, 4294901760
        %1917 = vmatpush1.msra.mxu0 %v1916
        %1918 = vmatprep.subr.mxu0 0.0
        %v1919 = vand.u32 %v479, 4294901760
        %1920 = vmatpush1.msra.mxu0 %v1919
        %1921 = vmatprep.subr.mxu0 0.0
        %v1922 = vand.u32 %v510, 4294901760
        %1923 = vmatpush2.msra.mxu0 %v1922
        %1924 = vmatprep.subr.mxu0 0.0
        %v1925 = vand.u32 %v509, 4294901760
        %1926 = vmatpush2.msra.mxu0 %v1925
        %1927 = vmatprep.subr.mxu0 0.0
        %v1928 = vand.u32 %v508, 4294901760
        %1929 = vmatpush2.msra.mxu0 %v1928
        %1930 = vmatprep.subr.mxu0 0.0
        %v1931 = vand.u32 %v507, 4294901760
        %1932 = vmatpush2.msra.mxu0 %v1931
        %1933 = vmatprep.subr.mxu0 0.0
        %v1934 = vand.u32 %v506, 4294901760
        %1935 = vmatpush2.msra.mxu0 %v1934
        %1936 = vmatprep.subr.mxu0 0.0
        %v1937 = vand.u32 %v505, 4294901760
        %1938 = vmatpush2.msra.mxu0 %v1937
        %1939 = vmatprep.subr.mxu0 0.0
        %v1940 = vand.u32 %v504, 4294901760
        %1941 = vmatpush2.msra.mxu0 %v1940
        %1942 = vmatprep.subr.mxu0 0.0
        %v1943 = vand.u32 %v503, 4294901760
        %1944 = vmatpush2.msra.mxu0 %v1943
        %1945 = vmatprep.subr.mxu0 0.0
        %v1946 = vand.u32 %v502, 4294901760
        %1947 = vmatpush2.msra.mxu0 %v1946
        %1948 = vmatprep.subr.mxu0 0.0
        %v1949 = vand.u32 %v501, 4294901760
        %1950 = vmatpush2.msra.mxu0 %v1949
        %1951 = vmatprep.subr.mxu0 0.0
        %v1952 = vand.u32 %v500, 4294901760
        %1953 = vmatpush2.msra.mxu0 %v1952
        %1954 = vmatprep.subr.mxu0 0.0
        %v1955 = vand.u32 %v499, 4294901760
        %1956 = vmatpush2.msra.mxu0 %v1955
        %1957 = vmatprep.subr.mxu0 0.0
        %v1958 = vand.u32 %v498, 4294901760
        %1959 = vmatpush2.msra.mxu0 %v1958
        %1960 = vmatprep.subr.mxu0 0.0
        %v1961 = vand.u32 %v497, 4294901760
        %1962 = vmatpush2.msra.mxu0 %v1961
        %1963 = vmatprep.subr.mxu0 0.0
        %v1964 = vand.u32 %v496, 4294901760
        %1965 = vmatpush2.msra.mxu0 %v1964
        %1966 = vmatprep.subr.mxu0 0.0
        %v1967 = vand.u32 %v495, 4294901760
        %1968 = vmatpush2.msra.mxu0 %v1967
        %v1969 = vand.u32 %v1850, 4294901760
        %v1970 = vsub.f32 %v1850, %v1969
        %v1971 = vand.u32 %v1970, 4294901760
        %v1972 = vsub.f32 %v1970, %v1971
        %v1973 = vand.u32 %v1972, 4294901760
        %1974 = vmatprep.mubr.f32.mxu0 %v1973
        %v1975 = vand.u32 %v1849, 4294901760
        %v1976 = vsub.f32 %v1849, %v1975
        %v1977 = vand.u32 %v1976, 4294901760
        %v1978 = vsub.f32 %v1976, %v1977
        %v1979 = vand.u32 %v1978, 4294901760
        %1980 = vmatmul.mubr.f32.gmra.mxu0 %v1979
        %v1981 = vpop.f32.mrf.mxu0
        %v1982 = vadd.f32 0.0, %v1981
        %v1983 = vpop.f32.mrf.mxu0
        %v1984 = vand.u32 %v1852, 4294901760
        %v1985 = vsub.f32 %v1852, %v1984
        %v1986 = vand.u32 %v1985, 4294901760
        %v1987 = vsub.f32 %v1985, %v1986
        %v1988 = vand.u32 %v1987, 4294901760
        %1989 = vmatprep.mubr.f32.mxu0 %v1988
        %v1990 = vand.u32 %v1851, 4294901760
        %v1991 = vsub.f32 %v1851, %v1990
        %v1992 = vand.u32 %v1991, 4294901760
        %v1993 = vsub.f32 %v1991, %v1992
        %v1994 = vand.u32 %v1993, 4294901760
        %1995 = vmatmul.mubr.f32.gmra.mxu0 %v1994
        %v1996 = vpop.f32.mrf.mxu0
        %v1997 = vadd.f32 0.0, %v1996
        %v1998 = vpop.f32.mrf.mxu0
        %v1999 = vand.u32 %v1854, 4294901760
        %v2000 = vsub.f32 %v1854, %v1999
        %v2001 = vand.u32 %v2000, 4294901760
        %v2002 = vsub.f32 %v2000, %v2001
        %v2003 = vand.u32 %v2002, 4294901760
        %2004 = vmatprep.mubr.f32.mxu0 %v2003
        %v2005 = vand.u32 %v1853, 4294901760
        %v2006 = vsub.f32 %v1853, %v2005
        %v2007 = vand.u32 %v2006, 4294901760
        %v2008 = vsub.f32 %v2006, %v2007
        %v2009 = vand.u32 %v2008, 4294901760
        %2010 = vmatmul.mubr.f32.gmra.mxu0 %v2009
        %v2011 = vpop.f32.mrf.mxu0
        %v2012 = vadd.f32 0.0, %v2011
        %v2013 = vpop.f32.mrf.mxu0
        %v2014 = vand.u32 %v1856, 4294901760
        %v2015 = vsub.f32 %v1856, %v2014
        %v2016 = vand.u32 %v2015, 4294901760
        %v2017 = vsub.f32 %v2015, %v2016
        %v2018 = vand.u32 %v2017, 4294901760
        %2019 = vmatprep.mubr.f32.mxu0 %v2018
        %v2020 = vand.u32 %v1855, 4294901760
        %v2021 = vsub.f32 %v1855, %v2020
        %v2022 = vand.u32 %v2021, 4294901760
        %v2023 = vsub.f32 %v2021, %v2022
        %v2024 = vand.u32 %v2023, 4294901760
        %2025 = vmatmul.mubr.f32.gmra.mxu0 %v2024
        %v2026 = vpop.f32.mrf.mxu0
        %v2027 = vadd.f32 0.0, %v2026
        %v2028 = vpop.f32.mrf.mxu0
        %v2029 = vand.u32 %v1858, 4294901760
        %v2030 = vsub.f32 %v1858, %v2029
        %v2031 = vand.u32 %v2030, 4294901760
        %v2032 = vsub.f32 %v2030, %v2031
        %v2033 = vand.u32 %v2032, 4294901760
        %2034 = vmatprep.mubr.f32.mxu0 %v2033
        %v2035 = vand.u32 %v1857, 4294901760
        %v2036 = vsub.f32 %v1857, %v2035
        %v2037 = vand.u32 %v2036, 4294901760
        %v2038 = vsub.f32 %v2036, %v2037
        %v2039 = vand.u32 %v2038, 4294901760
        %2040 = vmatmul.mubr.f32.gmra.mxu0 %v2039
        %v2041 = vpop.f32.mrf.mxu0
        %v2042 = vadd.f32 0.0, %v2041
        %v2043 = vpop.f32.mrf.mxu0
        %v2044 = vand.u32 %v1860, 4294901760
        %v2045 = vsub.f32 %v1860, %v2044
        %v2046 = vand.u32 %v2045, 4294901760
        %v2047 = vsub.f32 %v2045, %v2046
        %v2048 = vand.u32 %v2047, 4294901760
        %2049 = vmatprep.mubr.f32.mxu0 %v2048
        %v2050 = vand.u32 %v1859, 4294901760
        %v2051 = vsub.f32 %v1859, %v2050
        %v2052 = vand.u32 %v2051, 4294901760
        %v2053 = vsub.f32 %v2051, %v2052
        %v2054 = vand.u32 %v2053, 4294901760
        %2055 = vmatmul.mubr.f32.gmra.mxu0 %v2054
        %v2056 = vpop.f32.mrf.mxu0
        %v2057 = vadd.f32 0.0, %v2056
        %v2058 = vpop.f32.mrf.mxu0
        %v2059 = vand.u32 %v1862, 4294901760
        %v2060 = vsub.f32 %v1862, %v2059
        %v2061 = vand.u32 %v2060, 4294901760
        %v2062 = vsub.f32 %v2060, %v2061
        %v2063 = vand.u32 %v2062, 4294901760
        %2064 = vmatprep.mubr.f32.mxu0 %v2063
        %v2065 = vand.u32 %v1861, 4294901760
        %v2066 = vsub.f32 %v1861, %v2065
        %v2067 = vand.u32 %v2066, 4294901760
        %v2068 = vsub.f32 %v2066, %v2067
        %v2069 = vand.u32 %v2068, 4294901760
        %2070 = vmatmul.mubr.f32.gmra.mxu0 %v2069
        %v2071 = vpop.f32.mrf.mxu0
        %v2072 = vadd.f32 0.0, %v2071
        %v2073 = vpop.f32.mrf.mxu0
        %v2074 = vand.u32 %v1864, 4294901760
        %v2075 = vsub.f32 %v1864, %v2074
        %v2076 = vand.u32 %v2075, 4294901760
        %v2077 = vsub.f32 %v2075, %v2076
        %v2078 = vand.u32 %v2077, 4294901760
        %2079 = vmatprep.mubr.f32.mxu0 %v2078
        %v2080 = vand.u32 %v1863, 4294901760
        %v2081 = vsub.f32 %v1863, %v2080
        %v2082 = vand.u32 %v2081, 4294901760
        %v2083 = vsub.f32 %v2081, %v2082
        %v2084 = vand.u32 %v2083, 4294901760
        %2085 = vmatmul.mubr.f32.gmra.mxu0 %v2084
        %v2086 = vpop.f32.mrf.mxu0
        %v2087 = vadd.f32 0.0, %v2086
        %v2088 = vpop.f32.mrf.mxu0
        %2089 = vdwg.mxu0
        %2090 = vmatprep.subr.mxu0 0.0
        %v2091 = vand.u32 %v494, 4294901760
        %v2092 = vsub.f32 %v494, %v2091
        %v2093 = vand.u32 %v2092, 4294901760
        %v2094 = vsub.f32 %v2092, %v2093
        %v2095 = vand.u32 %v2094, 4294901760
        %2096 = vmatpush1.msra.mxu0 %v2095
        %2097 = vmatprep.subr.mxu0 0.0
        %v2098 = vand.u32 %v493, 4294901760
        %v2099 = vsub.f32 %v493, %v2098
        %v2100 = vand.u32 %v2099, 4294901760
        %v2101 = vsub.f32 %v2099, %v2100
        %v2102 = vand.u32 %v2101, 4294901760
        %2103 = vmatpush1.msra.mxu0 %v2102
        %2104 = vmatprep.subr.mxu0 0.0
        %v2105 = vand.u32 %v492, 4294901760
        %v2106 = vsub.f32 %v492, %v2105
        %v2107 = vand.u32 %v2106, 4294901760
        %v2108 = vsub.f32 %v2106, %v2107
        %v2109 = vand.u32 %v2108, 4294901760
        %2110 = vmatpush1.msra.mxu0 %v2109
        %2111 = vmatprep.subr.mxu0 0.0
        %v2112 = vand.u32 %v491, 4294901760
        %v2113 = vsub.f32 %v491, %v2112
        %v2114 = vand.u32 %v2113, 4294901760
        %v2115 = vsub.f32 %v2113, %v2114
        %v2116 = vand.u32 %v2115, 4294901760
        %2117 = vmatpush1.msra.mxu0 %v2116
        %2118 = vmatprep.subr.mxu0 0.0
        %v2119 = vand.u32 %v490, 4294901760
        %v2120 = vsub.f32 %v490, %v2119
        %v2121 = vand.u32 %v2120, 4294901760
        %v2122 = vsub.f32 %v2120, %v2121
        %v2123 = vand.u32 %v2122, 4294901760
        %2124 = vmatpush1.msra.mxu0 %v2123
        %2125 = vmatprep.subr.mxu0 0.0
        %v2126 = vand.u32 %v489, 4294901760
        %v2127 = vsub.f32 %v489, %v2126
        %v2128 = vand.u32 %v2127, 4294901760
        %v2129 = vsub.f32 %v2127, %v2128
        %v2130 = vand.u32 %v2129, 4294901760
        %2131 = vmatpush1.msra.mxu0 %v2130
        %2132 = vmatprep.subr.mxu0 0.0
        %v2133 = vand.u32 %v488, 4294901760
        %v2134 = vsub.f32 %v488, %v2133
        %v2135 = vand.u32 %v2134, 4294901760
        %v2136 = vsub.f32 %v2134, %v2135
        %v2137 = vand.u32 %v2136, 4294901760
        %2138 = vmatpush1.msra.mxu0 %v2137
        %2139 = vmatprep.subr.mxu0 0.0
        %v2140 = vand.u32 %v487, 4294901760
        %v2141 = vsub.f32 %v487, %v2140
        %v2142 = vand.u32 %v2141, 4294901760
        %v2143 = vsub.f32 %v2141, %v2142
        %v2144 = vand.u32 %v2143, 4294901760
        %2145 = vmatpush1.msra.mxu0 %v2144
        %2146 = vmatprep.subr.mxu0 0.0
        %v2147 = vand.u32 %v486, 4294901760
        %v2148 = vsub.f32 %v486, %v2147
        %v2149 = vand.u32 %v2148, 4294901760
        %v2150 = vsub.f32 %v2148, %v2149
        %v2151 = vand.u32 %v2150, 4294901760
        %2152 = vmatpush1.msra.mxu0 %v2151
        %2153 = vmatprep.subr.mxu0 0.0
        %v2154 = vand.u32 %v485, 4294901760
        %v2155 = vsub.f32 %v485, %v2154
        %v2156 = vand.u32 %v2155, 4294901760
        %v2157 = vsub.f32 %v2155, %v2156
        %v2158 = vand.u32 %v2157, 4294901760
        %2159 = vmatpush1.msra.mxu0 %v2158
        %2160 = vmatprep.subr.mxu0 0.0
        %v2161 = vand.u32 %v484, 4294901760
        %v2162 = vsub.f32 %v484, %v2161
        %v2163 = vand.u32 %v2162, 4294901760
        %v2164 = vsub.f32 %v2162, %v2163
        %v2165 = vand.u32 %v2164, 4294901760
        %2166 = vmatpush1.msra.mxu0 %v2165
        %2167 = vmatprep.subr.mxu0 0.0
        %v2168 = vand.u32 %v483, 4294901760
        %v2169 = vsub.f32 %v483, %v2168
        %v2170 = vand.u32 %v2169, 4294901760
        %v2171 = vsub.f32 %v2169, %v2170
        %v2172 = vand.u32 %v2171, 4294901760
        %2173 = vmatpush1.msra.mxu0 %v2172
        %2174 = vmatprep.subr.mxu0 0.0
        %v2175 = vand.u32 %v482, 4294901760
        %v2176 = vsub.f32 %v482, %v2175
        %v2177 = vand.u32 %v2176, 4294901760
        %v2178 = vsub.f32 %v2176, %v2177
        %v2179 = vand.u32 %v2178, 4294901760
        %2180 = vmatpush1.msra.mxu0 %v2179
        %2181 = vmatprep.subr.mxu0 0.0
        %v2182 = vand.u32 %v481, 4294901760
        %v2183 = vsub.f32 %v481, %v2182
        %v2184 = vand.u32 %v2183, 4294901760
        %v2185 = vsub.f32 %v2183, %v2184
        %v2186 = vand.u32 %v2185, 4294901760
        %2187 = vmatpush1.msra.mxu0 %v2186
        %2188 = vmatprep.subr.mxu0 0.0
        %v2189 = vand.u32 %v480, 4294901760
        %v2190 = vsub.f32 %v480, %v2189
        %v2191 = vand.u32 %v2190, 4294901760
        %v2192 = vsub.f32 %v2190, %v2191
        %v2193 = vand.u32 %v2192, 4294901760
        %2194 = vmatpush1.msra.mxu0 %v2193
        %2195 = vmatprep.subr.mxu0 0.0
        %v2196 = vand.u32 %v479, 4294901760
        %v2197 = vsub.f32 %v479, %v2196
        %v2198 = vand.u32 %v2197, 4294901760
        %v2199 = vsub.f32 %v2197, %v2198
        %v2200 = vand.u32 %v2199, 4294901760
        %2201 = vmatpush1.msra.mxu0 %v2200
        %2202 = vmatprep.subr.mxu0 0.0
        %v2203 = vand.u32 %v510, 4294901760
        %v2204 = vsub.f32 %v510, %v2203
        %v2205 = vand.u32 %v2204, 4294901760
        %v2206 = vsub.f32 %v2204, %v2205
        %v2207 = vand.u32 %v2206, 4294901760
        %2208 = vmatpush2.msra.mxu0 %v2207
        %2209 = vmatprep.subr.mxu0 0.0
        %v2210 = vand.u32 %v509, 4294901760
        %v2211 = vsub.f32 %v509, %v2210
        %v2212 = vand.u32 %v2211, 4294901760
        %v2213 = vsub.f32 %v2211, %v2212
        %v2214 = vand.u32 %v2213, 4294901760
        %2215 = vmatpush2.msra.mxu0 %v2214
        %2216 = vmatprep.subr.mxu0 0.0
        %v2217 = vand.u32 %v508, 4294901760
        %v2218 = vsub.f32 %v508, %v2217
        %v2219 = vand.u32 %v2218, 4294901760
        %v2220 = vsub.f32 %v2218, %v2219
        %v2221 = vand.u32 %v2220, 4294901760
        %2222 = vmatpush2.msra.mxu0 %v2221
        %2223 = vmatprep.subr.mxu0 0.0
        %v2224 = vand.u32 %v507, 4294901760
        %v2225 = vsub.f32 %v507, %v2224
        %v2226 = vand.u32 %v2225, 4294901760
        %v2227 = vsub.f32 %v2225, %v2226
        %v2228 = vand.u32 %v2227, 4294901760
        %2229 = vmatpush2.msra.mxu0 %v2228
        %2230 = vmatprep.subr.mxu0 0.0
        %v2231 = vand.u32 %v506, 4294901760
        %v2232 = vsub.f32 %v506, %v2231
        %v2233 = vand.u32 %v2232, 4294901760
        %v2234 = vsub.f32 %v2232, %v2233
        %v2235 = vand.u32 %v2234, 4294901760
        %2236 = vmatpush2.msra.mxu0 %v2235
        %2237 = vmatprep.subr.mxu0 0.0
        %v2238 = vand.u32 %v505, 4294901760
        %v2239 = vsub.f32 %v505, %v2238
        %v2240 = vand.u32 %v2239, 4294901760
        %v2241 = vsub.f32 %v2239, %v2240
        %v2242 = vand.u32 %v2241, 4294901760
        %2243 = vmatpush2.msra.mxu0 %v2242
        %2244 = vmatprep.subr.mxu0 0.0
        %v2245 = vand.u32 %v504, 4294901760
        %v2246 = vsub.f32 %v504, %v2245
        %v2247 = vand.u32 %v2246, 4294901760
        %v2248 = vsub.f32 %v2246, %v2247
        %v2249 = vand.u32 %v2248, 4294901760
        %2250 = vmatpush2.msra.mxu0 %v2249
        %2251 = vmatprep.subr.mxu0 0.0
        %v2252 = vand.u32 %v503, 4294901760
        %v2253 = vsub.f32 %v503, %v2252
        %v2254 = vand.u32 %v2253, 4294901760
        %v2255 = vsub.f32 %v2253, %v2254
        %v2256 = vand.u32 %v2255, 4294901760
        %2257 = vmatpush2.msra.mxu0 %v2256
        %2258 = vmatprep.subr.mxu0 0.0
        %v2259 = vand.u32 %v502, 4294901760
        %v2260 = vsub.f32 %v502, %v2259
        %v2261 = vand.u32 %v2260, 4294901760
        %v2262 = vsub.f32 %v2260, %v2261
        %v2263 = vand.u32 %v2262, 4294901760
        %2264 = vmatpush2.msra.mxu0 %v2263
        %2265 = vmatprep.subr.mxu0 0.0
        %v2266 = vand.u32 %v501, 4294901760
        %v2267 = vsub.f32 %v501, %v2266
        %v2268 = vand.u32 %v2267, 4294901760
        %v2269 = vsub.f32 %v2267, %v2268
        %v2270 = vand.u32 %v2269, 4294901760
        %2271 = vmatpush2.msra.mxu0 %v2270
        %2272 = vmatprep.subr.mxu0 0.0
        %v2273 = vand.u32 %v500, 4294901760
        %v2274 = vsub.f32 %v500, %v2273
        %v2275 = vand.u32 %v2274, 4294901760
        %v2276 = vsub.f32 %v2274, %v2275
        %v2277 = vand.u32 %v2276, 4294901760
        %2278 = vmatpush2.msra.mxu0 %v2277
        %2279 = vmatprep.subr.mxu0 0.0
        %v2280 = vand.u32 %v499, 4294901760
        %v2281 = vsub.f32 %v499, %v2280
        %v2282 = vand.u32 %v2281, 4294901760
        %v2283 = vsub.f32 %v2281, %v2282
        %v2284 = vand.u32 %v2283, 4294901760
        %2285 = vmatpush2.msra.mxu0 %v2284
        %2286 = vmatprep.subr.mxu0 0.0
        %v2287 = vand.u32 %v498, 4294901760
        %v2288 = vsub.f32 %v498, %v2287
        %v2289 = vand.u32 %v2288, 4294901760
        %v2290 = vsub.f32 %v2288, %v2289
        %v2291 = vand.u32 %v2290, 4294901760
        %2292 = vmatpush2.msra.mxu0 %v2291
        %2293 = vmatprep.subr.mxu0 0.0
        %v2294 = vand.u32 %v497, 4294901760
        %v2295 = vsub.f32 %v497, %v2294
        %v2296 = vand.u32 %v2295, 4294901760
        %v2297 = vsub.f32 %v2295, %v2296
        %v2298 = vand.u32 %v2297, 4294901760
        %2299 = vmatpush2.msra.mxu0 %v2298
        %2300 = vmatprep.subr.mxu0 0.0
        %v2301 = vand.u32 %v496, 4294901760
        %v2302 = vsub.f32 %v496, %v2301
        %v2303 = vand.u32 %v2302, 4294901760
        %v2304 = vsub.f32 %v2302, %v2303
        %v2305 = vand.u32 %v2304, 4294901760
        %2306 = vmatpush2.msra.mxu0 %v2305
        %2307 = vmatprep.subr.mxu0 0.0
        %v2308 = vand.u32 %v495, 4294901760
        %v2309 = vsub.f32 %v495, %v2308
        %v2310 = vand.u32 %v2309, 4294901760
        %v2311 = vsub.f32 %v2309, %v2310
        %v2312 = vand.u32 %v2311, 4294901760
        %2313 = vmatpush2.msra.mxu0 %v2312
        %v2314 = vand.u32 %v1850, 4294901760
        %2315 = vmatprep.mubr.f32.mxu0 %v2314
        %v2316 = vand.u32 %v1849, 4294901760
        %2317 = vmatmul.mubr.f32.gmra.mxu0 %v2316
        %v2318 = vpop.f32.mrf.mxu0
        %v2319 = vadd.f32 %v1982, %v2318
        %v2320 = vpop.f32.mrf.mxu0
        %v2321 = vand.u32 %v1852, 4294901760
        %2322 = vmatprep.mubr.f32.mxu0 %v2321
        %v2323 = vand.u32 %v1851, 4294901760
        %2324 = vmatmul.mubr.f32.gmra.mxu0 %v2323
        %v2325 = vpop.f32.mrf.mxu0
        %v2326 = vadd.f32 %v1997, %v2325
        %v2327 = vpop.f32.mrf.mxu0
        %v2328 = vand.u32 %v1854, 4294901760
        %2329 = vmatprep.mubr.f32.mxu0 %v2328
        %v2330 = vand.u32 %v1853, 4294901760
        %2331 = vmatmul.mubr.f32.gmra.mxu0 %v2330
        %v2332 = vpop.f32.mrf.mxu0
        %v2333 = vadd.f32 %v2012, %v2332
        %v2334 = vpop.f32.mrf.mxu0
        %v2335 = vand.u32 %v1856, 4294901760
        %2336 = vmatprep.mubr.f32.mxu0 %v2335
        %v2337 = vand.u32 %v1855, 4294901760
        %2338 = vmatmul.mubr.f32.gmra.mxu0 %v2337
        %v2339 = vpop.f32.mrf.mxu0
        %v2340 = vadd.f32 %v2027, %v2339
        %v2341 = vpop.f32.mrf.mxu0
        %v2342 = vand.u32 %v1858, 4294901760
        %2343 = vmatprep.mubr.f32.mxu0 %v2342
        %v2344 = vand.u32 %v1857, 4294901760
        %2345 = vmatmul.mubr.f32.gmra.mxu0 %v2344
        %v2346 = vpop.f32.mrf.mxu0
        %v2347 = vadd.f32 %v2042, %v2346
        %v2348 = vpop.f32.mrf.mxu0
        %v2349 = vand.u32 %v1860, 4294901760
        %2350 = vmatprep.mubr.f32.mxu0 %v2349
        %v2351 = vand.u32 %v1859, 4294901760
        %2352 = vmatmul.mubr.f32.gmra.mxu0 %v2351
        %v2353 = vpop.f32.mrf.mxu0
        %v2354 = vadd.f32 %v2057, %v2353
        %v2355 = vpop.f32.mrf.mxu0
        %v2356 = vand.u32 %v1862, 4294901760
        %2357 = vmatprep.mubr.f32.mxu0 %v2356
        %v2358 = vand.u32 %v1861, 4294901760
        %2359 = vmatmul.mubr.f32.gmra.mxu0 %v2358
        %v2360 = vpop.f32.mrf.mxu0
        %v2361 = vadd.f32 %v2072, %v2360
        %v2362 = vpop.f32.mrf.mxu0
        %v2363 = vand.u32 %v1864, 4294901760
        %2364 = vmatprep.mubr.f32.mxu0 %v2363
        %v2365 = vand.u32 %v1863, 4294901760
        %2366 = vmatmul.mubr.f32.gmra.mxu0 %v2365
        %v2367 = vpop.f32.mrf.mxu0
        %v2368 = vadd.f32 %v2087, %v2367
        %v2369 = vpop.f32.mrf.mxu0
        %2370 = vdwg.mxu0
        %2371 = vmatprep.subr.mxu0 0.0
        %v2372 = vand.u32 %v494, 4294901760
        %v2373 = vsub.f32 %v494, %v2372
        %2374 = vmatpush1.msra.mxu0 %v2373
        %2375 = vmatprep.subr.mxu0 0.0
        %v2376 = vand.u32 %v493, 4294901760
        %v2377 = vsub.f32 %v493, %v2376
        %2378 = vmatpush1.msra.mxu0 %v2377
        %2379 = vmatprep.subr.mxu0 0.0
        %v2380 = vand.u32 %v492, 4294901760
        %v2381 = vsub.f32 %v492, %v2380
        %2382 = vmatpush1.msra.mxu0 %v2381
        %2383 = vmatprep.subr.mxu0 0.0
        %v2384 = vand.u32 %v491, 4294901760
        %v2385 = vsub.f32 %v491, %v2384
        %2386 = vmatpush1.msra.mxu0 %v2385
        %2387 = vmatprep.subr.mxu0 0.0
        %v2388 = vand.u32 %v490, 4294901760
        %v2389 = vsub.f32 %v490, %v2388
        %2390 = vmatpush1.msra.mxu0 %v2389
        %2391 = vmatprep.subr.mxu0 0.0
        %v2392 = vand.u32 %v489, 4294901760
        %v2393 = vsub.f32 %v489, %v2392
        %2394 = vmatpush1.msra.mxu0 %v2393
        %2395 = vmatprep.subr.mxu0 0.0
        %v2396 = vand.u32 %v488, 4294901760
        %v2397 = vsub.f32 %v488, %v2396
        %2398 = vmatpush1.msra.mxu0 %v2397
        %2399 = vmatprep.subr.mxu0 0.0
        %v2400 = vand.u32 %v487, 4294901760
        %v2401 = vsub.f32 %v487, %v2400
        %2402 = vmatpush1.msra.mxu0 %v2401
        %2403 = vmatprep.subr.mxu0 0.0
        %v2404 = vand.u32 %v486, 4294901760
        %v2405 = vsub.f32 %v486, %v2404
        %2406 = vmatpush1.msra.mxu0 %v2405
        %2407 = vmatprep.subr.mxu0 0.0
        %v2408 = vand.u32 %v485, 4294901760
        %v2409 = vsub.f32 %v485, %v2408
        %2410 = vmatpush1.msra.mxu0 %v2409
        %2411 = vmatprep.subr.mxu0 0.0
        %v2412 = vand.u32 %v484, 4294901760
        %v2413 = vsub.f32 %v484, %v2412
        %2414 = vmatpush1.msra.mxu0 %v2413
        %2415 = vmatprep.subr.mxu0 0.0
        %v2416 = vand.u32 %v483, 4294901760
        %v2417 = vsub.f32 %v483, %v2416
        %2418 = vmatpush1.msra.mxu0 %v2417
        %2419 = vmatprep.subr.mxu0 0.0
        %v2420 = vand.u32 %v482, 4294901760
        %v2421 = vsub.f32 %v482, %v2420
        %2422 = vmatpush1.msra.mxu0 %v2421
        %2423 = vmatprep.subr.mxu0 0.0
        %v2424 = vand.u32 %v481, 4294901760
        %v2425 = vsub.f32 %v481, %v2424
        %2426 = vmatpush1.msra.mxu0 %v2425
        %2427 = vmatprep.subr.mxu0 0.0
        %v2428 = vand.u32 %v480, 4294901760
        %v2429 = vsub.f32 %v480, %v2428
        %2430 = vmatpush1.msra.mxu0 %v2429
        %2431 = vmatprep.subr.mxu0 0.0
        %v2432 = vand.u32 %v479, 4294901760
        %v2433 = vsub.f32 %v479, %v2432
        %2434 = vmatpush1.msra.mxu0 %v2433
        %2435 = vmatprep.subr.mxu0 0.0
        %v2436 = vand.u32 %v510, 4294901760
        %v2437 = vsub.f32 %v510, %v2436
        %2438 = vmatpush2.msra.mxu0 %v2437
        %2439 = vmatprep.subr.mxu0 0.0
        %v2440 = vand.u32 %v509, 4294901760
        %v2441 = vsub.f32 %v509, %v2440
        %2442 = vmatpush2.msra.mxu0 %v2441
        %2443 = vmatprep.subr.mxu0 0.0
        %v2444 = vand.u32 %v508, 4294901760
        %v2445 = vsub.f32 %v508, %v2444
        %2446 = vmatpush2.msra.mxu0 %v2445
        %2447 = vmatprep.subr.mxu0 0.0
        %v2448 = vand.u32 %v507, 4294901760
        %v2449 = vsub.f32 %v507, %v2448
        %2450 = vmatpush2.msra.mxu0 %v2449
        %2451 = vmatprep.subr.mxu0 0.0
        %v2452 = vand.u32 %v506, 4294901760
        %v2453 = vsub.f32 %v506, %v2452
        %2454 = vmatpush2.msra.mxu0 %v2453
        %2455 = vmatprep.subr.mxu0 0.0
        %v2456 = vand.u32 %v505, 4294901760
        %v2457 = vsub.f32 %v505, %v2456
        %2458 = vmatpush2.msra.mxu0 %v2457
        %2459 = vmatprep.subr.mxu0 0.0
        %v2460 = vand.u32 %v504, 4294901760
        %v2461 = vsub.f32 %v504, %v2460
        %2462 = vmatpush2.msra.mxu0 %v2461
        %2463 = vmatprep.subr.mxu0 0.0
        %v2464 = vand.u32 %v503, 4294901760
        %v2465 = vsub.f32 %v503, %v2464
        %2466 = vmatpush2.msra.mxu0 %v2465
        %2467 = vmatprep.subr.mxu0 0.0
        %v2468 = vand.u32 %v502, 4294901760
        %v2469 = vsub.f32 %v502, %v2468
        %2470 = vmatpush2.msra.mxu0 %v2469
        %2471 = vmatprep.subr.mxu0 0.0
        %v2472 = vand.u32 %v501, 4294901760
        %v2473 = vsub.f32 %v501, %v2472
        %2474 = vmatpush2.msra.mxu0 %v2473
        %2475 = vmatprep.subr.mxu0 0.0
        %v2476 = vand.u32 %v500, 4294901760
        %v2477 = vsub.f32 %v500, %v2476
        %2478 = vmatpush2.msra.mxu0 %v2477
        %2479 = vmatprep.subr.mxu0 0.0
        %v2480 = vand.u32 %v499, 4294901760
        %v2481 = vsub.f32 %v499, %v2480
        %2482 = vmatpush2.msra.mxu0 %v2481
        %2483 = vmatprep.subr.mxu0 0.0
        %v2484 = vand.u32 %v498, 4294901760
        %v2485 = vsub.f32 %v498, %v2484
        %2486 = vmatpush2.msra.mxu0 %v2485
        %2487 = vmatprep.subr.mxu0 0.0
        %v2488 = vand.u32 %v497, 4294901760
        %v2489 = vsub.f32 %v497, %v2488
        %2490 = vmatpush2.msra.mxu0 %v2489
        %2491 = vmatprep.subr.mxu0 0.0
        %v2492 = vand.u32 %v496, 4294901760
        %v2493 = vsub.f32 %v496, %v2492
        %2494 = vmatpush2.msra.mxu0 %v2493
        %2495 = vmatprep.subr.mxu0 0.0
        %v2496 = vand.u32 %v495, 4294901760
        %v2497 = vsub.f32 %v495, %v2496
        %2498 = vmatpush2.msra.mxu0 %v2497
        %v2499 = vand.u32 %v1850, 4294901760
        %v2500 = vsub.f32 %v1850, %v2499
        %2501 = vmatprep.mubr.f32.mxu0 %v2500
        %v2502 = vand.u32 %v1849, 4294901760
        %v2503 = vsub.f32 %v1849, %v2502
        %2504 = vmatmul.mubr.f32.gmra.mxu0 %v2503
        %v2505 = vpop.f32.mrf.mxu0
        %v2506 = vadd.f32 %v2319, %v2505
        %v2507 = vpop.f32.mrf.mxu0
        %v2508 = vand.u32 %v1852, 4294901760
        %v2509 = vsub.f32 %v1852, %v2508
        %2510 = vmatprep.mubr.f32.mxu0 %v2509
        %v2511 = vand.u32 %v1851, 4294901760
        %v2512 = vsub.f32 %v1851, %v2511
        %2513 = vmatmul.mubr.f32.gmra.mxu0 %v2512
        %v2514 = vpop.f32.mrf.mxu0
        %v2515 = vadd.f32 %v2326, %v2514
        %v2516 = vpop.f32.mrf.mxu0
        %v2517 = vand.u32 %v1854, 4294901760
        %v2518 = vsub.f32 %v1854, %v2517
        %2519 = vmatprep.mubr.f32.mxu0 %v2518
        %v2520 = vand.u32 %v1853, 4294901760
        %v2521 = vsub.f32 %v1853, %v2520
        %2522 = vmatmul.mubr.f32.gmra.mxu0 %v2521
        %v2523 = vpop.f32.mrf.mxu0
        %v2524 = vadd.f32 %v2333, %v2523
        %v2525 = vpop.f32.mrf.mxu0
        %v2526 = vand.u32 %v1856, 4294901760
        %v2527 = vsub.f32 %v1856, %v2526
        %2528 = vmatprep.mubr.f32.mxu0 %v2527
        %v2529 = vand.u32 %v1855, 4294901760
        %v2530 = vsub.f32 %v1855, %v2529
        %2531 = vmatmul.mubr.f32.gmra.mxu0 %v2530
        %v2532 = vpop.f32.mrf.mxu0
        %v2533 = vadd.f32 %v2340, %v2532
        %v2534 = vpop.f32.mrf.mxu0
        %v2535 = vand.u32 %v1858, 4294901760
        %v2536 = vsub.f32 %v1858, %v2535
        %2537 = vmatprep.mubr.f32.mxu0 %v2536
        %v2538 = vand.u32 %v1857, 4294901760
        %v2539 = vsub.f32 %v1857, %v2538
        %2540 = vmatmul.mubr.f32.gmra.mxu0 %v2539
        %v2541 = vpop.f32.mrf.mxu0
        %v2542 = vadd.f32 %v2347, %v2541
        %v2543 = vpop.f32.mrf.mxu0
        %v2544 = vand.u32 %v1860, 4294901760
        %v2545 = vsub.f32 %v1860, %v2544
        %2546 = vmatprep.mubr.f32.mxu0 %v2545
        %v2547 = vand.u32 %v1859, 4294901760
        %v2548 = vsub.f32 %v1859, %v2547
        %2549 = vmatmul.mubr.f32.gmra.mxu0 %v2548
        %v2550 = vpop.f32.mrf.mxu0
        %v2551 = vadd.f32 %v2354, %v2550
        %v2552 = vpop.f32.mrf.mxu0
        %v2553 = vand.u32 %v1862, 4294901760
        %v2554 = vsub.f32 %v1862, %v2553
        %2555 = vmatprep.mubr.f32.mxu0 %v2554
        %v2556 = vand.u32 %v1861, 4294901760
        %v2557 = vsub.f32 %v1861, %v2556
        %2558 = vmatmul.mubr.f32.gmra.mxu0 %v2557
        %v2559 = vpop.f32.mrf.mxu0
        %v2560 = vadd.f32 %v2361, %v2559
        %v2561 = vpop.f32.mrf.mxu0
        %v2562 = vand.u32 %v1864, 4294901760
        %v2563 = vsub.f32 %v1864, %v2562
        %2564 = vmatprep.mubr.f32.mxu0 %v2563
        %v2565 = vand.u32 %v1863, 4294901760
        %v2566 = vsub.f32 %v1863, %v2565
        %2567 = vmatmul.mubr.f32.gmra.mxu0 %v2566
        %v2568 = vpop.f32.mrf.mxu0
        %v2569 = vadd.f32 %v2368, %v2568
        %v2570 = vpop.f32.mrf.mxu0
        %2571 = vdwg.mxu0
        %2572 = vmatprep.subr.mxu0 0.0
        %v2573 = vand.u32 %v494, 4294901760
        %2574 = vmatpush1.msra.mxu0 %v2573
        %2575 = vmatprep.subr.mxu0 0.0
        %v2576 = vand.u32 %v493, 4294901760
        %2577 = vmatpush1.msra.mxu0 %v2576
        %2578 = vmatprep.subr.mxu0 0.0
        %v2579 = vand.u32 %v492, 4294901760
        %2580 = vmatpush1.msra.mxu0 %v2579
        %2581 = vmatprep.subr.mxu0 0.0
        %v2582 = vand.u32 %v491, 4294901760
        %2583 = vmatpush1.msra.mxu0 %v2582
        %2584 = vmatprep.subr.mxu0 0.0
        %v2585 = vand.u32 %v490, 4294901760
        %2586 = vmatpush1.msra.mxu0 %v2585
        %2587 = vmatprep.subr.mxu0 0.0
        %v2588 = vand.u32 %v489, 4294901760
        %2589 = vmatpush1.msra.mxu0 %v2588
        %2590 = vmatprep.subr.mxu0 0.0
        %v2591 = vand.u32 %v488, 4294901760
        %2592 = vmatpush1.msra.mxu0 %v2591
        %2593 = vmatprep.subr.mxu0 0.0
        %v2594 = vand.u32 %v487, 4294901760
        %2595 = vmatpush1.msra.mxu0 %v2594
        %2596 = vmatprep.subr.mxu0 0.0
        %v2597 = vand.u32 %v486, 4294901760
        %2598 = vmatpush1.msra.mxu0 %v2597
        %2599 = vmatprep.subr.mxu0 0.0
        %v2600 = vand.u32 %v485, 4294901760
        %2601 = vmatpush1.msra.mxu0 %v2600
        %2602 = vmatprep.subr.mxu0 0.0
        %v2603 = vand.u32 %v484, 4294901760
        %2604 = vmatpush1.msra.mxu0 %v2603
        %2605 = vmatprep.subr.mxu0 0.0
        %v2606 = vand.u32 %v483, 4294901760
        %2607 = vmatpush1.msra.mxu0 %v2606
        %2608 = vmatprep.subr.mxu0 0.0
        %v2609 = vand.u32 %v482, 4294901760
        %2610 = vmatpush1.msra.mxu0 %v2609
        %2611 = vmatprep.subr.mxu0 0.0
        %v2612 = vand.u32 %v481, 4294901760
        %2613 = vmatpush1.msra.mxu0 %v2612
        %2614 = vmatprep.subr.mxu0 0.0
        %v2615 = vand.u32 %v480, 4294901760
        %2616 = vmatpush1.msra.mxu0 %v2615
        %2617 = vmatprep.subr.mxu0 0.0
        %v2618 = vand.u32 %v479, 4294901760
        %2619 = vmatpush1.msra.mxu0 %v2618
        %2620 = vmatprep.subr.mxu0 0.0
        %v2621 = vand.u32 %v510, 4294901760
        %2622 = vmatpush2.msra.mxu0 %v2621
        %2623 = vmatprep.subr.mxu0 0.0
        %v2624 = vand.u32 %v509, 4294901760
        %2625 = vmatpush2.msra.mxu0 %v2624
        %2626 = vmatprep.subr.mxu0 0.0
        %v2627 = vand.u32 %v508, 4294901760
        %2628 = vmatpush2.msra.mxu0 %v2627
        %2629 = vmatprep.subr.mxu0 0.0
        %v2630 = vand.u32 %v507, 4294901760
        %2631 = vmatpush2.msra.mxu0 %v2630
        %2632 = vmatprep.subr.mxu0 0.0
        %v2633 = vand.u32 %v506, 4294901760
        %2634 = vmatpush2.msra.mxu0 %v2633
        %2635 = vmatprep.subr.mxu0 0.0
        %v2636 = vand.u32 %v505, 4294901760
        %2637 = vmatpush2.msra.mxu0 %v2636
        %2638 = vmatprep.subr.mxu0 0.0
        %v2639 = vand.u32 %v504, 4294901760
        %2640 = vmatpush2.msra.mxu0 %v2639
        %2641 = vmatprep.subr.mxu0 0.0
        %v2642 = vand.u32 %v503, 4294901760
        %2643 = vmatpush2.msra.mxu0 %v2642
        %2644 = vmatprep.subr.mxu0 0.0
        %v2645 = vand.u32 %v502, 4294901760
        %2646 = vmatpush2.msra.mxu0 %v2645
        %2647 = vmatprep.subr.mxu0 0.0
        %v2648 = vand.u32 %v501, 4294901760
        %2649 = vmatpush2.msra.mxu0 %v2648
        %2650 = vmatprep.subr.mxu0 0.0
        %v2651 = vand.u32 %v500, 4294901760
        %2652 = vmatpush2.msra.mxu0 %v2651
        %2653 = vmatprep.subr.mxu0 0.0
        %v2654 = vand.u32 %v499, 4294901760
        %2655 = vmatpush2.msra.mxu0 %v2654
        %2656 = vmatprep.subr.mxu0 0.0
        %v2657 = vand.u32 %v498, 4294901760
        %2658 = vmatpush2.msra.mxu0 %v2657
        %2659 = vmatprep.subr.mxu0 0.0
        %v2660 = vand.u32 %v497, 4294901760
        %2661 = vmatpush2.msra.mxu0 %v2660
        %2662 = vmatprep.subr.mxu0 0.0
        %v2663 = vand.u32 %v496, 4294901760
        %2664 = vmatpush2.msra.mxu0 %v2663
        %2665 = vmatprep.subr.mxu0 0.0
        %v2666 = vand.u32 %v495, 4294901760
        %2667 = vmatpush2.msra.mxu0 %v2666
        %v2668 = vand.u32 %v1850, 4294901760
        %v2669 = vsub.f32 %v1850, %v2668
        %v2670 = vand.u32 %v2669, 4294901760
        %2671 = vmatprep.mubr.f32.mxu0 %v2670
        %v2672 = vand.u32 %v1849, 4294901760
        %v2673 = vsub.f32 %v1849, %v2672
        %v2674 = vand.u32 %v2673, 4294901760
        %2675 = vmatmul.mubr.f32.gmra.mxu0 %v2674
        %v2676 = vpop.f32.mrf.mxu0
        %v2677 = vadd.f32 %v2506, %v2676
        %v2678 = vpop.f32.mrf.mxu0
        %v2679 = vand.u32 %v1852, 4294901760
        %v2680 = vsub.f32 %v1852, %v2679
        %v2681 = vand.u32 %v2680, 4294901760
        %2682 = vmatprep.mubr.f32.mxu0 %v2681
        %v2683 = vand.u32 %v1851, 4294901760
        %v2684 = vsub.f32 %v1851, %v2683
        %v2685 = vand.u32 %v2684, 4294901760
        %2686 = vmatmul.mubr.f32.gmra.mxu0 %v2685
        %v2687 = vpop.f32.mrf.mxu0
        %v2688 = vadd.f32 %v2515, %v2687
        %v2689 = vpop.f32.mrf.mxu0
        %v2690 = vand.u32 %v1854, 4294901760
        %v2691 = vsub.f32 %v1854, %v2690
        %v2692 = vand.u32 %v2691, 4294901760
        %2693 = vmatprep.mubr.f32.mxu0 %v2692
        %v2694 = vand.u32 %v1853, 4294901760
        %v2695 = vsub.f32 %v1853, %v2694
        %v2696 = vand.u32 %v2695, 4294901760
        %2697 = vmatmul.mubr.f32.gmra.mxu0 %v2696
        %v2698 = vpop.f32.mrf.mxu0
        %v2699 = vadd.f32 %v2524, %v2698
        %v2700 = vpop.f32.mrf.mxu0
        %v2701 = vand.u32 %v1856, 4294901760
        %v2702 = vsub.f32 %v1856, %v2701
        %v2703 = vand.u32 %v2702, 4294901760
        %2704 = vmatprep.mubr.f32.mxu0 %v2703
        %v2705 = vand.u32 %v1855, 4294901760
        %v2706 = vsub.f32 %v1855, %v2705
        %v2707 = vand.u32 %v2706, 4294901760
        %2708 = vmatmul.mubr.f32.gmra.mxu0 %v2707
        %v2709 = vpop.f32.mrf.mxu0
        %v2710 = vadd.f32 %v2533, %v2709
        %v2711 = vpop.f32.mrf.mxu0
        %v2712 = vand.u32 %v1858, 4294901760
        %v2713 = vsub.f32 %v1858, %v2712
        %v2714 = vand.u32 %v2713, 4294901760
        %2715 = vmatprep.mubr.f32.mxu0 %v2714
        %v2716 = vand.u32 %v1857, 4294901760
        %v2717 = vsub.f32 %v1857, %v2716
        %v2718 = vand.u32 %v2717, 4294901760
        %2719 = vmatmul.mubr.f32.gmra.mxu0 %v2718
        %v2720 = vpop.f32.mrf.mxu0
        %v2721 = vadd.f32 %v2542, %v2720
        %v2722 = vpop.f32.mrf.mxu0
        %v2723 = vand.u32 %v1860, 4294901760
        %v2724 = vsub.f32 %v1860, %v2723
        %v2725 = vand.u32 %v2724, 4294901760
        %2726 = vmatprep.mubr.f32.mxu0 %v2725
        %v2727 = vand.u32 %v1859, 4294901760
        %v2728 = vsub.f32 %v1859, %v2727
        %v2729 = vand.u32 %v2728, 4294901760
        %2730 = vmatmul.mubr.f32.gmra.mxu0 %v2729
        %v2731 = vpop.f32.mrf.mxu0
        %v2732 = vadd.f32 %v2551, %v2731
        %v2733 = vpop.f32.mrf.mxu0
        %v2734 = vand.u32 %v1862, 4294901760
        %v2735 = vsub.f32 %v1862, %v2734
        %v2736 = vand.u32 %v2735, 4294901760
        %2737 = vmatprep.mubr.f32.mxu0 %v2736
        %v2738 = vand.u32 %v1861, 4294901760
        %v2739 = vsub.f32 %v1861, %v2738
        %v2740 = vand.u32 %v2739, 4294901760
        %2741 = vmatmul.mubr.f32.gmra.mxu0 %v2740
        %v2742 = vpop.f32.mrf.mxu0
        %v2743 = vadd.f32 %v2560, %v2742
        %v2744 = vpop.f32.mrf.mxu0
        %v2745 = vand.u32 %v1864, 4294901760
        %v2746 = vsub.f32 %v1864, %v2745
        %v2747 = vand.u32 %v2746, 4294901760
        %2748 = vmatprep.mubr.f32.mxu0 %v2747
        %v2749 = vand.u32 %v1863, 4294901760
        %v2750 = vsub.f32 %v1863, %v2749
        %v2751 = vand.u32 %v2750, 4294901760
        %2752 = vmatmul.mubr.f32.gmra.mxu0 %v2751
        %v2753 = vpop.f32.mrf.mxu0
        %v2754 = vadd.f32 %v2569, %v2753
        %v2755 = vpop.f32.mrf.mxu0
        %2756 = vdwg.mxu0
        %2757 = vmatprep.subr.mxu0 0.0
        %v2758 = vand.u32 %v494, 4294901760
        %v2759 = vsub.f32 %v494, %v2758
        %v2760 = vand.u32 %v2759, 4294901760
        %2761 = vmatpush1.msra.mxu0 %v2760
        %2762 = vmatprep.subr.mxu0 0.0
        %v2763 = vand.u32 %v493, 4294901760
        %v2764 = vsub.f32 %v493, %v2763
        %v2765 = vand.u32 %v2764, 4294901760
        %2766 = vmatpush1.msra.mxu0 %v2765
        %2767 = vmatprep.subr.mxu0 0.0
        %v2768 = vand.u32 %v492, 4294901760
        %v2769 = vsub.f32 %v492, %v2768
        %v2770 = vand.u32 %v2769, 4294901760
        %2771 = vmatpush1.msra.mxu0 %v2770
        %2772 = vmatprep.subr.mxu0 0.0
        %v2773 = vand.u32 %v491, 4294901760
        %v2774 = vsub.f32 %v491, %v2773
        %v2775 = vand.u32 %v2774, 4294901760
        %2776 = vmatpush1.msra.mxu0 %v2775
        %2777 = vmatprep.subr.mxu0 0.0
        %v2778 = vand.u32 %v490, 4294901760
        %v2779 = vsub.f32 %v490, %v2778
        %v2780 = vand.u32 %v2779, 4294901760
        %2781 = vmatpush1.msra.mxu0 %v2780
        %2782 = vmatprep.subr.mxu0 0.0
        %v2783 = vand.u32 %v489, 4294901760
        %v2784 = vsub.f32 %v489, %v2783
        %v2785 = vand.u32 %v2784, 4294901760
        %2786 = vmatpush1.msra.mxu0 %v2785
        %2787 = vmatprep.subr.mxu0 0.0
        %v2788 = vand.u32 %v488, 4294901760
        %v2789 = vsub.f32 %v488, %v2788
        %v2790 = vand.u32 %v2789, 4294901760
        %2791 = vmatpush1.msra.mxu0 %v2790
        %2792 = vmatprep.subr.mxu0 0.0
        %v2793 = vand.u32 %v487, 4294901760
        %v2794 = vsub.f32 %v487, %v2793
        %v2795 = vand.u32 %v2794, 4294901760
        %2796 = vmatpush1.msra.mxu0 %v2795
        %2797 = vmatprep.subr.mxu0 0.0
        %v2798 = vand.u32 %v486, 4294901760
        %v2799 = vsub.f32 %v486, %v2798
        %v2800 = vand.u32 %v2799, 4294901760
        %2801 = vmatpush1.msra.mxu0 %v2800
        %2802 = vmatprep.subr.mxu0 0.0
        %v2803 = vand.u32 %v485, 4294901760
        %v2804 = vsub.f32 %v485, %v2803
        %v2805 = vand.u32 %v2804, 4294901760
        %2806 = vmatpush1.msra.mxu0 %v2805
        %2807 = vmatprep.subr.mxu0 0.0
        %v2808 = vand.u32 %v484, 4294901760
        %v2809 = vsub.f32 %v484, %v2808
        %v2810 = vand.u32 %v2809, 4294901760
        %2811 = vmatpush1.msra.mxu0 %v2810
        %2812 = vmatprep.subr.mxu0 0.0
        %v2813 = vand.u32 %v483, 4294901760
        %v2814 = vsub.f32 %v483, %v2813
        %v2815 = vand.u32 %v2814, 4294901760
        %2816 = vmatpush1.msra.mxu0 %v2815
        %2817 = vmatprep.subr.mxu0 0.0
        %v2818 = vand.u32 %v482, 4294901760
        %v2819 = vsub.f32 %v482, %v2818
        %v2820 = vand.u32 %v2819, 4294901760
        %2821 = vmatpush1.msra.mxu0 %v2820
        %2822 = vmatprep.subr.mxu0 0.0
        %v2823 = vand.u32 %v481, 4294901760
        %v2824 = vsub.f32 %v481, %v2823
        %v2825 = vand.u32 %v2824, 4294901760
        %2826 = vmatpush1.msra.mxu0 %v2825
        %2827 = vmatprep.subr.mxu0 0.0
        %v2828 = vand.u32 %v480, 4294901760
        %v2829 = vsub.f32 %v480, %v2828
        %v2830 = vand.u32 %v2829, 4294901760
        %2831 = vmatpush1.msra.mxu0 %v2830
        %2832 = vmatprep.subr.mxu0 0.0
        %v2833 = vand.u32 %v479, 4294901760
        %v2834 = vsub.f32 %v479, %v2833
        %v2835 = vand.u32 %v2834, 4294901760
        %2836 = vmatpush1.msra.mxu0 %v2835
        %2837 = vmatprep.subr.mxu0 0.0
        %v2838 = vand.u32 %v510, 4294901760
        %v2839 = vsub.f32 %v510, %v2838
        %v2840 = vand.u32 %v2839, 4294901760
        %2841 = vmatpush2.msra.mxu0 %v2840
        %2842 = vmatprep.subr.mxu0 0.0
        %v2843 = vand.u32 %v509, 4294901760
        %v2844 = vsub.f32 %v509, %v2843
        %v2845 = vand.u32 %v2844, 4294901760
        %2846 = vmatpush2.msra.mxu0 %v2845
        %2847 = vmatprep.subr.mxu0 0.0
        %v2848 = vand.u32 %v508, 4294901760
        %v2849 = vsub.f32 %v508, %v2848
        %v2850 = vand.u32 %v2849, 4294901760
        %2851 = vmatpush2.msra.mxu0 %v2850
        %2852 = vmatprep.subr.mxu0 0.0
        %v2853 = vand.u32 %v507, 4294901760
        %v2854 = vsub.f32 %v507, %v2853
        %v2855 = vand.u32 %v2854, 4294901760
        %2856 = vmatpush2.msra.mxu0 %v2855
        %2857 = vmatprep.subr.mxu0 0.0
        %v2858 = vand.u32 %v506, 4294901760
        %v2859 = vsub.f32 %v506, %v2858
        %v2860 = vand.u32 %v2859, 4294901760
        %2861 = vmatpush2.msra.mxu0 %v2860
        %2862 = vmatprep.subr.mxu0 0.0
        %v2863 = vand.u32 %v505, 4294901760
        %v2864 = vsub.f32 %v505, %v2863
        %v2865 = vand.u32 %v2864, 4294901760
        %2866 = vmatpush2.msra.mxu0 %v2865
        %2867 = vmatprep.subr.mxu0 0.0
        %v2868 = vand.u32 %v504, 4294901760
        %v2869 = vsub.f32 %v504, %v2868
        %v2870 = vand.u32 %v2869, 4294901760
        %2871 = vmatpush2.msra.mxu0 %v2870
        %2872 = vmatprep.subr.mxu0 0.0
        %v2873 = vand.u32 %v503, 4294901760
        %v2874 = vsub.f32 %v503, %v2873
        %v2875 = vand.u32 %v2874, 4294901760
        %2876 = vmatpush2.msra.mxu0 %v2875
        %2877 = vmatprep.subr.mxu0 0.0
        %v2878 = vand.u32 %v502, 4294901760
        %v2879 = vsub.f32 %v502, %v2878
        %v2880 = vand.u32 %v2879, 4294901760
        %2881 = vmatpush2.msra.mxu0 %v2880
        %2882 = vmatprep.subr.mxu0 0.0
        %v2883 = vand.u32 %v501, 4294901760
        %v2884 = vsub.f32 %v501, %v2883
        %v2885 = vand.u32 %v2884, 4294901760
        %2886 = vmatpush2.msra.mxu0 %v2885
        %2887 = vmatprep.subr.mxu0 0.0
        %v2888 = vand.u32 %v500, 4294901760
        %v2889 = vsub.f32 %v500, %v2888
        %v2890 = vand.u32 %v2889, 4294901760
        %2891 = vmatpush2.msra.mxu0 %v2890
        %2892 = vmatprep.subr.mxu0 0.0
        %v2893 = vand.u32 %v499, 4294901760
        %v2894 = vsub.f32 %v499, %v2893
        %v2895 = vand.u32 %v2894, 4294901760
        %2896 = vmatpush2.msra.mxu0 %v2895
        %2897 = vmatprep.subr.mxu0 0.0
        %v2898 = vand.u32 %v498, 4294901760
        %v2899 = vsub.f32 %v498, %v2898
        %v2900 = vand.u32 %v2899, 4294901760
        %2901 = vmatpush2.msra.mxu0 %v2900
        %2902 = vmatprep.subr.mxu0 0.0
        %v2903 = vand.u32 %v497, 4294901760
        %v2904 = vsub.f32 %v497, %v2903
        %v2905 = vand.u32 %v2904, 4294901760
        %2906 = vmatpush2.msra.mxu0 %v2905
        %2907 = vmatprep.subr.mxu0 0.0
        %v2908 = vand.u32 %v496, 4294901760
        %v2909 = vsub.f32 %v496, %v2908
        %v2910 = vand.u32 %v2909, 4294901760
        %2911 = vmatpush2.msra.mxu0 %v2910
        %2912 = vmatprep.subr.mxu0 0.0
        %v2913 = vand.u32 %v495, 4294901760
        %v2914 = vsub.f32 %v495, %v2913
        %v2915 = vand.u32 %v2914, 4294901760
        %2916 = vmatpush2.msra.mxu0 %v2915
        %v2917 = vand.u32 %v1850, 4294901760
        %2918 = vmatprep.mubr.f32.mxu0 %v2917
        %v2919 = vand.u32 %v1849, 4294901760
        %2920 = vmatmul.mubr.f32.gmra.mxu0 %v2919
        %v2921 = vpop.f32.mrf.mxu0
        %v2922 = vadd.f32 %v2677, %v2921
        %v2923 = vpop.f32.mrf.mxu0
        %v2924 = vand.u32 %v1852, 4294901760
        %2925 = vmatprep.mubr.f32.mxu0 %v2924
        %v2926 = vand.u32 %v1851, 4294901760
        %2927 = vmatmul.mubr.f32.gmra.mxu0 %v2926
        %v2928 = vpop.f32.mrf.mxu0
        %v2929 = vadd.f32 %v2688, %v2928
        %v2930 = vpop.f32.mrf.mxu0
        %v2931 = vand.u32 %v1854, 4294901760
        %2932 = vmatprep.mubr.f32.mxu0 %v2931
        %v2933 = vand.u32 %v1853, 4294901760
        %2934 = vmatmul.mubr.f32.gmra.mxu0 %v2933
        %v2935 = vpop.f32.mrf.mxu0
        %v2936 = vadd.f32 %v2699, %v2935
        %v2937 = vpop.f32.mrf.mxu0
        %v2938 = vand.u32 %v1856, 4294901760
        %2939 = vmatprep.mubr.f32.mxu0 %v2938
        %v2940 = vand.u32 %v1855, 4294901760
        %2941 = vmatmul.mubr.f32.gmra.mxu0 %v2940
        %v2942 = vpop.f32.mrf.mxu0
        %v2943 = vadd.f32 %v2710, %v2942
        %v2944 = vpop.f32.mrf.mxu0
        %v2945 = vand.u32 %v1858, 4294901760
        %2946 = vmatprep.mubr.f32.mxu0 %v2945
        %v2947 = vand.u32 %v1857, 4294901760
        %2948 = vmatmul.mubr.f32.gmra.mxu0 %v2947
        %v2949 = vpop.f32.mrf.mxu0
        %v2950 = vadd.f32 %v2721, %v2949
        %v2951 = vpop.f32.mrf.mxu0
        %v2952 = vand.u32 %v1860, 4294901760
        %2953 = vmatprep.mubr.f32.mxu0 %v2952
        %v2954 = vand.u32 %v1859, 4294901760
        %2955 = vmatmul.mubr.f32.gmra.mxu0 %v2954
        %v2956 = vpop.f32.mrf.mxu0
        %v2957 = vadd.f32 %v2732, %v2956
        %v2958 = vpop.f32.mrf.mxu0
        %v2959 = vand.u32 %v1862, 4294901760
        %2960 = vmatprep.mubr.f32.mxu0 %v2959
        %v2961 = vand.u32 %v1861, 4294901760
        %2962 = vmatmul.mubr.f32.gmra.mxu0 %v2961
        %v2963 = vpop.f32.mrf.mxu0
        %v2964 = vadd.f32 %v2743, %v2963
        %v2965 = vpop.f32.mrf.mxu0
        %v2966 = vand.u32 %v1864, 4294901760
        %2967 = vmatprep.mubr.f32.mxu0 %v2966
        %v2968 = vand.u32 %v1863, 4294901760
        %2969 = vmatmul.mubr.f32.gmra.mxu0 %v2968
        %v2970 = vpop.f32.mrf.mxu0
        %v2971 = vadd.f32 %v2754, %v2970
        %v2972 = vpop.f32.mrf.mxu0
        %2973 = vdwg.mxu0
        %2974 = vmatprep.subr.mxu0 0.0
        %v2975 = vand.u32 %v494, 4294901760
        %2976 = vmatpush1.msra.mxu0 %v2975
        %2977 = vmatprep.subr.mxu0 0.0
        %v2978 = vand.u32 %v493, 4294901760
        %2979 = vmatpush1.msra.mxu0 %v2978
        %2980 = vmatprep.subr.mxu0 0.0
        %v2981 = vand.u32 %v492, 4294901760
        %2982 = vmatpush1.msra.mxu0 %v2981
        %2983 = vmatprep.subr.mxu0 0.0
        %v2984 = vand.u32 %v491, 4294901760
        %2985 = vmatpush1.msra.mxu0 %v2984
        %2986 = vmatprep.subr.mxu0 0.0
        %v2987 = vand.u32 %v490, 4294901760
        %2988 = vmatpush1.msra.mxu0 %v2987
        %2989 = vmatprep.subr.mxu0 0.0
        %v2990 = vand.u32 %v489, 4294901760
        %2991 = vmatpush1.msra.mxu0 %v2990
        %2992 = vmatprep.subr.mxu0 0.0
        %v2993 = vand.u32 %v488, 4294901760
        %2994 = vmatpush1.msra.mxu0 %v2993
        %2995 = vmatprep.subr.mxu0 0.0
        %v2996 = vand.u32 %v487, 4294901760
        %2997 = vmatpush1.msra.mxu0 %v2996
        %2998 = vmatprep.subr.mxu0 0.0
        %v2999 = vand.u32 %v486, 4294901760
        %3000 = vmatpush1.msra.mxu0 %v2999
        %3001 = vmatprep.subr.mxu0 0.0
        %v3002 = vand.u32 %v485, 4294901760
        %3003 = vmatpush1.msra.mxu0 %v3002
        %3004 = vmatprep.subr.mxu0 0.0
        %v3005 = vand.u32 %v484, 4294901760
        %3006 = vmatpush1.msra.mxu0 %v3005
        %3007 = vmatprep.subr.mxu0 0.0
        %v3008 = vand.u32 %v483, 4294901760
        %3009 = vmatpush1.msra.mxu0 %v3008
        %3010 = vmatprep.subr.mxu0 0.0
        %v3011 = vand.u32 %v482, 4294901760
        %3012 = vmatpush1.msra.mxu0 %v3011
        %3013 = vmatprep.subr.mxu0 0.0
        %v3014 = vand.u32 %v481, 4294901760
        %3015 = vmatpush1.msra.mxu0 %v3014
        %3016 = vmatprep.subr.mxu0 0.0
        %v3017 = vand.u32 %v480, 4294901760
        %3018 = vmatpush1.msra.mxu0 %v3017
        %3019 = vmatprep.subr.mxu0 0.0
        %v3020 = vand.u32 %v479, 4294901760
        %3021 = vmatpush1.msra.mxu0 %v3020
        %3022 = vmatprep.subr.mxu0 0.0
        %v3023 = vand.u32 %v510, 4294901760
        %3024 = vmatpush2.msra.mxu0 %v3023
        %3025 = vmatprep.subr.mxu0 0.0
        %v3026 = vand.u32 %v509, 4294901760
        %3027 = vmatpush2.msra.mxu0 %v3026
        %3028 = vmatprep.subr.mxu0 0.0
        %v3029 = vand.u32 %v508, 4294901760
        %3030 = vmatpush2.msra.mxu0 %v3029
        %3031 = vmatprep.subr.mxu0 0.0
        %v3032 = vand.u32 %v507, 4294901760
        %3033 = vmatpush2.msra.mxu0 %v3032
        %3034 = vmatprep.subr.mxu0 0.0
        %v3035 = vand.u32 %v506, 4294901760
        %3036 = vmatpush2.msra.mxu0 %v3035
        %3037 = vmatprep.subr.mxu0 0.0
        %v3038 = vand.u32 %v505, 4294901760
        %3039 = vmatpush2.msra.mxu0 %v3038
        %3040 = vmatprep.subr.mxu0 0.0
        %v3041 = vand.u32 %v504, 4294901760
        %3042 = vmatpush2.msra.mxu0 %v3041
        %3043 = vmatprep.subr.mxu0 0.0
        %v3044 = vand.u32 %v503, 4294901760
        %3045 = vmatpush2.msra.mxu0 %v3044
        %3046 = vmatprep.subr.mxu0 0.0
        %v3047 = vand.u32 %v502, 4294901760
        %3048 = vmatpush2.msra.mxu0 %v3047
        %3049 = vmatprep.subr.mxu0 0.0
        %v3050 = vand.u32 %v501, 4294901760
        %3051 = vmatpush2.msra.mxu0 %v3050
        %3052 = vmatprep.subr.mxu0 0.0
        %v3053 = vand.u32 %v500, 4294901760
        %3054 = vmatpush2.msra.mxu0 %v3053
        %3055 = vmatprep.subr.mxu0 0.0
        %v3056 = vand.u32 %v499, 4294901760
        %3057 = vmatpush2.msra.mxu0 %v3056
        %3058 = vmatprep.subr.mxu0 0.0
        %v3059 = vand.u32 %v498, 4294901760
        %3060 = vmatpush2.msra.mxu0 %v3059
        %3061 = vmatprep.subr.mxu0 0.0
        %v3062 = vand.u32 %v497, 4294901760
        %3063 = vmatpush2.msra.mxu0 %v3062
        %3064 = vmatprep.subr.mxu0 0.0
        %v3065 = vand.u32 %v496, 4294901760
        %3066 = vmatpush2.msra.mxu0 %v3065
        %3067 = vmatprep.subr.mxu0 0.0
        %v3068 = vand.u32 %v495, 4294901760
        %3069 = vmatpush2.msra.mxu0 %v3068
        %v3070 = vand.u32 %v1850, 4294901760
        %3071 = vmatprep.mubr.f32.mxu0 %v3070
        %v3072 = vand.u32 %v1849, 4294901760
        %3073 = vmatmul.mubr.f32.gmra.mxu0 %v3072
        %v3074 = vpop.f32.mrf.mxu0
        %v3075 = vadd.f32 %v2922, %v3074
        %v3076 = vpop.f32.mrf.mxu0
        %v3077 = vand.u32 %v1852, 4294901760
        %3078 = vmatprep.mubr.f32.mxu0 %v3077
        %v3079 = vand.u32 %v1851, 4294901760
        %3080 = vmatmul.mubr.f32.gmra.mxu0 %v3079
        %v3081 = vpop.f32.mrf.mxu0
        %v3082 = vadd.f32 %v2929, %v3081
        %v3083 = vpop.f32.mrf.mxu0
        %v3084 = vand.u32 %v1854, 4294901760
        %3085 = vmatprep.mubr.f32.mxu0 %v3084
        %v3086 = vand.u32 %v1853, 4294901760
        %3087 = vmatmul.mubr.f32.gmra.mxu0 %v3086
        %v3088 = vpop.f32.mrf.mxu0
        %v3089 = vadd.f32 %v2936, %v3088
        %v3090 = vpop.f32.mrf.mxu0
        %v3091 = vand.u32 %v1856, 4294901760
        %3092 = vmatprep.mubr.f32.mxu0 %v3091
        %v3093 = vand.u32 %v1855, 4294901760
        %3094 = vmatmul.mubr.f32.gmra.mxu0 %v3093
        %v3095 = vpop.f32.mrf.mxu0
        %v3096 = vadd.f32 %v2943, %v3095
        %v3097 = vpop.f32.mrf.mxu0
        %v3098 = vand.u32 %v1858, 4294901760
        %3099 = vmatprep.mubr.f32.mxu0 %v3098
        %v3100 = vand.u32 %v1857, 4294901760
        %3101 = vmatmul.mubr.f32.gmra.mxu0 %v3100
        %v3102 = vpop.f32.mrf.mxu0
        %v3103 = vadd.f32 %v2950, %v3102
        %v3104 = vpop.f32.mrf.mxu0
        %v3105 = vand.u32 %v1860, 4294901760
        %3106 = vmatprep.mubr.f32.mxu0 %v3105
        %v3107 = vand.u32 %v1859, 4294901760
        %3108 = vmatmul.mubr.f32.gmra.mxu0 %v3107
        %v3109 = vpop.f32.mrf.mxu0
        %v3110 = vadd.f32 %v2957, %v3109
        %v3111 = vpop.f32.mrf.mxu0
        %v3112 = vand.u32 %v1862, 4294901760
        %3113 = vmatprep.mubr.f32.mxu0 %v3112
        %v3114 = vand.u32 %v1861, 4294901760
        %3115 = vmatmul.mubr.f32.gmra.mxu0 %v3114
        %v3116 = vpop.f32.mrf.mxu0
        %v3117 = vadd.f32 %v2964, %v3116
        %v3118 = vpop.f32.mrf.mxu0
        %v3119 = vand.u32 %v1864, 4294901760
        %3120 = vmatprep.mubr.f32.mxu0 %v3119
        %v3121 = vand.u32 %v1863, 4294901760
        %3122 = vmatmul.mubr.f32.gmra.mxu0 %v3121
        %v3123 = vpop.f32.mrf.mxu0
        %v3124 = vadd.f32 %v2971, %v3123
        %v3125 = vpop.f32.mrf.mxu0
        %3126 = vdwg.mxu0
        %v3127 = vadd.f32 %v1865, %v3075
        %v3128 = vadd.f32 %v1866, %v3082
        %v3129 = vadd.f32 %v1867, %v3089
        %v3130 = vadd.f32 %v1868, %v3096
        %v3131 = vadd.f32 %v1869, %v3103
        %v3132 = vadd.f32 %v1870, %v3110
        %v3133 = vadd.f32 %v1871, %v3117
        %v3134 = vadd.f32 %v1872, %v3124
        %3135 = vst [vmem:[#allocation2] sm:$0xff] %v3127
        %3136 = vst [vmem:[#allocation2 + $0x8] sm:$0xff] %v3128
        %3137 = vst [vmem:[#allocation2 + $0x10] sm:$0xff] %v3129
        %3138 = vst [vmem:[#allocation2 + $0x18] sm:$0xff] %v3130
        %3139 = vst [vmem:[#allocation2 + $0x20] sm:$0xff] %v3131
        %3140 = vst [vmem:[#allocation2 + $0x28] sm:$0xff] %v3132
        %3141 = vst [vmem:[#allocation2 + $0x30] sm:$0xff] %v3133
        %3142 = vst [vmem:[#allocation2 + $0x38] sm:$0xff] %v3134
        // Predicated region
        $region61: #{tpu_custom_call.1} parent=39 // pred_check
          %p3143 = pneg %p427
        $region62: #{tpu_custom_call.1} parent=39 // pred_check_branch
          %3145 = sbr.rel (%p3143) target = $region64
        $region63: #{tpu_custom_call.1} parent=39 // pred_region
          %v3146 = vld [vmem:[#allocation2] sm:$0xff]
          %v3147 = vld [vmem:[#allocation2 + $0x8] sm:$0xff]
          %v3148 = vld [vmem:[#allocation2 + $0x10] sm:$0xff]
          %v3149 = vld [vmem:[#allocation2 + $0x18] sm:$0xff]
          %v3150 = vld [vmem:[#allocation2 + $0x20] sm:$0xff]
          %v3151 = vld [vmem:[#allocation2 + $0x28] sm:$0xff]
          %v3152 = vld [vmem:[#allocation2 + $0x30] sm:$0xff]
          %v3153 = vld [vmem:[#allocation2 + $0x38] sm:$0xff]
          %v3154 = vld [vmem:[%s425] sm:$0x1]
          %v3156 = vlaneseq
          %v3157 = vshrl.u32 %v3156, 7
          %v3158 = vsub.s32 0, %v3157
          %v3159 = vrot.slane %v3154, %v3158
          %v3161 = vadd.f32 %v3146, %v3159
          %v3162 = vadd.f32 %v3147, %v3159
          %v3163 = vadd.f32 %v3148, %v3159
          %v3164 = vadd.f32 %v3149, %v3159
          %v3165 = vadd.f32 %v3150, %v3159
          %v3166 = vadd.f32 %v3151, %v3159
          %v3167 = vadd.f32 %v3152, %v3159
          %v3168 = vadd.f32 %v3153, %v3159
          %3169 = vst [vmem:[%s418] sm:$0xff] %v3161
          %3170 = vst [vmem:[%s418 + $0x8] sm:$0xff] %v3162
          %3171 = vst [vmem:[%s418 + $0x10] sm:$0xff] %v3163
          %3172 = vst [vmem:[%s418 + $0x18] sm:$0xff] %v3164
          %3173 = vst [vmem:[%s418 + $0x20] sm:$0xff] %v3165
          %3174 = vst [vmem:[%s418 + $0x28] sm:$0xff] %v3166
          %3175 = vst [vmem:[%s418 + $0x30] sm:$0xff] %v3167
          %3176 = vst [vmem:[%s418 + $0x38] sm:$0xff] %v3168
        $region64: #{tpu_custom_call.1} parent=39 // pred_fallthru
          _
        %s3177 = sand.u32 %s206, 1
        %s3178 = scalar_lea.sflag [#allocation5], %s3177
        %s3179 = sand.u32 %s206, 1
        %s3180 = smul.addr %s3179, 64
        %s3181 = scalar_lea.vmem [#allocation11], %s3180
        // Predicated region
        $region65: #{tpu_custom_call.1} parent=39 // pred_check
          %p3182 = pneg %p216
        $region66: #{tpu_custom_call.1} parent=39 // pred_check_branch
          %3184 = sbr.rel (%p3182) target = $region68
        $region67: #{tpu_custom_call.1} parent=39 // pred_region
          %s3185 = smul.u32 8, %s36
          %s3187 = ssub.s32 1024, 1024
          %3188 = vsyncadd %s3178, %s3187
          %s3189 = smul.addr %s34, 8
          %s3190 = sadd.s32 %s3185, %s3189
          %s3191 = smul.addr %s35, 16
          %s3192 = sadd.s32 %s3190, %s3191
          %s3193 = smul.addr %s3192, 128
          %s3194 = scalar_lea.hbm %s5, %s3193
          %s3195 = sshll.u32 %s3181, 4
          %s3196 = int_to_ptr.vmem [resolvable:$true] %s3195
          %3201 = dma.vmem_to_hbm [thread:$0]  %s3196, 1024, %s3194, %s3178, 128, 128, 8
        $region68: #{tpu_custom_call.1} parent=39 // pred_fallthru
          _
      $region40: #{tpu_custom_call.1} parent=5 // pred_fallthru
        _
      %p3202 = scmp.le.s32.totalorder 2, %s23
      // Predicated region
      $region69: #{tpu_custom_call.1} parent=5 // pred_check
        %p3203 = pneg %p3202
      $region70: #{tpu_custom_call.1} parent=5 // pred_check_branch
        %3205 = sbr.rel (%p3203) target = $region72
      $region71: #{tpu_custom_call.1} parent=5 // pred_region
        %s3206 = ssub.s32 %s23, 2
        // Predicated region
        $region73: #{tpu_custom_call.1} parent=71 // pred_check
          %p3207 = pneg %p222
        $region74: #{tpu_custom_call.1} parent=71 // pred_check_branch
          %3209 = sbr.rel (%p3207) target = $region76
        $region75: #{tpu_custom_call.1} parent=71 // pred_region
          %s3210 = sand.u32 %s207, 1
          %s3211 = scalar_lea.sflag [#allocation5], %s3210
          %s3212 = sand.u32 %s207, 1
          %s3213 = smul.addr %s3212, 64
          %s3214 = scalar_lea.vmem [#allocation11], %s3213
          %3215 = dma.done %s3211, 1024
        $region76: #{tpu_custom_call.1} parent=71 // pred_fallthru
          _
      $region72: #{tpu_custom_call.1} parent=5 // pred_fallthru
        _
    $region6: #{tpu_custom_call.1} parent=1 // loop_footer
      %s27 = sadd.s32 1, %s23
    $region7: #{tpu_custom_call.1} parent=1 // loop_footer_branch
      %22 = sbr.rel target = $region3
    $region8: #{tpu_custom_call.1} parent=1 // loop_exit
      _
    %3216 = vsyncpa [#allocation4], 1
    %s3217 = scalar_lea.sflag [#allocation4], 1
    %3218 = vsyncpa %s3217, 1
    %3219 = vsyncpa [#allocation7], 1
    %s3220 = scalar_lea.sflag [#allocation7], 1
    %3221 = vsyncpa %s3220, 1
    %3222 = vsyncpa [#allocation10], 1
    %s3223 = scalar_lea.sflag [#allocation10], 1
    %3224 = vsyncpa %s3223, 1
    %3225 = vsyncpa [#allocation5], 1
    %s3226 = scalar_lea.sflag [#allocation5], 1
    %3227 = vsyncpa %s3226, 1

</llo_original>
